<compile_context>
chip_gen: v7x
topology: tpu7x:2x2x1
jax: 0.10.0
libtpu: 0.0.40
codegen_flags: <defaults>
</compile_context>

<pallas_src>
import jax
import jax.numpy as jnp
import numpy as np
from jax import lax
from jax.experimental import pallas as pl
from jax.experimental.pallas import tpu as pltpu

# ----------------------------- configuration --------------------------------
IN_PLANES = 32
PLANES = 8
EXPANSION = 4
HEADS = 4
DIM_K = 16
DIM_U = 1          # kernel assumes dim_u == 1 (the module default)
R = 23             # receptive field of the positional Conv3d
HH = 16
WW = 16
BATCH = 2

C_OUT = EXPANSION * PLANES          # 32 == IN_PLANES -> identity shortcut
DIM_V = PLANES // HEADS             # 2
N = HH * WW                         # 256 flattened positions (lane axis)


# ------------------------------- the kernel ---------------------------------
def _lambda_block_kernel(
    x_ref, w1_ref, b1_ref, wqkv_ref, bqkv_ref, e_ref, pb_ref,
    s2_ref, b2_ref, w3_ref, b3_ref, out_ref, lp_scr,
):
    f32 = jnp.float32
    x = x_ref[...]                                                  # (IN_PLANES, B*N)

    # conv1 (1x1, bn1 scale pre-folded into the weight) + bias + relu
    t = jnp.dot(w1_ref[...], x, preferred_element_type=f32) + b1_ref[...]
    t = jnp.maximum(t, 0.0)                                         # (PLANES, B*N)

    # fused q/k/v projection (norm_q / norm_v scales pre-folded into weights)
    proj = jnp.dot(wqkv_ref[...], t, preferred_element_type=f32) + bqkv_ref[...]
    nq = HEADS * DIM_K
    q = proj[:nq, :]                                                # (64, B*N)
    kf = proj[nq:nq + DIM_K, :]                                     # (16, B*N)
    v = proj[nq + DIM_K:nq + DIM_K + DIM_V, :]                      # (2,  B*N)

    # per-batch softmax over positions (f32) and content lambda lam[k, v]
    lam_kv = []
    for b in range(BATCH):
        kf_b = kf[:, b * N:(b + 1) * N]                             # (DIM_K, N)
        v_b = v[:, b * N:(b + 1) * N]                               # (DIM_V, N)
        kmax = jnp.max(kf_b, axis=-1, keepdims=True)
        ke = jnp.exp(kf_b - kmax)
        ks_b = ke * pl.reciprocal(jnp.sum(ke, axis=-1, keepdims=True), approx=True)
        lam_kv.append(
            lax.dot_general(ks_b, v_b, (((1,), (1,)), ((), ())),
                            preferred_element_type=f32))            # (DIM_K, DIM_V)

    # positional lambdas: ONE lane-dense bf16 MXU matmul against dense E
    v_stack = jnp.concatenate(
        [v[:, b * N:(b + 1) * N] for b in range(BATCH)], axis=0)    # (B*V, N)
    lp = jnp.dot(v_stack.astype(jnp.bfloat16), e_ref[...],
                 preferred_element_type=f32)                        # (B*V, K*N)

    # relayout: move k from the lane axis onto the sublane axis via VMEM
    # scratch (aligned lane slices -> single-row stores; tiny data).
    for bv in range(BATCH * DIM_V):
        for k in range(DIM_K):
            r = bv * DIM_K + k
            lp_scr[r:r + 1, :] = lp[bv:bv + 1, k * N:(k + 1) * N]

    # combine content + positional lambdas:
    #   y[b, h*V+v, n] = sum_k q[b,h,k,n] * (lp[b,v,k,n] + lam[b,k,v] + pb[k])
    # done as full-vreg (16, 256) multiplies + sublane reductions.
    y_cols = []
    for b in range(BATCH):
        lpf = []
        for vi in range(DIM_V):
            bv = b * DIM_V + vi
            lpf.append(lp_scr[bv * DIM_K:(bv + 1) * DIM_K, :]
                       + lam_kv[b][:, vi:vi + 1] + pb_ref[...])     # (DIM_K, N)
        pieces = []
        for h in range(HEADS):
            q_bh = q[h * DIM_K:(h + 1) * DIM_K, b * N:(b + 1) * N]  # (DIM_K, N)
            for vi in range(DIM_V):
                pieces.append(jnp.sum(q_bh * lpf[vi], axis=0, keepdims=True))
        y_cols.append(jnp.concatenate(pieces, axis=0))              # (PLANES, N)
    y = jnp.concatenate(y_cols, axis=1)                             # (PLANES, B*N)

    # bn2 (affine) + relu
    y = jnp.maximum(y * s2_ref[...] + b2_ref[...], 0.0)

    # conv3 (bn3 scale pre-folded) + bias + identity shortcut + relu
    o = jnp.dot(w3_ref[...], y, preferred_element_type=f32) + b3_ref[...]
    out_ref[...] = jnp.maximum(o + x, 0.0)


# ------------------------------ pallas wrapper -------------------------------
@jax.jit
def lambda_block_pallas(x, prep):
    assert x.shape[0] == BATCH
    # NCHW -> (C, B*N): channels on sublanes, batch-major flattened positions on lanes
    x2d = x.reshape(BATCH, IN_PLANES, N).transpose(1, 0, 2).reshape(IN_PLANES, BATCH * N)

    args = (x2d, prep['w1'], prep['b1'], prep['wqkv'], prep['bqkv'],
            prep['e'], prep['pb'], prep['s2'], prep['b2'], prep['w3'], prep['b3'])
    in_specs = [pl.BlockSpec(a.shape, lambda i, nd=a.ndim: (0,) * nd) for a in args]

    out2d = pl.pallas_call(
        _lambda_block_kernel,
        out_shape=jax.ShapeDtypeStruct((C_OUT, BATCH * N), jnp.float32),
        grid_spec=pltpu.PrefetchScalarGridSpec(
            num_scalar_prefetch=0,
            grid=(1,),                       # whole batch in a single grid step
            in_specs=in_specs,
            out_specs=pl.BlockSpec((C_OUT, BATCH * N), lambda i: (0, 0)),
            scratch_shapes=[pltpu.VMEM((BATCH * DIM_V * DIM_K, N), jnp.float32)],
        ),
        compiler_params=pltpu.CompilerParams(dimension_semantics=("arbitrary",)),
    )(*args)

    return out2d.reshape(C_OUT, BATCH, N).transpose(1, 0, 2).reshape(BATCH, C_OUT, HH, WW)


# --------------------------- parameter construction --------------------------
def init_params(key):
    ks = jax.random.split(key, 12)

    def conv_w(k, cout, cin, scale):
        return jax.random.normal(k, (cout, cin), jnp.float32) * scale

    def bn_fold(k, c, eps=1e-5):
        k1, k2, k3, k4 = jax.random.split(k, 4)
        gamma = jax.random.uniform(k1, (c,), jnp.float32, 0.5, 1.5)
        beta = jax.random.normal(k2, (c,), jnp.float32) * 0.1
        mean = jax.random.normal(k3, (c,), jnp.float32) * 0.1
        var = jax.random.uniform(k4, (c,), jnp.float32, 0.5, 1.5)
        scale = gamma / jnp.sqrt(var + eps)
        bias = beta - mean * scale
        return scale, bias

    p = {}
    p['w1'] = conv_w(ks[0], PLANES, IN_PLANES, 1.0 / np.sqrt(IN_PLANES))
    p['s1'], p['b1'] = bn_fold(ks[1], PLANES)
    p['wq'] = conv_w(ks[2], DIM_K * HEADS, PLANES, 1.0 / np.sqrt(PLANES))
    p['sq'], p['bq'] = bn_fold(ks[3], DIM_K * HEADS)
    p['wk'] = conv_w(ks[4], DIM_K * DIM_U, PLANES, 1.0 / np.sqrt(PLANES))
    p['wv'] = conv_w(ks[5], DIM_V * DIM_U, PLANES, 1.0 / np.sqrt(PLANES))
    p['sv'], p['bv'] = bn_fold(ks[6], DIM_V * DIM_U)
    p['w_pos'] = (jax.random.normal(ks[7], (DIM_K, DIM_U, 1, R, R), jnp.float32)
                  / np.sqrt(DIM_U * R * R))
    p['b_pos'] = jax.random.normal(ks[8], (DIM_K,), jnp.float32) * 0.05
    p['s2'], p['b2'] = bn_fold(ks[9], PLANES)
    p['w3'] = conv_w(ks[10], C_OUT, PLANES, 1.0 / np.sqrt(PLANES))
    p['s3'], p['b3'] = bn_fold(ks[11], C_OUT)
    return p


def pos_conv_as_dense(w_pos):
    """Turn the (1, R, R) Conv3d weights into E[k, m, n] with
    lambda_p[k, d, n] = sum_m v[d, m] * E[k, m, n] + bias[k]  (parameter setup only)."""
    pad = R // 2
    ny = jnp.repeat(jnp.arange(HH), WW)          # row index of flattened position
    nx = jnp.tile(jnp.arange(WW), HH)            # col index of flattened position
    dy = ny[:, None] - ny[None, :] + pad         # [m, n]
    dx = nx[:, None] - nx[None, :] + pad
    valid = (dy >= 0) & (dy < R) & (dx >= 0) & (dx < R)
    dyc = jnp.clip(dy, 0, R - 1)
    dxc = jnp.clip(dx, 0, R - 1)
    wk = w_pos[:, 0, 0]                          # (DIM_K, R, R)  (dim_u == 1)
    e = wk[:, dyc, dxc]                          # (DIM_K, N, N)
    return jnp.where(valid[None], e, 0.0).astype(jnp.float32)


def prepare_inputs(p):
    """One-time, zero-runtime-cost folding of BN scales into conv weights,
    q/k/v weight merge and dense-E construction (bf16)."""
    f32 = jnp.float32
    w1f = p['w1'] * p['s1'][:, None]
    wqf = p['wq'] * p['sq'][:, None]
    wvf = p['wv'] * p['sv'][:, None]
    wqkv = jnp.concatenate([wqf, p['wk'], wvf], axis=0)                # (82, PLANES)
    bqkv = jnp.concatenate(
        [p['bq'], jnp.zeros((DIM_K,), f32), p['bv']], axis=0)[:, None]  # (82, 1)
    w3f = p['w3'] * p['s3'][:, None]
    e = pos_conv_as_dense(p['w_pos'])                                  # (K, N, N)
    e_r = jnp.transpose(e, (1, 0, 2)).reshape(N, DIM_K * N).astype(jnp.bfloat16)
    return dict(
        w1=w1f.astype(f32), b1=p['b1'][:, None],
        wqkv=wqkv.astype(f32), bqkv=bqkv,
        e=e_r, pb=p['b_pos'][:, None],
        s2=p['s2'][:, None], b2=p['b2'][:, None],
        w3=w3f.astype(f32), b3=p['b3'][:, None],
    )


# ------------------------------ pure-JAX reference ---------------------------
def ref_forward(x, p):
    B = x.shape[0]
    hp = jax.lax.Precision.HIGHEST

    def conv1x1(w, t):
        return jnp.einsum('oc,bchw->bohw', w, t, precision=hp)

    def bn(t, s, b):
        return t * s[None, :, None, None] + b[None, :, None, None]

    t = jax.nn.relu(bn(conv1x1(p['w1'], x), p['s1'], p['b1']))
    q = bn(conv1x1(p['wq'], t), p['sq'], p['bq'])
    kf = conv1x1(p['wk'], t)
    v = bn(conv1x1(p['wv'], t), p['sv'], p['bv'])
    q = q.reshape(B, HEADS, DIM_K, N)
    kf = kf.reshape(B, DIM_U, DIM_K, N)
    v4 = v.reshape(B, DIM_U, DIM_V, N)
    ks = jax.nn.softmax(kf, axis=-1)
    lam_c = jnp.einsum('bukm,buvm->bkv', ks, v4, precision=hp)
    yc = jnp.einsum('bhkn,bkv->bhvn', q, lam_c, precision=hp)

    v_img = v4.reshape(B, DIM_U, DIM_V, HH, WW).transpose(0, 2, 1, 3, 4)
    v_img = v_img.reshape(B * DIM_V, DIM_U, HH, WW)
    w2d = p['w_pos'][:, :, 0]                     # (DIM_K, DIM_U, R, R)
    pad = R // 2
    lp = jax.lax.conv_general_dilated(
        v_img, w2d, window_strides=(1, 1),
        padding=((pad, pad), (pad, pad)),
        dimension_numbers=('NCHW', 'OIHW', 'NCHW'), precision=hp)
    lp = lp + p['b_pos'][None, :, None, None]
    lp = lp.reshape(B, DIM_V, DIM_K, N).transpose(0, 2, 1, 3)     # (B, K, V, N)
    yp = jnp.einsum('bhkn,bkvn->bhvn', q, lp, precision=hp)

    y = (yc + yp).reshape(B, PLANES, HH, WW)
    y = jax.nn.relu(bn(y, p['s2'], p['b2']))
    o = bn(conv1x1(p['w3'], y), p['s3'], p['b3'])
    return jax.nn.relu(o + x)


# ----------------------------------- main ------------------------------------
if __name__ == "__main__":
    assert DIM_U == 1 and C_OUT == IN_PLANES

    key = jax.random.PRNGKey(0)
    kx, kp = jax.random.split(key)
    x = jax.random.normal(kx, (BATCH, IN_PLANES, HH, WW), jnp.float32)
    params = init_params(kp)
    prep = prepare_inputs(params)

    out = jax.block_until_ready(lambda_block_pallas(x, prep))
    ref = jax.block_until_ready(ref_forward(x, params))

    err = float(jnp.max(jnp.abs(out - ref)))
    assert bool(jnp.allclose(out, ref, atol=5e-2, rtol=5e-2)), \
        f"mismatch, max abs err = {err}"

    print("KERNEL_OK")
</pallas_src>

<mosaic_0001>
module attributes {stable_mosaic.version = 11 : i64} {
  func.func @_lambda_block_kernel(%arg0: i32, %arg1: memref<32x512xf32, #tpu.memory_space<vmem>>, %arg2: memref<8x32xf32, #tpu.memory_space<vmem>>, %arg3: memref<8x1xf32, #tpu.memory_space<vmem>>, %arg4: memref<82x8xf32, #tpu.memory_space<vmem>>, %arg5: memref<82x1xf32, #tpu.memory_space<vmem>>, %arg6: memref<256x4096xbf16, #tpu.memory_space<vmem>>, %arg7: memref<16x1xf32, #tpu.memory_space<vmem>>, %arg8: memref<8x1xf32, #tpu.memory_space<vmem>>, %arg9: memref<8x1xf32, #tpu.memory_space<vmem>>, %arg10: memref<32x8xf32, #tpu.memory_space<vmem>>, %arg11: memref<32x1xf32, #tpu.memory_space<vmem>>, %arg12: memref<32x512xf32, #tpu.memory_space<vmem>>, %arg13: memref<64x256xf32, #tpu.memory_space<vmem>>) attributes {dimension_semantics = [#tpu.dimension_semantics<arbitrary>], iteration_bounds = array<i64: 1>, scalar_prefetch = 0 : i64, scratch_operands = 1 : i64, tpu.core_type = #tpu.core_type<tc>, window_params = [{pipeline_mode = #tpu.pipeline_mode<synchronous>, transform_indices = @transform_0, window_bounds = array<i64: 32, 512>}, {pipeline_mode = #tpu.pipeline_mode<synchronous>, transform_indices = @transform_1, window_bounds = array<i64: 8, 32>}, {pipeline_mode = #tpu.pipeline_mode<synchronous>, transform_indices = @transform_2, window_bounds = array<i64: 8, 1>}, {pipeline_mode = #tpu.pipeline_mode<synchronous>, transform_indices = @transform_3, window_bounds = array<i64: 82, 8>}, {pipeline_mode = #tpu.pipeline_mode<synchronous>, transform_indices = @transform_4, window_bounds = array<i64: 82, 1>}, {pipeline_mode = #tpu.pipeline_mode<synchronous>, transform_indices = @transform_5, window_bounds = array<i64: 256, 4096>}, {pipeline_mode = #tpu.pipeline_mode<synchronous>, transform_indices = @transform_6, window_bounds = array<i64: 16, 1>}, {pipeline_mode = #tpu.pipeline_mode<synchronous>, transform_indices = @transform_7, window_bounds = array<i64: 8, 1>}, {pipeline_mode = #tpu.pipeline_mode<synchronous>, transform_indices = @transform_8, window_bounds = array<i64: 8, 1>}, {pipeline_mode = #tpu.pipeline_mode<synchronous>, transform_indices = @transform_9, window_bounds = array<i64: 32, 8>}, {pipeline_mode = #tpu.pipeline_mode<synchronous>, transform_indices = @transform_10, window_bounds = array<i64: 32, 1>}, {pipeline_mode = #tpu.pipeline_mode<synchronous>, transform_indices = @transform_11, window_bounds = array<i64: 32, 512>}]} {
    %c0 = arith.constant 0 : index
    %c0_0 = arith.constant 0 : index
    %0 = vector.load %arg1[%c0, %c0_0] : memref<32x512xf32, #tpu.memory_space<vmem>>, vector<32x512xf32>
    %c0_1 = arith.constant 0 : index
    %c0_2 = arith.constant 0 : index
    %1 = vector.load %arg2[%c0_1, %c0_2] : memref<8x32xf32, #tpu.memory_space<vmem>>, vector<8x32xf32>
    %cst = arith.constant dense<0.000000e+00> : vector<8x512xf32>
    %2 = tpu.matmul %1, %0, %cst {dimension_numbers = #tpu.dot_dimension_numbers<[1], [0], [0], [1], [0, 0, 1, 1], [], []>} : vector<8x32xf32>, vector<32x512xf32>, vector<8x512xf32> -> vector<8x512xf32>
    %c0_3 = arith.constant 0 : index
    %c0_4 = arith.constant 0 : index
    %3 = vector.load %arg3[%c0_3, %c0_4] : memref<8x1xf32, #tpu.memory_space<vmem>>, vector<8x1xf32>
    %4 = vector.broadcast %3 : vector<8x1xf32> to vector<8x512xf32>
    %5 = arith.addf %2, %4 : vector<8x512xf32>
    %cst_5 = arith.constant 0.000000e+00 : f32
    %6 = vector.broadcast %cst_5 : f32 to vector<8x512xf32>
    %7 = arith.maximumf %5, %6 : vector<8x512xf32>
    %c0_6 = arith.constant 0 : index
    %c0_7 = arith.constant 0 : index
    %8 = vector.load %arg4[%c0_6, %c0_7] : memref<82x8xf32, #tpu.memory_space<vmem>>, vector<82x8xf32>
    %cst_8 = arith.constant dense<0.000000e+00> : vector<82x512xf32>
    %9 = tpu.matmul %8, %7, %cst_8 {dimension_numbers = #tpu.dot_dimension_numbers<[1], [0], [0], [1], [0, 0, 1, 1], [], []>} : vector<82x8xf32>, vector<8x512xf32>, vector<82x512xf32> -> vector<82x512xf32>
    %c0_9 = arith.constant 0 : index
    %c0_10 = arith.constant 0 : index
    %10 = vector.load %arg5[%c0_9, %c0_10] : memref<82x1xf32, #tpu.memory_space<vmem>>, vector<82x1xf32>
    %11 = vector.broadcast %10 : vector<82x1xf32> to vector<82x512xf32>
    %12 = arith.addf %9, %11 : vector<82x512xf32>
    %13 = vector.extract_strided_slice %12 {offsets = [0, 0], sizes = [64, 512], strides = [1, 1]} : vector<82x512xf32> to vector<64x512xf32>
    %14 = vector.extract_strided_slice %12 {offsets = [64, 0], sizes = [16, 512], strides = [1, 1]} : vector<82x512xf32> to vector<16x512xf32>
    %15 = vector.extract_strided_slice %12 {offsets = [80, 0], sizes = [2, 512], strides = [1, 1]} : vector<82x512xf32> to vector<2x512xf32>
    %16 = vector.extract_strided_slice %14 {offsets = [0, 0], sizes = [16, 256], strides = [1, 1]} : vector<16x512xf32> to vector<16x256xf32>
    %17 = vector.extract_strided_slice %15 {offsets = [0, 0], sizes = [2, 256], strides = [1, 1]} : vector<2x512xf32> to vector<2x256xf32>
    %cst_11 = arith.constant dense<0xFF800000> : vector<16xf32>
    %18 = vector.multi_reduction <maximumf>, %16, %cst_11 [1] : vector<16x256xf32> to vector<16xf32>
    %19 = vector.shape_cast %18 : vector<16xf32> to vector<16x1xf32>
    %20 = vector.broadcast %19 : vector<16x1xf32> to vector<16x256xf32>
    %21 = arith.subf %16, %20 : vector<16x256xf32>
    %22 = math.exp %21 : vector<16x256xf32>
    %cst_12 = arith.constant dense<0.000000e+00> : vector<16xf32>
    %23 = vector.multi_reduction <add>, %22, %cst_12 [1] : vector<16x256xf32> to vector<16xf32>
    %24 = vector.shape_cast %23 : vector<16xf32> to vector<16x1xf32>
    %25 = tpu.reciprocal %24 {approx = true} : vector<16x1xf32> -> vector<16x1xf32>
    %26 = vector.broadcast %25 : vector<16x1xf32> to vector<16x256xf32>
    %27 = arith.mulf %22, %26 : vector<16x256xf32>
    %cst_13 = arith.constant dense<0.000000e+00> : vector<16x2xf32>
    %28 = tpu.matmul %27, %17, %cst_13 {dimension_numbers = #tpu.dot_dimension_numbers<[1], [1], [0], [0], [0, 0, 1, 0], [], []>} : vector<16x256xf32>, vector<2x256xf32>, vector<16x2xf32> -> vector<16x2xf32>
    %29 = vector.extract_strided_slice %14 {offsets = [0, 256], sizes = [16, 256], strides = [1, 1]} : vector<16x512xf32> to vector<16x256xf32>
    %30 = vector.extract_strided_slice %15 {offsets = [0, 256], sizes = [2, 256], strides = [1, 1]} : vector<2x512xf32> to vector<2x256xf32>
    %cst_14 = arith.constant dense<0xFF800000> : vector<16xf32>
    %31 = vector.multi_reduction <maximumf>, %29, %cst_14 [1] : vector<16x256xf32> to vector<16xf32>
    %32 = vector.shape_cast %31 : vector<16xf32> to vector<16x1xf32>
    %33 = vector.broadcast %32 : vector<16x1xf32> to vector<16x256xf32>
    %34 = arith.subf %29, %33 : vector<16x256xf32>
    %35 = math.exp %34 : vector<16x256xf32>
    %cst_15 = arith.constant dense<0.000000e+00> : vector<16xf32>
    %36 = vector.multi_reduction <add>, %35, %cst_15 [1] : vector<16x256xf32> to vector<16xf32>
    %37 = vector.shape_cast %36 : vector<16xf32> to vector<16x1xf32>
    %38 = tpu.reciprocal %37 {approx = true} : vector<16x1xf32> -> vector<16x1xf32>
    %39 = vector.broadcast %38 : vector<16x1xf32> to vector<16x256xf32>
    %40 = arith.mulf %35, %39 : vector<16x256xf32>
    %cst_16 = arith.constant dense<0.000000e+00> : vector<16x2xf32>
    %41 = tpu.matmul %40, %30, %cst_16 {dimension_numbers = #tpu.dot_dimension_numbers<[1], [1], [0], [0], [0, 0, 1, 0], [], []>} : vector<16x256xf32>, vector<2x256xf32>, vector<16x2xf32> -> vector<16x2xf32>
    %42 = vector.extract_strided_slice %15 {offsets = [0, 0], sizes = [2, 256], strides = [1, 1]} : vector<2x512xf32> to vector<2x256xf32>
    %43 = vector.extract_strided_slice %15 {offsets = [0, 256], sizes = [2, 256], strides = [1, 1]} : vector<2x512xf32> to vector<2x256xf32>
    %44 = tpu.concatenate %42, %43 in 0 : vector<2x256xf32>, vector<2x256xf32> -> vector<4x256xf32>
    %45 = arith.truncf %44 : vector<4x256xf32> to vector<4x256xbf16>
    %c0_17 = arith.constant 0 : index
    %c0_18 = arith.constant 0 : index
    %46 = vector.load %arg6[%c0_17, %c0_18] : memref<256x4096xbf16, #tpu.memory_space<vmem>>, vector<256x4096xbf16>
    %cst_19 = arith.constant dense<0.000000e+00> : vector<4x4096xf32>
    %47 = tpu.matmul %45, %46, %cst_19 {dimension_numbers = #tpu.dot_dimension_numbers<[1], [0], [0], [1], [0, 0, 1, 1], [], []>} : vector<4x256xbf16>, vector<256x4096xbf16>, vector<4x4096xf32> -> vector<4x4096xf32>
    %48 = vector.extract_strided_slice %47 {offsets = [0, 0], sizes = [1, 256], strides = [1, 1]} : vector<4x4096xf32> to vector<1x256xf32>
    %c0_20 = arith.constant 0 : index
    %c0_21 = arith.constant 0 : index
    %49 = vector.load %arg13[%c0_20, %c0_21] : memref<64x256xf32, #tpu.memory_space<vmem>>, vector<1x256xf32>
    tpu.vector_store %arg13[%c0_20, %c0_21], %48 {strides = array<i32>} : memref<64x256xf32, #tpu.memory_space<vmem>>, vector<1x256xf32>,
    %50 = vector.extract_strided_slice %47 {offsets = [0, 256], sizes = [1, 256], strides = [1, 1]} : vector<4x4096xf32> to vector<1x256xf32>
    %c1 = arith.constant 1 : index
    %c0_22 = arith.constant 0 : index
    %51 = vector.load %arg13[%c1, %c0_22] : memref<64x256xf32, #tpu.memory_space<vmem>>, vector<1x256xf32>
    tpu.vector_store %arg13[%c1, %c0_22], %50 {strides = array<i32>} : memref<64x256xf32, #tpu.memory_space<vmem>>, vector<1x256xf32>,
    %52 = vector.extract_strided_slice %47 {offsets = [0, 512], sizes = [1, 256], strides = [1, 1]} : vector<4x4096xf32> to vector<1x256xf32>
    %c2 = arith.constant 2 : index
    %c0_23 = arith.constant 0 : index
    %53 = vector.load %arg13[%c2, %c0_23] : memref<64x256xf32, #tpu.memory_space<vmem>>, vector<1x256xf32>
    tpu.vector_store %arg13[%c2, %c0_23], %52 {strides = array<i32>} : memref<64x256xf32, #tpu.memory_space<vmem>>, vector<1x256xf32>,
    %54 = vector.extract_strided_slice %47 {offsets = [0, 768], sizes = [1, 256], strides = [1, 1]} : vector<4x4096xf32> to vector<1x256xf32>
    %c3 = arith.constant 3 : index
    %c0_24 = arith.constant 0 : index
    %55 = vector.load %arg13[%c3, %c0_24] : memref<64x256xf32, #tpu.memory_space<vmem>>, vector<1x256xf32>
    tpu.vector_store %arg13[%c3, %c0_24], %54 {strides = array<i32>} : memref<64x256xf32, #tpu.memory_space<vmem>>, vector<1x256xf32>,
    %56 = vector.extract_strided_slice %47 {offsets = [0, 1024], sizes = [1, 256], strides = [1, 1]} : vector<4x4096xf32> to vector<1x256xf32>
    %c4 = arith.constant 4 : index
    %c0_25 = arith.constant 0 : index
    %57 = vector.load %arg13[%c4, %c0_25] : memref<64x256xf32, #tpu.memory_space<vmem>>, vector<1x256xf32>
    tpu.vector_store %arg13[%c4, %c0_25], %56 {strides = array<i32>} : memref<64x256xf32, #tpu.memory_space<vmem>>, vector<1x256xf32>,
    %58 = vector.extract_strided_slice %47 {offsets = [0, 1280], sizes = [1, 256], strides = [1, 1]} : vector<4x4096xf32> to vector<1x256xf32>
    %c5 = arith.constant 5 : index
    %c0_26 = arith.constant 0 : index
    %59 = vector.load %arg13[%c5, %c0_26] : memref<64x256xf32, #tpu.memory_space<vmem>>, vector<1x256xf32>
    tpu.vector_store %arg13[%c5, %c0_26], %58 {strides = array<i32>} : memref<64x256xf32, #tpu.memory_space<vmem>>, vector<1x256xf32>,
    %60 = vector.extract_strided_slice %47 {offsets = [0, 1536], sizes = [1, 256], strides = [1, 1]} : vector<4x4096xf32> to vector<1x256xf32>
    %c6 = arith.constant 6 : index
    %c0_27 = arith.constant 0 : index
    %61 = vector.load %arg13[%c6, %c0_27] : memref<64x256xf32, #tpu.memory_space<vmem>>, vector<1x256xf32>
    tpu.vector_store %arg13[%c6, %c0_27], %60 {strides = array<i32>} : memref<64x256xf32, #tpu.memory_space<vmem>>, vector<1x256xf32>,
    %62 = vector.extract_strided_slice %47 {offsets = [0, 1792], sizes = [1, 256], strides = [1, 1]} : vector<4x4096xf32> to vector<1x256xf32>
    %c7 = arith.constant 7 : index
    %c0_28 = arith.constant 0 : index
    %63 = vector.load %arg13[%c7, %c0_28] : memref<64x256xf32, #tpu.memory_space<vmem>>, vector<1x256xf32>
    tpu.vector_store %arg13[%c7, %c0_28], %62 {strides = array<i32>} : memref<64x256xf32, #tpu.memory_space<vmem>>, vector<1x256xf32>,
    %64 = vector.extract_strided_slice %47 {offsets = [0, 2048], sizes = [1, 256], strides = [1, 1]} : vector<4x4096xf32> to vector<1x256xf32>
    %c8 = arith.constant 8 : index
    %c0_29 = arith.constant 0 : index
    %65 = vector.load %arg13[%c8, %c0_29] : memref<64x256xf32, #tpu.memory_space<vmem>>, vector<1x256xf32>
    tpu.vector_store %arg13[%c8, %c0_29], %64 {strides = array<i32>} : memref<64x256xf32, #tpu.memory_space<vmem>>, vector<1x256xf32>,
    %66 = vector.extract_strided_slice %47 {offsets = [0, 2304], sizes = [1, 256], strides = [1, 1]} : vector<4x4096xf32> to vector<1x256xf32>
    %c9 = arith.constant 9 : index
    %c0_30 = arith.constant 0 : index
    %67 = vector.load %arg13[%c9, %c0_30] : memref<64x256xf32, #tpu.memory_space<vmem>>, vector<1x256xf32>
    tpu.vector_store %arg13[%c9, %c0_30], %66 {strides = array<i32>} : memref<64x256xf32, #tpu.memory_space<vmem>>, vector<1x256xf32>,
    %68 = vector.extract_strided_slice %47 {offsets = [0, 2560], sizes = [1, 256], strides = [1, 1]} : vector<4x4096xf32> to vector<1x256xf32>
    %c10 = arith.constant 10 : index
    %c0_31 = arith.constant 0 : index
    %69 = vector.load %arg13[%c10, %c0_31] : memref<64x256xf32, #tpu.memory_space<vmem>>, vector<1x256xf32>
    tpu.vector_store %arg13[%c10, %c0_31], %68 {strides = array<i32>} : memref<64x256xf32, #tpu.memory_space<vmem>>, vector<1x256xf32>,
    %70 = vector.extract_strided_slice %47 {offsets = [0, 2816], sizes = [1, 256], strides = [1, 1]} : vector<4x4096xf32> to vector<1x256xf32>
    %c11 = arith.constant 11 : index
    %c0_32 = arith.constant 0 : index
    %71 = vector.load %arg13[%c11, %c0_32] : memref<64x256xf32, #tpu.memory_space<vmem>>, vector<1x256xf32>
    tpu.vector_store %arg13[%c11, %c0_32], %70 {strides = array<i32>} : memref<64x256xf32, #tpu.memory_space<vmem>>, vector<1x256xf32>,
    %72 = vector.extract_strided_slice %47 {offsets = [0, 3072], sizes = [1, 256], strides = [1, 1]} : vector<4x4096xf32> to vector<1x256xf32>
    %c12 = arith.constant 12 : index
    %c0_33 = arith.constant 0 : index
    %73 = vector.load %arg13[%c12, %c0_33] : memref<64x256xf32, #tpu.memory_space<vmem>>, vector<1x256xf32>
    tpu.vector_store %arg13[%c12, %c0_33], %72 {strides = array<i32>} : memref<64x256xf32, #tpu.memory_space<vmem>>, vector<1x256xf32>,
    %74 = vector.extract_strided_slice %47 {offsets = [0, 3328], sizes = [1, 256], strides = [1, 1]} : vector<4x4096xf32> to vector<1x256xf32>
    %c13 = arith.constant 13 : index
    %c0_34 = arith.constant 0 : index
    %75 = vector.load %arg13[%c13, %c0_34] : memref<64x256xf32, #tpu.memory_space<vmem>>, vector<1x256xf32>
    tpu.vector_store %arg13[%c13, %c0_34], %74 {strides = array<i32>} : memref<64x256xf32, #tpu.memory_space<vmem>>, vector<1x256xf32>,
    %76 = vector.extract_strided_slice %47 {offsets = [0, 3584], sizes = [1, 256], strides = [1, 1]} : vector<4x4096xf32> to vector<1x256xf32>
    %c14 = arith.constant 14 : index
    %c0_35 = arith.constant 0 : index
    %77 = vector.load %arg13[%c14, %c0_35] : memref<64x256xf32, #tpu.memory_space<vmem>>, vector<1x256xf32>
    tpu.vector_store %arg13[%c14, %c0_35], %76 {strides = array<i32>} : memref<64x256xf32, #tpu.memory_space<vmem>>, vector<1x256xf32>,
    %78 = vector.extract_strided_slice %47 {offsets = [0, 3840], sizes = [1, 256], strides = [1, 1]} : vector<4x4096xf32> to vector<1x256xf32>
    %c15 = arith.constant 15 : index
    %c0_36 = arith.constant 0 : index
    %79 = vector.load %arg13[%c15, %c0_36] : memref<64x256xf32, #tpu.memory_space<vmem>>, vector<1x256xf32>
    tpu.vector_store %arg13[%c15, %c0_36], %78 {strides = array<i32>} : memref<64x256xf32, #tpu.memory_space<vmem>>, vector<1x256xf32>,
    %80 = vector.extract_strided_slice %47 {offsets = [1, 0], sizes = [1, 256], strides = [1, 1]} : vector<4x4096xf32> to vector<1x256xf32>
    %c16 = arith.constant 16 : index
    %c0_37 = arith.constant 0 : index
    %81 = vector.load %arg13[%c16, %c0_37] : memref<64x256xf32, #tpu.memory_space<vmem>>, vector<1x256xf32>
    tpu.vector_store %arg13[%c16, %c0_37], %80 {strides = array<i32>} : memref<64x256xf32, #tpu.memory_space<vmem>>, vector<1x256xf32>,
    %82 = vector.extract_strided_slice %47 {offsets = [1, 256], sizes = [1, 256], strides = [1, 1]} : vector<4x4096xf32> to vector<1x256xf32>
    %c17 = arith.constant 17 : index
    %c0_38 = arith.constant 0 : index
    %83 = vector.load %arg13[%c17, %c0_38] : memref<64x256xf32, #tpu.memory_space<vmem>>, vector<1x256xf32>
    tpu.vector_store %arg13[%c17, %c0_38], %82 {strides = array<i32>} : memref<64x256xf32, #tpu.memory_space<vmem>>, vector<1x256xf32>,
    %84 = vector.extract_strided_slice %47 {offsets = [1, 512], sizes = [1, 256], strides = [1, 1]} : vector<4x4096xf32> to vector<1x256xf32>
    %c18 = arith.constant 18 : index
    %c0_39 = arith.constant 0 : index
    %85 = vector.load %arg13[%c18, %c0_39] : memref<64x256xf32, #tpu.memory_space<vmem>>, vector<1x256xf32>
    tpu.vector_store %arg13[%c18, %c0_39], %84 {strides = array<i32>} : memref<64x256xf32, #tpu.memory_space<vmem>>, vector<1x256xf32>,
    %86 = vector.extract_strided_slice %47 {offsets = [1, 768], sizes = [1, 256], strides = [1, 1]} : vector<4x4096xf32> to vector<1x256xf32>
    %c19 = arith.constant 19 : index
    %c0_40 = arith.constant 0 : index
    %87 = vector.load %arg13[%c19, %c0_40] : memref<64x256xf32, #tpu.memory_space<vmem>>, vector<1x256xf32>
    tpu.vector_store %arg13[%c19, %c0_40], %86 {strides = array<i32>} : memref<64x256xf32, #tpu.memory_space<vmem>>, vector<1x256xf32>,
    %88 = vector.extract_strided_slice %47 {offsets = [1, 1024], sizes = [1, 256], strides = [1, 1]} : vector<4x4096xf32> to vector<1x256xf32>
    %c20 = arith.constant 20 : index
    %c0_41 = arith.constant 0 : index
    %89 = vector.load %arg13[%c20, %c0_41] : memref<64x256xf32, #tpu.memory_space<vmem>>, vector<1x256xf32>
    tpu.vector_store %arg13[%c20, %c0_41], %88 {strides = array<i32>} : memref<64x256xf32, #tpu.memory_space<vmem>>, vector<1x256xf32>,
    %90 = vector.extract_strided_slice %47 {offsets = [1, 1280], sizes = [1, 256], strides = [1, 1]} : vector<4x4096xf32> to vector<1x256xf32>
    %c21 = arith.constant 21 : index
    %c0_42 = arith.constant 0 : index
    %91 = vector.load %arg13[%c21, %c0_42] : memref<64x256xf32, #tpu.memory_space<vmem>>, vector<1x256xf32>
    tpu.vector_store %arg13[%c21, %c0_42], %90 {strides = array<i32>} : memref<64x256xf32, #tpu.memory_space<vmem>>, vector<1x256xf32>,
    %92 = vector.extract_strided_slice %47 {offsets = [1, 1536], sizes = [1, 256], strides = [1, 1]} : vector<4x4096xf32> to vector<1x256xf32>
    %c22 = arith.constant 22 : index
    %c0_43 = arith.constant 0 : index
    %93 = vector.load %arg13[%c22, %c0_43] : memref<64x256xf32, #tpu.memory_space<vmem>>, vector<1x256xf32>
    tpu.vector_store %arg13[%c22, %c0_43], %92 {strides = array<i32>} : memref<64x256xf32, #tpu.memory_space<vmem>>, vector<1x256xf32>,
    %94 = vector.extract_strided_slice %47 {offsets = [1, 1792], sizes = [1, 256], strides = [1, 1]} : vector<4x4096xf32> to vector<1x256xf32>
    %c23 = arith.constant 23 : index
    %c0_44 = arith.constant 0 : index
    %95 = vector.load %arg13[%c23, %c0_44] : memref<64x256xf32, #tpu.memory_space<vmem>>, vector<1x256xf32>
    tpu.vector_store %arg13[%c23, %c0_44], %94 {strides = array<i32>} : memref<64x256xf32, #tpu.memory_space<vmem>>, vector<1x256xf32>,
    %96 = vector.extract_strided_slice %47 {offsets = [1, 2048], sizes = [1, 256], strides = [1, 1]} : vector<4x4096xf32> to vector<1x256xf32>
    %c24 = arith.constant 24 : index
    %c0_45 = arith.constant 0 : index
    %97 = vector.load %arg13[%c24, %c0_45] : memref<64x256xf32, #tpu.memory_space<vmem>>, vector<1x256xf32>
    tpu.vector_store %arg13[%c24, %c0_45], %96 {strides = array<i32>} : memref<64x256xf32, #tpu.memory_space<vmem>>, vector<1x256xf32>,
    %98 = vector.extract_strided_slice %47 {offsets = [1, 2304], sizes = [1, 256], strides = [1, 1]} : vector<4x4096xf32> to vector<1x256xf32>
    %c25 = arith.constant 25 : index
    %c0_46 = arith.constant 0 : index
    %99 = vector.load %arg13[%c25, %c0_46] : memref<64x256xf32, #tpu.memory_space<vmem>>, vector<1x256xf32>
    tpu.vector_store %arg13[%c25, %c0_46], %98 {strides = array<i32>} : memref<64x256xf32, #tpu.memory_space<vmem>>, vector<1x256xf32>,
    %100 = vector.extract_strided_slice %47 {offsets = [1, 2560], sizes = [1, 256], strides = [1, 1]} : vector<4x4096xf32> to vector<1x256xf32>
    %c26 = arith.constant 26 : index
    %c0_47 = arith.constant 0 : index
    %101 = vector.load %arg13[%c26, %c0_47] : memref<64x256xf32, #tpu.memory_space<vmem>>, vector<1x256xf32>
    tpu.vector_store %arg13[%c26, %c0_47], %100 {strides = array<i32>} : memref<64x256xf32, #tpu.memory_space<vmem>>, vector<1x256xf32>,
    %102 = vector.extract_strided_slice %47 {offsets = [1, 2816], sizes = [1, 256], strides = [1, 1]} : vector<4x4096xf32> to vector<1x256xf32>
    %c27 = arith.constant 27 : index
    %c0_48 = arith.constant 0 : index
    %103 = vector.load %arg13[%c27, %c0_48] : memref<64x256xf32, #tpu.memory_space<vmem>>, vector<1x256xf32>
    tpu.vector_store %arg13[%c27, %c0_48], %102 {strides = array<i32>} : memref<64x256xf32, #tpu.memory_space<vmem>>, vector<1x256xf32>,
    %104 = vector.extract_strided_slice %47 {offsets = [1, 3072], sizes = [1, 256], strides = [1, 1]} : vector<4x4096xf32> to vector<1x256xf32>
    %c28 = arith.constant 28 : index
    %c0_49 = arith.constant 0 : index
    %105 = vector.load %arg13[%c28, %c0_49] : memref<64x256xf32, #tpu.memory_space<vmem>>, vector<1x256xf32>
    tpu.vector_store %arg13[%c28, %c0_49], %104 {strides = array<i32>} : memref<64x256xf32, #tpu.memory_space<vmem>>, vector<1x256xf32>,
    %106 = vector.extract_strided_slice %47 {offsets = [1, 3328], sizes = [1, 256], strides = [1, 1]} : vector<4x4096xf32> to vector<1x256xf32>
    %c29 = arith.constant 29 : index
    %c0_50 = arith.constant 0 : index
    %107 = vector.load %arg13[%c29, %c0_50] : memref<64x256xf32, #tpu.memory_space<vmem>>, vector<1x256xf32>
    tpu.vector_store %arg13[%c29, %c0_50], %106 {strides = array<i32>} : memref<64x256xf32, #tpu.memory_space<vmem>>, vector<1x256xf32>,
    %108 = vector.extract_strided_slice %47 {offsets = [1, 3584], sizes = [1, 256], strides = [1, 1]} : vector<4x4096xf32> to vector<1x256xf32>
    %c30 = arith.constant 30 : index
    %c0_51 = arith.constant 0 : index
    %109 = vector.load %arg13[%c30, %c0_51] : memref<64x256xf32, #tpu.memory_space<vmem>>, vector<1x256xf32>
    tpu.vector_store %arg13[%c30, %c0_51], %108 {strides = array<i32>} : memref<64x256xf32, #tpu.memory_space<vmem>>, vector<1x256xf32>,
    %110 = vector.extract_strided_slice %47 {offsets = [1, 3840], sizes = [1, 256], strides = [1, 1]} : vector<4x4096xf32> to vector<1x256xf32>
    %c31 = arith.constant 31 : index
    %c0_52 = arith.constant 0 : index
    %111 = vector.load %arg13[%c31, %c0_52] : memref<64x256xf32, #tpu.memory_space<vmem>>, vector<1x256xf32>
    tpu.vector_store %arg13[%c31, %c0_52], %110 {strides = array<i32>} : memref<64x256xf32, #tpu.memory_space<vmem>>, vector<1x256xf32>,
    %112 = vector.extract_strided_slice %47 {offsets = [2, 0], sizes = [1, 256], strides = [1, 1]} : vector<4x4096xf32> to vector<1x256xf32>
    %c32 = arith.constant 32 : index
    %c0_53 = arith.constant 0 : index
    %113 = vector.load %arg13[%c32, %c0_53] : memref<64x256xf32, #tpu.memory_space<vmem>>, vector<1x256xf32>
    tpu.vector_store %arg13[%c32, %c0_53], %112 {strides = array<i32>} : memref<64x256xf32, #tpu.memory_space<vmem>>, vector<1x256xf32>,
    %114 = vector.extract_strided_slice %47 {offsets = [2, 256], sizes = [1, 256], strides = [1, 1]} : vector<4x4096xf32> to vector<1x256xf32>
    %c33 = arith.constant 33 : index
    %c0_54 = arith.constant 0 : index
    %115 = vector.load %arg13[%c33, %c0_54] : memref<64x256xf32, #tpu.memory_space<vmem>>, vector<1x256xf32>
    tpu.vector_store %arg13[%c33, %c0_54], %114 {strides = array<i32>} : memref<64x256xf32, #tpu.memory_space<vmem>>, vector<1x256xf32>,
    %116 = vector.extract_strided_slice %47 {offsets = [2, 512], sizes = [1, 256], strides = [1, 1]} : vector<4x4096xf32> to vector<1x256xf32>
    %c34 = arith.constant 34 : index
    %c0_55 = arith.constant 0 : index
    %117 = vector.load %arg13[%c34, %c0_55] : memref<64x256xf32, #tpu.memory_space<vmem>>, vector<1x256xf32>
    tpu.vector_store %arg13[%c34, %c0_55], %116 {strides = array<i32>} : memref<64x256xf32, #tpu.memory_space<vmem>>, vector<1x256xf32>,
    %118 = vector.extract_strided_slice %47 {offsets = [2, 768], sizes = [1, 256], strides = [1, 1]} : vector<4x4096xf32> to vector<1x256xf32>
    %c35 = arith.constant 35 : index
    %c0_56 = arith.constant 0 : index
    %119 = vector.load %arg13[%c35, %c0_56] : memref<64x256xf32, #tpu.memory_space<vmem>>, vector<1x256xf32>
    tpu.vector_store %arg13[%c35, %c0_56], %118 {strides = array<i32>} : memref<64x256xf32, #tpu.memory_space<vmem>>, vector<1x256xf32>,
    %120 = vector.extract_strided_slice %47 {offsets = [2, 1024], sizes = [1, 256], strides = [1, 1]} : vector<4x4096xf32> to vector<1x256xf32>
    %c36 = arith.constant 36 : index
    %c0_57 = arith.constant 0 : index
    %121 = vector.load %arg13[%c36, %c0_57] : memref<64x256xf32, #tpu.memory_space<vmem>>, vector<1x256xf32>
    tpu.vector_store %arg13[%c36, %c0_57], %120 {strides = array<i32>} : memref<64x256xf32, #tpu.memory_space<vmem>>, vector<1x256xf32>,
    %122 = vector.extract_strided_slice %47 {offsets = [2, 1280], sizes = [1, 256], strides = [1, 1]} : vector<4x4096xf32> to vector<1x256xf32>
    %c37 = arith.constant 37 : index
    %c0_58 = arith.constant 0 : index
    %123 = vector.load %arg13[%c37, %c0_58] : memref<64x256xf32, #tpu.memory_space<vmem>>, vector<1x256xf32>
    tpu.vector_store %arg13[%c37, %c0_58], %122 {strides = array<i32>} : memref<64x256xf32, #tpu.memory_space<vmem>>, vector<1x256xf32>,
    %124 = vector.extract_strided_slice %47 {offsets = [2, 1536], sizes = [1, 256], strides = [1, 1]} : vector<4x4096xf32> to vector<1x256xf32>
    %c38 = arith.constant 38 : index
    %c0_59 = arith.constant 0 : index
    %125 = vector.load %arg13[%c38, %c0_59] : memref<64x256xf32, #tpu.memory_space<vmem>>, vector<1x256xf32>
    tpu.vector_store %arg13[%c38, %c0_59], %124 {strides = array<i32>} : memref<64x256xf32, #tpu.memory_space<vmem>>, vector<1x256xf32>,
    %126 = vector.extract_strided_slice %47 {offsets = [2, 1792], sizes = [1, 256], strides = [1, 1]} : vector<4x4096xf32> to vector<1x256xf32>
    %c39 = arith.constant 39 : index
    %c0_60 = arith.constant 0 : index
    %127 = vector.load %arg13[%c39, %c0_60] : memref<64x256xf32, #tpu.memory_space<vmem>>, vector<1x256xf32>
    tpu.vector_store %arg13[%c39, %c0_60], %126 {strides = array<i32>} : memref<64x256xf32, #tpu.memory_space<vmem>>, vector<1x256xf32>,
    %128 = vector.extract_strided_slice %47 {offsets = [2, 2048], sizes = [1, 256], strides = [1, 1]} : vector<4x4096xf32> to vector<1x256xf32>
    %c40 = arith.constant 40 : index
    %c0_61 = arith.constant 0 : index
    %129 = vector.load %arg13[%c40, %c0_61] : memref<64x256xf32, #tpu.memory_space<vmem>>, vector<1x256xf32>
    tpu.vector_store %arg13[%c40, %c0_61], %128 {strides = array<i32>} : memref<64x256xf32, #tpu.memory_space<vmem>>, vector<1x256xf32>,
    %130 = vector.extract_strided_slice %47 {offsets = [2, 2304], sizes = [1, 256], strides = [1, 1]} : vector<4x4096xf32> to vector<1x256xf32>
    %c41 = arith.constant 41 : index
    %c0_62 = arith.constant 0 : index
    %131 = vector.load %arg13[%c41, %c0_62] : memref<64x256xf32, #tpu.memory_space<vmem>>, vector<1x256xf32>
    tpu.vector_store %arg13[%c41, %c0_62], %130 {strides = array<i32>} : memref<64x256xf32, #tpu.memory_space<vmem>>, vector<1x256xf32>,
    %132 = vector.extract_strided_slice %47 {offsets = [2, 2560], sizes = [1, 256], strides = [1, 1]} : vector<4x4096xf32> to vector<1x256xf32>
    %c42 = arith.constant 42 : index
    %c0_63 = arith.constant 0 : index
    %133 = vector.load %arg13[%c42, %c0_63] : memref<64x256xf32, #tpu.memory_space<vmem>>, vector<1x256xf32>
    tpu.vector_store %arg13[%c42, %c0_63], %132 {strides = array<i32>} : memref<64x256xf32, #tpu.memory_space<vmem>>, vector<1x256xf32>,
    %134 = vector.extract_strided_slice %47 {offsets = [2, 2816], sizes = [1, 256], strides = [1, 1]} : vector<4x4096xf32> to vector<1x256xf32>
    %c43 = arith.constant 43 : index
    %c0_64 = arith.constant 0 : index
    %135 = vector.load %arg13[%c43, %c0_64] : memref<64x256xf32, #tpu.memory_space<vmem>>, vector<1x256xf32>
    tpu.vector_store %arg13[%c43, %c0_64], %134 {strides = array<i32>} : memref<64x256xf32, #tpu.memory_space<vmem>>, vector<1x256xf32>,
    %136 = vector.extract_strided_slice %47 {offsets = [2, 3072], sizes = [1, 256], strides = [1, 1]} : vector<4x4096xf32> to vector<1x256xf32>
    %c44 = arith.constant 44 : index
    %c0_65 = arith.constant 0 : index
    %137 = vector.load %arg13[%c44, %c0_65] : memref<64x256xf32, #tpu.memory_space<vmem>>, vector<1x256xf32>
    tpu.vector_store %arg13[%c44, %c0_65], %136 {strides = array<i32>} : memref<64x256xf32, #tpu.memory_space<vmem>>, vector<1x256xf32>,
    %138 = vector.extract_strided_slice %47 {offsets = [2, 3328], sizes = [1, 256], strides = [1, 1]} : vector<4x4096xf32> to vector<1x256xf32>
    %c45 = arith.constant 45 : index
    %c0_66 = arith.constant 0 : index
    %139 = vector.load %arg13[%c45, %c0_66] : memref<64x256xf32, #tpu.memory_space<vmem>>, vector<1x256xf32>
    tpu.vector_store %arg13[%c45, %c0_66], %138 {strides = array<i32>} : memref<64x256xf32, #tpu.memory_space<vmem>>, vector<1x256xf32>,
    %140 = vector.extract_strided_slice %47 {offsets = [2, 3584], sizes = [1, 256], strides = [1, 1]} : vector<4x4096xf32> to vector<1x256xf32>
    %c46 = arith.constant 46 : index
    %c0_67 = arith.constant 0 : index
    %141 = vector.load %arg13[%c46, %c0_67] : memref<64x256xf32, #tpu.memory_space<vmem>>, vector<1x256xf32>
    tpu.vector_store %arg13[%c46, %c0_67], %140 {strides = array<i32>} : memref<64x256xf32, #tpu.memory_space<vmem>>, vector<1x256xf32>,
    %142 = vector.extract_strided_slice %47 {offsets = [2, 3840], sizes = [1, 256], strides = [1, 1]} : vector<4x4096xf32> to vector<1x256xf32>
    %c47 = arith.constant 47 : index
    %c0_68 = arith.constant 0 : index
    %143 = vector.load %arg13[%c47, %c0_68] : memref<64x256xf32, #tpu.memory_space<vmem>>, vector<1x256xf32>
    tpu.vector_store %arg13[%c47, %c0_68], %142 {strides = array<i32>} : memref<64x256xf32, #tpu.memory_space<vmem>>, vector<1x256xf32>,
    %144 = vector.extract_strided_slice %47 {offsets = [3, 0], sizes = [1, 256], strides = [1, 1]} : vector<4x4096xf32> to vector<1x256xf32>
    %c48 = arith.constant 48 : index
    %c0_69 = arith.constant 0 : index
    %145 = vector.load %arg13[%c48, %c0_69] : memref<64x256xf32, #tpu.memory_space<vmem>>, vector<1x256xf32>
    tpu.vector_store %arg13[%c48, %c0_69], %144 {strides = array<i32>} : memref<64x256xf32, #tpu.memory_space<vmem>>, vector<1x256xf32>,
    %146 = vector.extract_strided_slice %47 {offsets = [3, 256], sizes = [1, 256], strides = [1, 1]} : vector<4x4096xf32> to vector<1x256xf32>
    %c49 = arith.constant 49 : index
    %c0_70 = arith.constant 0 : index
    %147 = vector.load %arg13[%c49, %c0_70] : memref<64x256xf32, #tpu.memory_space<vmem>>, vector<1x256xf32>
    tpu.vector_store %arg13[%c49, %c0_70], %146 {strides = array<i32>} : memref<64x256xf32, #tpu.memory_space<vmem>>, vector<1x256xf32>,
    %148 = vector.extract_strided_slice %47 {offsets = [3, 512], sizes = [1, 256], strides = [1, 1]} : vector<4x4096xf32> to vector<1x256xf32>
    %c50 = arith.constant 50 : index
    %c0_71 = arith.constant 0 : index
    %149 = vector.load %arg13[%c50, %c0_71] : memref<64x256xf32, #tpu.memory_space<vmem>>, vector<1x256xf32>
    tpu.vector_store %arg13[%c50, %c0_71], %148 {strides = array<i32>} : memref<64x256xf32, #tpu.memory_space<vmem>>, vector<1x256xf32>,
    %150 = vector.extract_strided_slice %47 {offsets = [3, 768], sizes = [1, 256], strides = [1, 1]} : vector<4x4096xf32> to vector<1x256xf32>
    %c51 = arith.constant 51 : index
    %c0_72 = arith.constant 0 : index
    %151 = vector.load %arg13[%c51, %c0_72] : memref<64x256xf32, #tpu.memory_space<vmem>>, vector<1x256xf32>
    tpu.vector_store %arg13[%c51, %c0_72], %150 {strides = array<i32>} : memref<64x256xf32, #tpu.memory_space<vmem>>, vector<1x256xf32>,
    %152 = vector.extract_strided_slice %47 {offsets = [3, 1024], sizes = [1, 256], strides = [1, 1]} : vector<4x4096xf32> to vector<1x256xf32>
    %c52 = arith.constant 52 : index
    %c0_73 = arith.constant 0 : index
    %153 = vector.load %arg13[%c52, %c0_73] : memref<64x256xf32, #tpu.memory_space<vmem>>, vector<1x256xf32>
    tpu.vector_store %arg13[%c52, %c0_73], %152 {strides = array<i32>} : memref<64x256xf32, #tpu.memory_space<vmem>>, vector<1x256xf32>,
    %154 = vector.extract_strided_slice %47 {offsets = [3, 1280], sizes = [1, 256], strides = [1, 1]} : vector<4x4096xf32> to vector<1x256xf32>
    %c53 = arith.constant 53 : index
    %c0_74 = arith.constant 0 : index
    %155 = vector.load %arg13[%c53, %c0_74] : memref<64x256xf32, #tpu.memory_space<vmem>>, vector<1x256xf32>
    tpu.vector_store %arg13[%c53, %c0_74], %154 {strides = array<i32>} : memref<64x256xf32, #tpu.memory_space<vmem>>, vector<1x256xf32>,
    %156 = vector.extract_strided_slice %47 {offsets = [3, 1536], sizes = [1, 256], strides = [1, 1]} : vector<4x4096xf32> to vector<1x256xf32>
    %c54 = arith.constant 54 : index
    %c0_75 = arith.constant 0 : index
    %157 = vector.load %arg13[%c54, %c0_75] : memref<64x256xf32, #tpu.memory_space<vmem>>, vector<1x256xf32>
    tpu.vector_store %arg13[%c54, %c0_75], %156 {strides = array<i32>} : memref<64x256xf32, #tpu.memory_space<vmem>>, vector<1x256xf32>,
    %158 = vector.extract_strided_slice %47 {offsets = [3, 1792], sizes = [1, 256], strides = [1, 1]} : vector<4x4096xf32> to vector<1x256xf32>
    %c55 = arith.constant 55 : index
    %c0_76 = arith.constant 0 : index
    %159 = vector.load %arg13[%c55, %c0_76] : memref<64x256xf32, #tpu.memory_space<vmem>>, vector<1x256xf32>
    tpu.vector_store %arg13[%c55, %c0_76], %158 {strides = array<i32>} : memref<64x256xf32, #tpu.memory_space<vmem>>, vector<1x256xf32>,
    %160 = vector.extract_strided_slice %47 {offsets = [3, 2048], sizes = [1, 256], strides = [1, 1]} : vector<4x4096xf32> to vector<1x256xf32>
    %c56 = arith.constant 56 : index
    %c0_77 = arith.constant 0 : index
    %161 = vector.load %arg13[%c56, %c0_77] : memref<64x256xf32, #tpu.memory_space<vmem>>, vector<1x256xf32>
    tpu.vector_store %arg13[%c56, %c0_77], %160 {strides = array<i32>} : memref<64x256xf32, #tpu.memory_space<vmem>>, vector<1x256xf32>,
    %162 = vector.extract_strided_slice %47 {offsets = [3, 2304], sizes = [1, 256], strides = [1, 1]} : vector<4x4096xf32> to vector<1x256xf32>
    %c57 = arith.constant 57 : index
    %c0_78 = arith.constant 0 : index
    %163 = vector.load %arg13[%c57, %c0_78] : memref<64x256xf32, #tpu.memory_space<vmem>>, vector<1x256xf32>
    tpu.vector_store %arg13[%c57, %c0_78], %162 {strides = array<i32>} : memref<64x256xf32, #tpu.memory_space<vmem>>, vector<1x256xf32>,
    %164 = vector.extract_strided_slice %47 {offsets = [3, 2560], sizes = [1, 256], strides = [1, 1]} : vector<4x4096xf32> to vector<1x256xf32>
    %c58 = arith.constant 58 : index
    %c0_79 = arith.constant 0 : index
    %165 = vector.load %arg13[%c58, %c0_79] : memref<64x256xf32, #tpu.memory_space<vmem>>, vector<1x256xf32>
    tpu.vector_store %arg13[%c58, %c0_79], %164 {strides = array<i32>} : memref<64x256xf32, #tpu.memory_space<vmem>>, vector<1x256xf32>,
    %166 = vector.extract_strided_slice %47 {offsets = [3, 2816], sizes = [1, 256], strides = [1, 1]} : vector<4x4096xf32> to vector<1x256xf32>
    %c59 = arith.constant 59 : index
    %c0_80 = arith.constant 0 : index
    %167 = vector.load %arg13[%c59, %c0_80] : memref<64x256xf32, #tpu.memory_space<vmem>>, vector<1x256xf32>
    tpu.vector_store %arg13[%c59, %c0_80], %166 {strides = array<i32>} : memref<64x256xf32, #tpu.memory_space<vmem>>, vector<1x256xf32>,
    %168 = vector.extract_strided_slice %47 {offsets = [3, 3072], sizes = [1, 256], strides = [1, 1]} : vector<4x4096xf32> to vector<1x256xf32>
    %c60 = arith.constant 60 : index
    %c0_81 = arith.constant 0 : index
    %169 = vector.load %arg13[%c60, %c0_81] : memref<64x256xf32, #tpu.memory_space<vmem>>, vector<1x256xf32>
    tpu.vector_store %arg13[%c60, %c0_81], %168 {strides = array<i32>} : memref<64x256xf32, #tpu.memory_space<vmem>>, vector<1x256xf32>,
    %170 = vector.extract_strided_slice %47 {offsets = [3, 3328], sizes = [1, 256], strides = [1, 1]} : vector<4x4096xf32> to vector<1x256xf32>
    %c61 = arith.constant 61 : index
    %c0_82 = arith.constant 0 : index
    %171 = vector.load %arg13[%c61, %c0_82] : memref<64x256xf32, #tpu.memory_space<vmem>>, vector<1x256xf32>
    tpu.vector_store %arg13[%c61, %c0_82], %170 {strides = array<i32>} : memref<64x256xf32, #tpu.memory_space<vmem>>, vector<1x256xf32>,
    %172 = vector.extract_strided_slice %47 {offsets = [3, 3584], sizes = [1, 256], strides = [1, 1]} : vector<4x4096xf32> to vector<1x256xf32>
    %c62 = arith.constant 62 : index
    %c0_83 = arith.constant 0 : index
    %173 = vector.load %arg13[%c62, %c0_83] : memref<64x256xf32, #tpu.memory_space<vmem>>, vector<1x256xf32>
    tpu.vector_store %arg13[%c62, %c0_83], %172 {strides = array<i32>} : memref<64x256xf32, #tpu.memory_space<vmem>>, vector<1x256xf32>,
    %174 = vector.extract_strided_slice %47 {offsets = [3, 3840], sizes = [1, 256], strides = [1, 1]} : vector<4x4096xf32> to vector<1x256xf32>
    %c63 = arith.constant 63 : index
    %c0_84 = arith.constant 0 : index
    %175 = vector.load %arg13[%c63, %c0_84] : memref<64x256xf32, #tpu.memory_space<vmem>>, vector<1x256xf32>
    tpu.vector_store %arg13[%c63, %c0_84], %174 {strides = array<i32>} : memref<64x256xf32, #tpu.memory_space<vmem>>, vector<1x256xf32>,
    %c0_85 = arith.constant 0 : index
    %c0_86 = arith.constant 0 : index
    %176 = vector.load %arg13[%c0_85, %c0_86] : memref<64x256xf32, #tpu.memory_space<vmem>>, vector<16x256xf32>
    %177 = vector.extract_strided_slice %28 {offsets = [0, 0], sizes = [16, 1], strides = [1, 1]} : vector<16x2xf32> to vector<16x1xf32>
    %178 = vector.broadcast %177 : vector<16x1xf32> to vector<16x256xf32>
    %179 = arith.addf %176, %178 : vector<16x256xf32>
    %c0_87 = arith.constant 0 : index
    %c0_88 = arith.constant 0 : index
    %180 = vector.load %arg7[%c0_87, %c0_88] : memref<16x1xf32, #tpu.memory_space<vmem>>, vector<16x1xf32>
    %181 = vector.broadcast %180 : vector<16x1xf32> to vector<16x256xf32>
    %182 = arith.addf %179, %181 : vector<16x256xf32>
    %c16_89 = arith.constant 16 : index
    %c0_90 = arith.constant 0 : index
    %183 = vector.load %arg13[%c16_89, %c0_90] : memref<64x256xf32, #tpu.memory_space<vmem>>, vector<16x256xf32>
    %184 = vector.extract_strided_slice %28 {offsets = [0, 1], sizes = [16, 1], strides = [1, 1]} : vector<16x2xf32> to vector<16x1xf32>
    %185 = vector.broadcast %184 : vector<16x1xf32> to vector<16x256xf32>
    %186 = arith.addf %183, %185 : vector<16x256xf32>
    %c0_91 = arith.constant 0 : index
    %c0_92 = arith.constant 0 : index
    %187 = vector.load %arg7[%c0_91, %c0_92] : memref<16x1xf32, #tpu.memory_space<vmem>>, vector<16x1xf32>
    %188 = vector.broadcast %187 : vector<16x1xf32> to vector<16x256xf32>
    %189 = arith.addf %186, %188 : vector<16x256xf32>
    %190 = vector.extract_strided_slice %13 {offsets = [0, 0], sizes = [16, 256], strides = [1, 1]} : vector<64x512xf32> to vector<16x256xf32>
    %191 = arith.mulf %190, %182 : vector<16x256xf32>
    %cst_93 = arith.constant dense<0.000000e+00> : vector<256xf32>
    %192 = vector.multi_reduction <add>, %191, %cst_93 [0] : vector<16x256xf32> to vector<256xf32>
    %193 = vector.shape_cast %192 : vector<256xf32> to vector<1x256xf32>
    %194 = arith.mulf %190, %189 : vector<16x256xf32>
    %cst_94 = arith.constant dense<0.000000e+00> : vector<256xf32>
    %195 = vector.multi_reduction <add>, %194, %cst_94 [0] : vector<16x256xf32> to vector<256xf32>
    %196 = vector.shape_cast %195 : vector<256xf32> to vector<1x256xf32>
    %197 = vector.extract_strided_slice %13 {offsets = [16, 0], sizes = [16, 256], strides = [1, 1]} : vector<64x512xf32> to vector<16x256xf32>
    %198 = arith.mulf %197, %182 : vector<16x256xf32>
    %cst_95 = arith.constant dense<0.000000e+00> : vector<256xf32>
    %199 = vector.multi_reduction <add>, %198, %cst_95 [0] : vector<16x256xf32> to vector<256xf32>
    %200 = vector.shape_cast %199 : vector<256xf32> to vector<1x256xf32>
    %201 = arith.mulf %197, %189 : vector<16x256xf32>
    %cst_96 = arith.constant dense<0.000000e+00> : vector<256xf32>
    %202 = vector.multi_reduction <add>, %201, %cst_96 [0] : vector<16x256xf32> to vector<256xf32>
    %203 = vector.shape_cast %202 : vector<256xf32> to vector<1x256xf32>
    %204 = vector.extract_strided_slice %13 {offsets = [32, 0], sizes = [16, 256], strides = [1, 1]} : vector<64x512xf32> to vector<16x256xf32>
    %205 = arith.mulf %204, %182 : vector<16x256xf32>
    %cst_97 = arith.constant dense<0.000000e+00> : vector<256xf32>
    %206 = vector.multi_reduction <add>, %205, %cst_97 [0] : vector<16x256xf32> to vector<256xf32>
    %207 = vector.shape_cast %206 : vector<256xf32> to vector<1x256xf32>
    %208 = arith.mulf %204, %189 : vector<16x256xf32>
    %cst_98 = arith.constant dense<0.000000e+00> : vector<256xf32>
    %209 = vector.multi_reduction <add>, %208, %cst_98 [0] : vector<16x256xf32> to vector<256xf32>
    %210 = vector.shape_cast %209 : vector<256xf32> to vector<1x256xf32>
    %211 = vector.extract_strided_slice %13 {offsets = [48, 0], sizes = [16, 256], strides = [1, 1]} : vector<64x512xf32> to vector<16x256xf32>
    %212 = arith.mulf %211, %182 : vector<16x256xf32>
    %cst_99 = arith.constant dense<0.000000e+00> : vector<256xf32>
    %213 = vector.multi_reduction <add>, %212, %cst_99 [0] : vector<16x256xf32> to vector<256xf32>
    %214 = vector.shape_cast %213 : vector<256xf32> to vector<1x256xf32>
    %215 = arith.mulf %211, %189 : vector<16x256xf32>
    %cst_100 = arith.constant dense<0.000000e+00> : vector<256xf32>
    %216 = vector.multi_reduction <add>, %215, %cst_100 [0] : vector<16x256xf32> to vector<256xf32>
    %217 = vector.shape_cast %216 : vector<256xf32> to vector<1x256xf32>
    %218 = tpu.concatenate %193, %196, %200, %203, %207, %210, %214, %217 in 0 : vector<1x256xf32>, vector<1x256xf32>, vector<1x256xf32>, vector<1x256xf32>, vector<1x256xf32>, vector<1x256xf32>, vector<1x256xf32>, vector<1x256xf32> -> vector<8x256xf32>
    %c32_101 = arith.constant 32 : index
    %c0_102 = arith.constant 0 : index
    %219 = vector.load %arg13[%c32_101, %c0_102] : memref<64x256xf32, #tpu.memory_space<vmem>>, vector<16x256xf32>
    %220 = vector.extract_strided_slice %41 {offsets = [0, 0], sizes = [16, 1], strides = [1, 1]} : vector<16x2xf32> to vector<16x1xf32>
    %221 = vector.broadcast %220 : vector<16x1xf32> to vector<16x256xf32>
    %222 = arith.addf %219, %221 : vector<16x256xf32>
    %c0_103 = arith.constant 0 : index
    %c0_104 = arith.constant 0 : index
    %223 = vector.load %arg7[%c0_103, %c0_104] : memref<16x1xf32, #tpu.memory_space<vmem>>, vector<16x1xf32>
    %224 = vector.broadcast %223 : vector<16x1xf32> to vector<16x256xf32>
    %225 = arith.addf %222, %224 : vector<16x256xf32>
    %c48_105 = arith.constant 48 : index
    %c0_106 = arith.constant 0 : index
    %226 = vector.load %arg13[%c48_105, %c0_106] : memref<64x256xf32, #tpu.memory_space<vmem>>, vector<16x256xf32>
    %227 = vector.extract_strided_slice %41 {offsets = [0, 1], sizes = [16, 1], strides = [1, 1]} : vector<16x2xf32> to vector<16x1xf32>
    %228 = vector.broadcast %227 : vector<16x1xf32> to vector<16x256xf32>
    %229 = arith.addf %226, %228 : vector<16x256xf32>
    %c0_107 = arith.constant 0 : index
    %c0_108 = arith.constant 0 : index
    %230 = vector.load %arg7[%c0_107, %c0_108] : memref<16x1xf32, #tpu.memory_space<vmem>>, vector<16x1xf32>
    %231 = vector.broadcast %230 : vector<16x1xf32> to vector<16x256xf32>
    %232 = arith.addf %229, %231 : vector<16x256xf32>
    %233 = vector.extract_strided_slice %13 {offsets = [0, 256], sizes = [16, 256], strides = [1, 1]} : vector<64x512xf32> to vector<16x256xf32>
    %234 = arith.mulf %233, %225 : vector<16x256xf32>
    %cst_109 = arith.constant dense<0.000000e+00> : vector<256xf32>
    %235 = vector.multi_reduction <add>, %234, %cst_109 [0] : vector<16x256xf32> to vector<256xf32>
    %236 = vector.shape_cast %235 : vector<256xf32> to vector<1x256xf32>
    %237 = arith.mulf %233, %232 : vector<16x256xf32>
    %cst_110 = arith.constant dense<0.000000e+00> : vector<256xf32>
    %238 = vector.multi_reduction <add>, %237, %cst_110 [0] : vector<16x256xf32> to vector<256xf32>
    %239 = vector.shape_cast %238 : vector<256xf32> to vector<1x256xf32>
    %240 = vector.extract_strided_slice %13 {offsets = [16, 256], sizes = [16, 256], strides = [1, 1]} : vector<64x512xf32> to vector<16x256xf32>
    %241 = arith.mulf %240, %225 : vector<16x256xf32>
    %cst_111 = arith.constant dense<0.000000e+00> : vector<256xf32>
    %242 = vector.multi_reduction <add>, %241, %cst_111 [0] : vector<16x256xf32> to vector<256xf32>
    %243 = vector.shape_cast %242 : vector<256xf32> to vector<1x256xf32>
    %244 = arith.mulf %240, %232 : vector<16x256xf32>
    %cst_112 = arith.constant dense<0.000000e+00> : vector<256xf32>
    %245 = vector.multi_reduction <add>, %244, %cst_112 [0] : vector<16x256xf32> to vector<256xf32>
    %246 = vector.shape_cast %245 : vector<256xf32> to vector<1x256xf32>
    %247 = vector.extract_strided_slice %13 {offsets = [32, 256], sizes = [16, 256], strides = [1, 1]} : vector<64x512xf32> to vector<16x256xf32>
    %248 = arith.mulf %247, %225 : vector<16x256xf32>
    %cst_113 = arith.constant dense<0.000000e+00> : vector<256xf32>
    %249 = vector.multi_reduction <add>, %248, %cst_113 [0] : vector<16x256xf32> to vector<256xf32>
    %250 = vector.shape_cast %249 : vector<256xf32> to vector<1x256xf32>
    %251 = arith.mulf %247, %232 : vector<16x256xf32>
    %cst_114 = arith.constant dense<0.000000e+00> : vector<256xf32>
    %252 = vector.multi_reduction <add>, %251, %cst_114 [0] : vector<16x256xf32> to vector<256xf32>
    %253 = vector.shape_cast %252 : vector<256xf32> to vector<1x256xf32>
    %254 = vector.extract_strided_slice %13 {offsets = [48, 256], sizes = [16, 256], strides = [1, 1]} : vector<64x512xf32> to vector<16x256xf32>
    %255 = arith.mulf %254, %225 : vector<16x256xf32>
    %cst_115 = arith.constant dense<0.000000e+00> : vector<256xf32>
    %256 = vector.multi_reduction <add>, %255, %cst_115 [0] : vector<16x256xf32> to vector<256xf32>
    %257 = vector.shape_cast %256 : vector<256xf32> to vector<1x256xf32>
    %258 = arith.mulf %254, %232 : vector<16x256xf32>
    %cst_116 = arith.constant dense<0.000000e+00> : vector<256xf32>
    %259 = vector.multi_reduction <add>, %258, %cst_116 [0] : vector<16x256xf32> to vector<256xf32>
    %260 = vector.shape_cast %259 : vector<256xf32> to vector<1x256xf32>
    %261 = tpu.concatenate %236, %239, %243, %246, %250, %253, %257, %260 in 0 : vector<1x256xf32>, vector<1x256xf32>, vector<1x256xf32>, vector<1x256xf32>, vector<1x256xf32>, vector<1x256xf32>, vector<1x256xf32>, vector<1x256xf32> -> vector<8x256xf32>
    %262 = tpu.concatenate %218, %261 in 1 : vector<8x256xf32>, vector<8x256xf32> -> vector<8x512xf32>
    %c0_117 = arith.constant 0 : index
    %c0_118 = arith.constant 0 : index
    %263 = vector.load %arg8[%c0_117, %c0_118] : memref<8x1xf32, #tpu.memory_space<vmem>>, vector<8x1xf32>
    %264 = vector.broadcast %263 : vector<8x1xf32> to vector<8x512xf32>
    %265 = arith.mulf %262, %264 : vector<8x512xf32>
    %c0_119 = arith.constant 0 : index
    %c0_120 = arith.constant 0 : index
    %266 = vector.load %arg9[%c0_119, %c0_120] : memref<8x1xf32, #tpu.memory_space<vmem>>, vector<8x1xf32>
    %267 = vector.broadcast %266 : vector<8x1xf32> to vector<8x512xf32>
    %268 = arith.addf %265, %267 : vector<8x512xf32>
    %cst_121 = arith.constant 0.000000e+00 : f32
    %269 = vector.broadcast %cst_121 : f32 to vector<8x512xf32>
    %270 = arith.maximumf %268, %269 : vector<8x512xf32>
    %c0_122 = arith.constant 0 : index
    %c0_123 = arith.constant 0 : index
    %271 = vector.load %arg10[%c0_122, %c0_123] : memref<32x8xf32, #tpu.memory_space<vmem>>, vector<32x8xf32>
    %cst_124 = arith.constant dense<0.000000e+00> : vector<32x512xf32>
    %272 = tpu.matmul %271, %270, %cst_124 {dimension_numbers = #tpu.dot_dimension_numbers<[1], [0], [0], [1], [0, 0, 1, 1], [], []>} : vector<32x8xf32>, vector<8x512xf32>, vector<32x512xf32> -> vector<32x512xf32>
    %c0_125 = arith.constant 0 : index
    %c0_126 = arith.constant 0 : index
    %273 = vector.load %arg11[%c0_125, %c0_126] : memref<32x1xf32, #tpu.memory_space<vmem>>, vector<32x1xf32>
    %274 = vector.broadcast %273 : vector<32x1xf32> to vector<32x512xf32>
    %275 = arith.addf %272, %274 : vector<32x512xf32>
    %276 = arith.addf %275, %0 : vector<32x512xf32>
    %cst_127 = arith.constant 0.000000e+00 : f32
    %277 = vector.broadcast %cst_127 : f32 to vector<32x512xf32>
    %278 = arith.maximumf %276, %277 : vector<32x512xf32>
    %c0_128 = arith.constant 0 : index
    %c0_129 = arith.constant 0 : index
    %279 = vector.load %arg12[%c0_128, %c0_129] : memref<32x512xf32, #tpu.memory_space<vmem>>, vector<32x512xf32>
    tpu.vector_store %arg12[%c0_128, %c0_129], %278 {strides = array<i32>} : memref<32x512xf32, #tpu.memory_space<vmem>>, vector<32x512xf32>,
    return
  }
  func.func @transform_0(%arg0: i32) -> (i32, i32) {
    %c0_i32 = arith.constant 0 : i32
    %c0_i32_0 = arith.constant 0 : i32
    %c0_i32_1 = arith.constant 0 : i32
    return %c0_i32, %c0_i32_0 : i32, i32
  }
  func.func @transform_1(%arg0: i32) -> (i32, i32) {
    %c0_i32 = arith.constant 0 : i32
    %c0_i32_0 = arith.constant 0 : i32
    %c0_i32_1 = arith.constant 0 : i32
    return %c0_i32, %c0_i32_0 : i32, i32
  }
  func.func @transform_2(%arg0: i32) -> (i32, i32) {
    %c0_i32 = arith.constant 0 : i32
    %c0_i32_0 = arith.constant 0 : i32
    %c0_i32_1 = arith.constant 0 : i32
    return %c0_i32, %c0_i32_0 : i32, i32
  }
  func.func @transform_3(%arg0: i32) -> (i32, i32) {
    %c0_i32 = arith.constant 0 : i32
    %c0_i32_0 = arith.constant 0 : i32
    %c0_i32_1 = arith.constant 0 : i32
    return %c0_i32, %c0_i32_0 : i32, i32
  }
  func.func @transform_4(%arg0: i32) -> (i32, i32) {
    %c0_i32 = arith.constant 0 : i32
    %c0_i32_0 = arith.constant 0 : i32
    %c0_i32_1 = arith.constant 0 : i32
    return %c0_i32, %c0_i32_0 : i32, i32
  }
  func.func @transform_5(%arg0: i32) -> (i32, i32) {
    %c0_i32 = arith.constant 0 : i32
    %c0_i32_0 = arith.constant 0 : i32
    %c0_i32_1 = arith.constant 0 : i32
    return %c0_i32, %c0_i32_0 : i32, i32
  }
  func.func @transform_6(%arg0: i32) -> (i32, i32) {
    %c0_i32 = arith.constant 0 : i32
    %c0_i32_0 = arith.constant 0 : i32
    %c0_i32_1 = arith.constant 0 : i32
    return %c0_i32, %c0_i32_0 : i32, i32
  }
  func.func @transform_7(%arg0: i32) -> (i32, i32) {
    %c0_i32 = arith.constant 0 : i32
    %c0_i32_0 = arith.constant 0 : i32
    %c0_i32_1 = arith.constant 0 : i32
    return %c0_i32, %c0_i32_0 : i32, i32
  }
  func.func @transform_8(%arg0: i32) -> (i32, i32) {
    %c0_i32 = arith.constant 0 : i32
    %c0_i32_0 = arith.constant 0 : i32
    %c0_i32_1 = arith.constant 0 : i32
    return %c0_i32, %c0_i32_0 : i32, i32
  }
  func.func @transform_9(%arg0: i32) -> (i32, i32) {
    %c0_i32 = arith.constant 0 : i32
    %c0_i32_0 = arith.constant 0 : i32
    %c0_i32_1 = arith.constant 0 : i32
    return %c0_i32, %c0_i32_0 : i32, i32
  }
  func.func @transform_10(%arg0: i32) -> (i32, i32) {
    %c0_i32 = arith.constant 0 : i32
    %c0_i32_0 = arith.constant 0 : i32
    %c0_i32_1 = arith.constant 0 : i32
    return %c0_i32, %c0_i32_0 : i32, i32
  }
  func.func @transform_11(%arg0: i32) -> (i32, i32) {
    %c0_i32 = arith.constant 0 : i32
    %c0_i32_0 = arith.constant 0 : i32
    %c0_i32_1 = arith.constant 0 : i32
    return %c0_i32, %c0_i32_0 : i32, i32
  }
}

</mosaic_0001>

<llo_original>
// kernel: lambda_block_pallas.1
$region0: #{lambda_block_pallas.1}
  #allocation0 [shape = 'u32[]', space=smem, size = 0x4, offset = 0x4, fixed_abs, tag = 'smem constant byte address 0x4 - core index']
  #allocation1 [shape = 'u32[144,128]{1,0:T(1,128)}', space=vmem, size = 0x12000, scoped, tag = 'internal scratch']
  #allocation2 [shape = 'f32[64,256]{1,0:T(8,128)}', space=vmem, size = 0x10000, scoped, tag = 'scratch operand']
  %s0 = inlined_call_operand.vmem [shape: f32[32,512], index: 0, kind: input, shape index: {}]
  %s1 = inlined_call_operand.hbm [shape: f32[8,32], index: 1, kind: input, shape index: {}]
  %s2 = inlined_call_operand.vmem [shape: f32[8,1], index: 2, kind: input, shape index: {}]
  %s3 = inlined_call_operand.vmem [shape: f32[82,8], index: 3, kind: input, shape index: {}]
  %s4 = inlined_call_operand.vmem [shape: f32[82,1], index: 4, kind: input, shape index: {}]
  %s5 = inlined_call_operand.hbm [shape: bf16[256,4096], index: 5, kind: input, shape index: {}]
  %s6 = inlined_call_operand.vmem [shape: f32[16,1], index: 6, kind: input, shape index: {}]
  %s7 = inlined_call_operand.vmem [shape: f32[8,1], index: 7, kind: input, shape index: {}]
  %s8 = inlined_call_operand.vmem [shape: f32[8,1], index: 8, kind: input, shape index: {}]
  %s9 = inlined_call_operand.vmem [shape: f32[32,8], index: 9, kind: input, shape index: {}]
  %s10 = inlined_call_operand.vmem [shape: f32[32,1], index: 10, kind: input, shape index: {}]
  %s11 = inlined_call_operand.vmem [shape: f32[32,512], index: 11, kind: output, shape index: {}]
  %s12 = sld [smem:[#allocation0]]
  $region62: #{lambda_block_pallas.1} parent=0
    _
  %s14 = ssub.s32 1, %s12
  %s15 = scalar_select 0, %s14, %s12
  $region1: #{lambda_block_pallas.1} parent=0
    #allocation3 [shape = 'u8[4096]{0}', space=vmem, size = 0x1000, scoped, tag = 'input window, operand 1, single buffered']
    #allocation4 [shape = 's32[1]{0}', space=sflag, size = 0x4, scoped, tag = 'scoped memory for lambda_block_pallas.1']
    #allocation5 [shape = 'u8[2097152]{0}', space=vmem, size = 0x200000, scoped, tag = 'input window, operand 5, single buffered']
    #allocation6 [shape = 's32[1]{0}', space=sflag, size = 0x4, scoped, tag = 'scoped memory for lambda_block_pallas.1']
    %16 = vsyncpa [#allocation4], 0
    %17 = vsyncpa [#allocation6], 0
    // Predicated region
    $region2: #{lambda_block_pallas.1} parent=1 // pred_check
      _
    $region3: #{lambda_block_pallas.1} parent=1 // pred_check_branch
      %19 = sbr.rel (0) target = $region5
    $region4: #{lambda_block_pallas.1} parent=1 // pred_region
      _
    $region5: #{lambda_block_pallas.1} parent=1 // pred_fallthru
      _
    // Predicated region
    $region6: #{lambda_block_pallas.1} parent=1 // pred_check
      _
    $region7: #{lambda_block_pallas.1} parent=1 // pred_check_branch
      %21 = sbr.rel (0) target = $region9
    $region8: #{lambda_block_pallas.1} parent=1 // pred_region
      %s23 = ssub.s32 128, 128
      %24 = vsyncadd [#allocation4], %s23
      %s26 = sshll.u32 [#allocation3], 4
      %s27 = int_to_ptr.vmem [resolvable:$true] %s26
      %29 = dma.hbm_to_vmem [thread:$0]  %s1, 128, %s27, [#allocation4]
    $region9: #{lambda_block_pallas.1} parent=1 // pred_fallthru
      _
    // Predicated region
    $region10: #{lambda_block_pallas.1} parent=1 // pred_check
      _
    $region11: #{lambda_block_pallas.1} parent=1 // pred_check_branch
      %31 = sbr.rel (0) target = $region13
    $region12: #{lambda_block_pallas.1} parent=1 // pred_region
      _
    $region13: #{lambda_block_pallas.1} parent=1 // pred_fallthru
      _
    // Predicated region
    $region14: #{lambda_block_pallas.1} parent=1 // pred_check
      _
    $region15: #{lambda_block_pallas.1} parent=1 // pred_check_branch
      %33 = sbr.rel (0) target = $region17
    $region16: #{lambda_block_pallas.1} parent=1 // pred_region
      _
    $region17: #{lambda_block_pallas.1} parent=1 // pred_fallthru
      _
    // Predicated region
    $region18: #{lambda_block_pallas.1} parent=1 // pred_check
      _
    $region19: #{lambda_block_pallas.1} parent=1 // pred_check_branch
      %35 = sbr.rel (0) target = $region21
    $region20: #{lambda_block_pallas.1} parent=1 // pred_region
      _
    $region21: #{lambda_block_pallas.1} parent=1 // pred_fallthru
      _
    // Predicated region
    $region22: #{lambda_block_pallas.1} parent=1 // pred_check
      _
    $region23: #{lambda_block_pallas.1} parent=1 // pred_check_branch
      %37 = sbr.rel (0) target = $region25
    $region24: #{lambda_block_pallas.1} parent=1 // pred_region
      %s39 = ssub.s32 65536, 65536
      %40 = vsyncadd [#allocation6], %s39
      %s41 = sshll.u32 [#allocation5], 4
      %s42 = int_to_ptr.vmem [resolvable:$true] %s41
      %47 = dma.hbm_to_vmem [thread:$0]  %s5, 65536, %s42, [#allocation6], 2048, 2048, 128
    $region25: #{lambda_block_pallas.1} parent=1 // pred_fallthru
      _
    // Predicated region
    $region26: #{lambda_block_pallas.1} parent=1 // pred_check
      _
    $region27: #{lambda_block_pallas.1} parent=1 // pred_check_branch
      %49 = sbr.rel (0) target = $region29
    $region28: #{lambda_block_pallas.1} parent=1 // pred_region
      _
    $region29: #{lambda_block_pallas.1} parent=1 // pred_fallthru
      _
    // Predicated region
    $region30: #{lambda_block_pallas.1} parent=1 // pred_check
      _
    $region31: #{lambda_block_pallas.1} parent=1 // pred_check_branch
      %51 = sbr.rel (0) target = $region33
    $region32: #{lambda_block_pallas.1} parent=1 // pred_region
      _
    $region33: #{lambda_block_pallas.1} parent=1 // pred_fallthru
      _
    // Predicated region
    $region34: #{lambda_block_pallas.1} parent=1 // pred_check
      _
    $region35: #{lambda_block_pallas.1} parent=1 // pred_check_branch
      %53 = sbr.rel (0) target = $region37
    $region36: #{lambda_block_pallas.1} parent=1 // pred_region
      _
    $region37: #{lambda_block_pallas.1} parent=1 // pred_fallthru
      _
    // Predicated region
    $region38: #{lambda_block_pallas.1} parent=1 // pred_check
      _
    $region39: #{lambda_block_pallas.1} parent=1 // pred_check_branch
      %55 = sbr.rel (0) target = $region41
    $region40: #{lambda_block_pallas.1} parent=1 // pred_region
      _
    $region41: #{lambda_block_pallas.1} parent=1 // pred_fallthru
      _
    // Predicated region
    $region42: #{lambda_block_pallas.1} parent=1 // pred_check
      _
    $region43: #{lambda_block_pallas.1} parent=1 // pred_check_branch
      %57 = sbr.rel (0) target = $region45
    $region44: #{lambda_block_pallas.1} parent=1 // pred_region
      _
    $region45: #{lambda_block_pallas.1} parent=1 // pred_fallthru
      _
    // Predicated region
    $region46: #{lambda_block_pallas.1} parent=1 // pred_check
      _
    $region47: #{lambda_block_pallas.1} parent=1 // pred_check_branch
      %59 = sbr.rel (0) target = $region49
    $region48: #{lambda_block_pallas.1} parent=1 // pred_region
      %60 = dma.done [#allocation4], 128
    $region49: #{lambda_block_pallas.1} parent=1 // pred_fallthru
      _
    // Predicated region
    $region50: #{lambda_block_pallas.1} parent=1 // pred_check
      _
    $region51: #{lambda_block_pallas.1} parent=1 // pred_check_branch
      %62 = sbr.rel (0) target = $region53
    $region52: #{lambda_block_pallas.1} parent=1 // pred_region
      %63 = dma.done [#allocation6], 65536
    $region53: #{lambda_block_pallas.1} parent=1 // pred_fallthru
      _
    %v64 = vld [vmem:[%s0] sm:$0xff]
    %v65 = vld [vmem:[%s0 + $0x8] sm:$0xff]
    %v66 = vld [vmem:[%s0 + $0x10] sm:$0xff]
    %v67 = vld [vmem:[%s0 + $0x18] sm:$0xff]
    %v68 = vld [vmem:[%s0 + $0x20] sm:$0xff]
    %v69 = vld [vmem:[%s0 + $0x28] sm:$0xff]
    %v70 = vld [vmem:[%s0 + $0x30] sm:$0xff]
    %v71 = vld [vmem:[%s0 + $0x38] sm:$0xff]
    %v72 = vld [vmem:[%s0 + $0x40] sm:$0xff]
    %v73 = vld [vmem:[%s0 + $0x48] sm:$0xff]
    %v74 = vld [vmem:[%s0 + $0x50] sm:$0xff]
    %v75 = vld [vmem:[%s0 + $0x58] sm:$0xff]
    %v76 = vld [vmem:[%s0 + $0x60] sm:$0xff]
    %v77 = vld [vmem:[%s0 + $0x68] sm:$0xff]
    %v78 = vld [vmem:[%s0 + $0x70] sm:$0xff]
    %v79 = vld [vmem:[%s0 + $0x78] sm:$0xff]
    %v80 = vld [vmem:[#allocation3] sm:$0xff]
    %v81 = vld [vmem:[%s2] sm:$0xff]
    %83 = vset.pattern.permute.xlu0 0
    %84 = vperm.xlu0 %83, %v81
    %v85 = vpop.permute.xlu0 %84
    %vm87 = vcmask 261120
    %v89 = vsel %vm87, %v80, 0
    %91 = vmatprep.subr.mxu0 %v65
    %92 = vmatpush1.msra.mxu0 %v64
    %93 = vmatprep.subr.mxu0 %v69
    %94 = vmatpush1.msra.mxu0 %v68
    %95 = vmatprep.subr.mxu0 %v73
    %96 = vmatpush1.msra.mxu0 %v72
    %97 = vmatprep.subr.mxu0 %v77
    %98 = vmatpush1.msra.mxu0 %v76
    %99 = vmatprep.subr.mxu0 0.0
    %100 = vmatpush1.msra.mxu0 0.0
    %101 = vmatprep.subr.mxu0 0.0
    %102 = vmatpush1.msra.mxu0 0.0
    %103 = vmatprep.subr.mxu0 0.0
    %104 = vmatpush1.msra.mxu0 0.0
    %105 = vmatprep.subr.mxu0 0.0
    %106 = vmatpush1.msra.mxu0 0.0
    %107 = vmatprep.subr.mxu0 0.0
    %108 = vmatpush1.msra.mxu0 0.0
    %109 = vmatprep.subr.mxu0 0.0
    %110 = vmatpush1.msra.mxu0 0.0
    %111 = vmatprep.subr.mxu0 0.0
    %112 = vmatpush1.msra.mxu0 0.0
    %113 = vmatprep.subr.mxu0 0.0
    %114 = vmatpush1.msra.mxu0 0.0
    %115 = vmatprep.subr.mxu0 0.0
    %116 = vmatpush1.msra.mxu0 0.0
    %117 = vmatprep.subr.mxu0 0.0
    %118 = vmatpush1.msra.mxu0 0.0
    %119 = vmatprep.subr.mxu0 0.0
    %120 = vmatpush1.msra.mxu0 0.0
    %121 = vmatprep.subr.mxu0 0.0
    %122 = vmatpush1.msra.mxu0 0.0
    %123 = vmatprep.subr.mxu0 0.0
    %124 = vmatpush1.msra.mxu0 0.0
    %125 = vmatprep.subr.mxu0 0.0
    %126 = vmatpush1.msra.mxu0 0.0
    %127 = vmatprep.subr.mxu0 0.0
    %128 = vmatpush1.msra.mxu0 0.0
    %129 = vmatprep.subr.mxu0 0.0
    %130 = vmatpush1.msra.mxu0 0.0
    %131 = vmatprep.subr.mxu0 0.0
    %132 = vmatpush1.msra.mxu0 0.0
    %133 = vmatprep.subr.mxu0 0.0
    %134 = vmatpush1.msra.mxu0 0.0
    %135 = vmatprep.subr.mxu0 0.0
    %136 = vmatpush1.msra.mxu0 0.0
    %137 = vmatprep.subr.mxu0 0.0
    %138 = vmatpush1.msra.mxu0 0.0
    %139 = vmatprep.subr.mxu0 0.0
    %140 = vmatpush1.msra.mxu0 0.0
    %141 = vmatprep.subr.mxu0 0.0
    %142 = vmatpush1.msra.mxu0 0.0
    %143 = vmatprep.subr.mxu0 0.0
    %144 = vmatpush1.msra.mxu0 0.0
    %145 = vmatprep.subr.mxu0 0.0
    %146 = vmatpush1.msra.mxu0 0.0
    %147 = vmatprep.subr.mxu0 0.0
    %148 = vmatpush1.msra.mxu0 0.0
    %149 = vmatprep.subr.mxu0 0.0
    %150 = vmatpush1.msra.mxu0 0.0
    %151 = vmatprep.subr.mxu0 0.0
    %152 = vmatpush1.msra.mxu0 0.0
    %153 = vmatprep.subr.mxu0 0.0
    %154 = vmatpush1.msra.mxu0 0.0
    %155 = vmatprep.mubr.f32.mxu0 0.0
    %156 = vmatmul.mubr.f32.gmra.mrb[0].mxu0 %v89
    %v157 = vpop.f32.mrb[0].mxu0
    %v158 = vadd.f32 %v85, %v157
    %v159 = vpop.f32.mrb[0].mxu0
    %v160 = vadd.f32 %v85, %v159
    %161 = vdwg.mxu0
    %162 = vmatprep.subr.mxu0 %v67
    %163 = vmatpush1.msra.mxu0 %v66
    %164 = vmatprep.subr.mxu0 %v71
    %165 = vmatpush1.msra.mxu0 %v70
    %166 = vmatprep.subr.mxu0 %v75
    %167 = vmatpush1.msra.mxu0 %v74
    %168 = vmatprep.subr.mxu0 %v79
    %169 = vmatpush1.msra.mxu0 %v78
    %170 = vmatprep.subr.mxu0 0.0
    %171 = vmatpush1.msra.mxu0 0.0
    %172 = vmatprep.subr.mxu0 0.0
    %173 = vmatpush1.msra.mxu0 0.0
    %174 = vmatprep.subr.mxu0 0.0
    %175 = vmatpush1.msra.mxu0 0.0
    %176 = vmatprep.subr.mxu0 0.0
    %177 = vmatpush1.msra.mxu0 0.0
    %178 = vmatprep.subr.mxu0 0.0
    %179 = vmatpush1.msra.mxu0 0.0
    %180 = vmatprep.subr.mxu0 0.0
    %181 = vmatpush1.msra.mxu0 0.0
    %182 = vmatprep.subr.mxu0 0.0
    %183 = vmatpush1.msra.mxu0 0.0
    %184 = vmatprep.subr.mxu0 0.0
    %185 = vmatpush1.msra.mxu0 0.0
    %186 = vmatprep.subr.mxu0 0.0
    %187 = vmatpush1.msra.mxu0 0.0
    %188 = vmatprep.subr.mxu0 0.0
    %189 = vmatpush1.msra.mxu0 0.0
    %190 = vmatprep.subr.mxu0 0.0
    %191 = vmatpush1.msra.mxu0 0.0
    %192 = vmatprep.subr.mxu0 0.0
    %193 = vmatpush1.msra.mxu0 0.0
    %194 = vmatprep.subr.mxu0 0.0
    %195 = vmatpush1.msra.mxu0 0.0
    %196 = vmatprep.subr.mxu0 0.0
    %197 = vmatpush1.msra.mxu0 0.0
    %198 = vmatprep.subr.mxu0 0.0
    %199 = vmatpush1.msra.mxu0 0.0
    %200 = vmatprep.subr.mxu0 0.0
    %201 = vmatpush1.msra.mxu0 0.0
    %202 = vmatprep.subr.mxu0 0.0
    %203 = vmatpush1.msra.mxu0 0.0
    %204 = vmatprep.subr.mxu0 0.0
    %205 = vmatpush1.msra.mxu0 0.0
    %206 = vmatprep.subr.mxu0 0.0
    %207 = vmatpush1.msra.mxu0 0.0
    %208 = vmatprep.subr.mxu0 0.0
    %209 = vmatpush1.msra.mxu0 0.0
    %210 = vmatprep.subr.mxu0 0.0
    %211 = vmatpush1.msra.mxu0 0.0
    %212 = vmatprep.subr.mxu0 0.0
    %213 = vmatpush1.msra.mxu0 0.0
    %214 = vmatprep.subr.mxu0 0.0
    %215 = vmatpush1.msra.mxu0 0.0
    %216 = vmatprep.subr.mxu0 0.0
    %217 = vmatpush1.msra.mxu0 0.0
    %218 = vmatprep.subr.mxu0 0.0
    %219 = vmatpush1.msra.mxu0 0.0
    %220 = vmatprep.subr.mxu0 0.0
    %221 = vmatpush1.msra.mxu0 0.0
    %222 = vmatprep.subr.mxu0 0.0
    %223 = vmatpush1.msra.mxu0 0.0
    %224 = vmatprep.subr.mxu0 0.0
    %225 = vmatpush1.msra.mxu0 0.0
    %226 = vmatprep.mubr.f32.mxu0 0.0
    %227 = vmatmul.mubr.f32.gmra.mrb[0].mxu0 %v89
    %v228 = vpop.f32.mrb[0].mxu0
    %v229 = vadd.f32 %v85, %v228
    %v230 = vpop.f32.mrb[0].mxu0
    %v231 = vadd.f32 %v85, %v230
    %232 = vdwg.mxu0
    %v233 = vmax.f32 %v158, 0.0
    %v234 = vmax.f32 %v160, 0.0
    %v235 = vmax.f32 %v229, 0.0
    %v236 = vmax.f32 %v231, 0.0
    %v237 = vld [vmem:[%s3] sm:$0xff]
    %v238 = vld [vmem:[%s3 + $0x8] sm:$0xff]
    %v239 = vld [vmem:[%s3 + $0x10] sm:$0xff]
    %v240 = vld [vmem:[%s3 + $0x18] sm:$0xff]
    %v241 = vld [vmem:[%s3 + $0x20] sm:$0xff]
    %v242 = vld [vmem:[%s3 + $0x28] sm:$0xff]
    %v243 = vld [vmem:[%s3 + $0x30] sm:$0xff]
    %v244 = vld [vmem:[%s3 + $0x38] sm:$0xff]
    %v245 = vld [vmem:[%s3 + $0x40] sm:$0xff]
    %v246 = vld [vmem:[%s3 + $0x48] sm:$0xff]
    %v247 = vld [vmem:[%s3 + $0x50] sm:$0x3]
    %v248 = vld [vmem:[%s4] sm:$0xff]
    %v249 = vld [vmem:[%s4 + $0x8] sm:$0xff]
    %v250 = vld [vmem:[%s4 + $0x10] sm:$0xff]
    %v251 = vld [vmem:[%s4 + $0x18] sm:$0xff]
    %v252 = vld [vmem:[%s4 + $0x20] sm:$0xff]
    %v253 = vld [vmem:[%s4 + $0x28] sm:$0xff]
    %v254 = vld [vmem:[%s4 + $0x30] sm:$0xff]
    %v255 = vld [vmem:[%s4 + $0x38] sm:$0xff]
    %v256 = vld [vmem:[%s4 + $0x40] sm:$0xff]
    %v257 = vld [vmem:[%s4 + $0x48] sm:$0xff]
    %v258 = vld [vmem:[%s4 + $0x50] sm:$0x3]
    %260 = vset.pattern.permute.xlu0 0
    %261 = vperm.xlu0 %260, %v248
    %v262 = vpop.permute.xlu0 %261
    %265 = vset.pattern.permute.xlu0 0
    %266 = vperm.xlu0 %265, %v249
    %v267 = vpop.permute.xlu0 %266
    %270 = vset.pattern.permute.xlu0 0
    %271 = vperm.xlu0 %270, %v250
    %v272 = vpop.permute.xlu0 %271
    %275 = vset.pattern.permute.xlu0 0
    %276 = vperm.xlu0 %275, %v251
    %v277 = vpop.permute.xlu0 %276
    %280 = vset.pattern.permute.xlu0 0
    %281 = vperm.xlu0 %280, %v252
    %v282 = vpop.permute.xlu0 %281
    %285 = vset.pattern.permute.xlu0 0
    %286 = vperm.xlu0 %285, %v253
    %v287 = vpop.permute.xlu0 %286
    %290 = vset.pattern.permute.xlu0 0
    %291 = vperm.xlu0 %290, %v254
    %v292 = vpop.permute.xlu0 %291
    %295 = vset.pattern.permute.xlu0 0
    %296 = vperm.xlu0 %295, %v255
    %v297 = vpop.permute.xlu0 %296
    %300 = vset.pattern.permute.xlu0 0
    %301 = vperm.xlu0 %300, %v256
    %v302 = vpop.permute.xlu0 %301
    %305 = vset.pattern.permute.xlu0 0
    %306 = vperm.xlu0 %305, %v257
    %v307 = vpop.permute.xlu0 %306
    %310 = vset.pattern.permute.xlu0 0
    %311 = vperm.xlu0 %310, %v258
    %v312 = vpop.permute.xlu0 %311
    %vm314 = vcmask 64512
    %v316 = vsel %vm314, %v237, 0
    %v319 = vsel %vm314, %v238, 0
    %v322 = vsel %vm314, %v239, 0
    %v325 = vsel %vm314, %v240, 0
    %v328 = vsel %vm314, %v241, 0
    %v331 = vsel %vm314, %v242, 0
    %v334 = vsel %vm314, %v243, 0
    %v337 = vsel %vm314, %v244, 0
    %v340 = vsel %vm314, %v245, 0
    %v343 = vsel %vm314, %v246, 0
    %v346 = vsel %vm314, %v247, 0
    %348 = vmatprep.subr.mxu0 %v234
    %349 = vmatpush1.msra.mxu0 %v233
    %350 = vmatprep.subr.mxu0 0.0
    %351 = vmatpush1.msra.mxu0 0.0
    %352 = vmatprep.subr.mxu0 0.0
    %353 = vmatpush1.msra.mxu0 0.0
    %354 = vmatprep.subr.mxu0 0.0
    %355 = vmatpush1.msra.mxu0 0.0
    %356 = vmatprep.subr.mxu0 0.0
    %357 = vmatpush1.msra.mxu0 0.0
    %358 = vmatprep.subr.mxu0 0.0
    %359 = vmatpush1.msra.mxu0 0.0
    %360 = vmatprep.subr.mxu0 0.0
    %361 = vmatpush1.msra.mxu0 0.0
    %362 = vmatprep.subr.mxu0 0.0
    %363 = vmatpush1.msra.mxu0 0.0
    %364 = vmatprep.subr.mxu0 0.0
    %365 = vmatpush1.msra.mxu0 0.0
    %366 = vmatprep.subr.mxu0 0.0
    %367 = vmatpush1.msra.mxu0 0.0
    %368 = vmatprep.subr.mxu0 0.0
    %369 = vmatpush1.msra.mxu0 0.0
    %370 = vmatprep.subr.mxu0 0.0
    %371 = vmatpush1.msra.mxu0 0.0
    %372 = vmatprep.subr.mxu0 0.0
    %373 = vmatpush1.msra.mxu0 0.0
    %374 = vmatprep.subr.mxu0 0.0
    %375 = vmatpush1.msra.mxu0 0.0
    %376 = vmatprep.subr.mxu0 0.0
    %377 = vmatpush1.msra.mxu0 0.0
    %378 = vmatprep.subr.mxu0 0.0
    %379 = vmatpush1.msra.mxu0 0.0
    %380 = vmatprep.subr.mxu0 0.0
    %381 = vmatpush1.msra.mxu0 0.0
    %382 = vmatprep.subr.mxu0 0.0
    %383 = vmatpush1.msra.mxu0 0.0
    %384 = vmatprep.subr.mxu0 0.0
    %385 = vmatpush1.msra.mxu0 0.0
    %386 = vmatprep.subr.mxu0 0.0
    %387 = vmatpush1.msra.mxu0 0.0
    %388 = vmatprep.subr.mxu0 0.0
    %389 = vmatpush1.msra.mxu0 0.0
    %390 = vmatprep.subr.mxu0 0.0
    %391 = vmatpush1.msra.mxu0 0.0
    %392 = vmatprep.subr.mxu0 0.0
    %393 = vmatpush1.msra.mxu0 0.0
    %394 = vmatprep.subr.mxu0 0.0
    %395 = vmatpush1.msra.mxu0 0.0
    %396 = vmatprep.subr.mxu0 0.0
    %397 = vmatpush1.msra.mxu0 0.0
    %398 = vmatprep.subr.mxu0 0.0
    %399 = vmatpush1.msra.mxu0 0.0
    %400 = vmatprep.subr.mxu0 0.0
    %401 = vmatpush1.msra.mxu0 0.0
    %402 = vmatprep.subr.mxu0 0.0
    %403 = vmatpush1.msra.mxu0 0.0
    %404 = vmatprep.subr.mxu0 0.0
    %405 = vmatpush1.msra.mxu0 0.0
    %406 = vmatprep.subr.mxu0 0.0
    %407 = vmatpush1.msra.mxu0 0.0
    %408 = vmatprep.subr.mxu0 0.0
    %409 = vmatpush1.msra.mxu0 0.0
    %410 = vmatprep.subr.mxu0 0.0
    %411 = vmatpush1.msra.mxu0 0.0
    %412 = vmatprep.mubr.f32.mxu0 0.0
    %413 = vmatmul.mubr.f32.gmra.mrb[0].mxu0 %v316
    %v414 = vpop.f32.mrb[0].mxu0
    %v415 = vadd.f32 %v262, %v414
    %v416 = vpop.f32.mrb[0].mxu0
    %v417 = vadd.f32 %v262, %v416
    %418 = vmatprep.mubr.f32.mxu0 0.0
    %419 = vmatmul.mubr.f32.gmra.mrb[0].mxu0 %v319
    %v420 = vpop.f32.mrb[0].mxu0
    %v421 = vadd.f32 %v267, %v420
    %v422 = vpop.f32.mrb[0].mxu0
    %v423 = vadd.f32 %v267, %v422
    %424 = vmatprep.mubr.f32.mxu0 0.0
    %425 = vmatmul.mubr.f32.gmra.mrb[0].mxu0 %v322
    %v426 = vpop.f32.mrb[0].mxu0
    %v427 = vadd.f32 %v272, %v426
    %v428 = vpop.f32.mrb[0].mxu0
    %v429 = vadd.f32 %v272, %v428
    %430 = vmatprep.mubr.f32.mxu0 0.0
    %431 = vmatmul.mubr.f32.gmra.mrb[0].mxu0 %v325
    %v432 = vpop.f32.mrb[0].mxu0
    %v433 = vadd.f32 %v277, %v432
    %v434 = vpop.f32.mrb[0].mxu0
    %v435 = vadd.f32 %v277, %v434
    %436 = vmatprep.mubr.f32.mxu0 0.0
    %437 = vmatmul.mubr.f32.gmra.mrb[0].mxu0 %v328
    %v438 = vpop.f32.mrb[0].mxu0
    %v439 = vadd.f32 %v282, %v438
    %v440 = vpop.f32.mrb[0].mxu0
    %v441 = vadd.f32 %v282, %v440
    %442 = vmatprep.mubr.f32.mxu0 0.0
    %443 = vmatmul.mubr.f32.gmra.mrb[0].mxu0 %v331
    %v444 = vpop.f32.mrb[0].mxu0
    %v445 = vadd.f32 %v287, %v444
    %v446 = vpop.f32.mrb[0].mxu0
    %v447 = vadd.f32 %v287, %v446
    %448 = vmatprep.mubr.f32.mxu0 0.0
    %449 = vmatmul.mubr.f32.gmra.mrb[0].mxu0 %v334
    %v450 = vpop.f32.mrb[0].mxu0
    %v451 = vadd.f32 %v292, %v450
    %v452 = vpop.f32.mrb[0].mxu0
    %v453 = vadd.f32 %v292, %v452
    %454 = vmatprep.mubr.f32.mxu0 0.0
    %455 = vmatmul.mubr.f32.gmra.mrb[0].mxu0 %v337
    %v456 = vpop.f32.mrb[0].mxu0
    %v457 = vadd.f32 %v297, %v456
    %v458 = vpop.f32.mrb[0].mxu0
    %v459 = vadd.f32 %v297, %v458
    %460 = vmatprep.mubr.f32.mxu0 0.0
    %461 = vmatmul.mubr.f32.gmra.mrb[0].mxu0 %v340
    %v462 = vpop.f32.mrb[0].mxu0
    %v463 = vadd.f32 %v302, %v462
    %v464 = vpop.f32.mrb[0].mxu0
    %v465 = vadd.f32 %v302, %v464
    %466 = vmatprep.mubr.f32.mxu0 0.0
    %467 = vmatmul.mubr.f32.gmra.mrb[0].mxu0 %v343
    %v468 = vpop.f32.mrb[0].mxu0
    %v469 = vadd.f32 %v307, %v468
    %v470 = vpop.f32.mrb[0].mxu0
    %v471 = vadd.f32 %v307, %v470
    %472 = vmatprep.mubr.f32.mxu0 0.0
    %473 = vmatmul.mubr.f32.gmra.mrb[0].mxu0 %v346
    %v474 = vpop.f32.mrb[0].mxu0
    %v475 = vadd.f32 %v312, %v474
    %v476 = vpop.f32.mrb[0].mxu0
    %v477 = vadd.f32 %v312, %v476
    %478 = vdwg.mxu0
    %479 = vmatprep.subr.mxu0 %v236
    %480 = vmatpush1.msra.mxu0 %v235
    %481 = vmatprep.subr.mxu0 0.0
    %482 = vmatpush1.msra.mxu0 0.0
    %483 = vmatprep.subr.mxu0 0.0
    %484 = vmatpush1.msra.mxu0 0.0
    %485 = vmatprep.subr.mxu0 0.0
    %486 = vmatpush1.msra.mxu0 0.0
    %487 = vmatprep.subr.mxu0 0.0
    %488 = vmatpush1.msra.mxu0 0.0
    %489 = vmatprep.subr.mxu0 0.0
    %490 = vmatpush1.msra.mxu0 0.0
    %491 = vmatprep.subr.mxu0 0.0
    %492 = vmatpush1.msra.mxu0 0.0
    %493 = vmatprep.subr.mxu0 0.0
    %494 = vmatpush1.msra.mxu0 0.0
    %495 = vmatprep.subr.mxu0 0.0
    %496 = vmatpush1.msra.mxu0 0.0
    %497 = vmatprep.subr.mxu0 0.0
    %498 = vmatpush1.msra.mxu0 0.0
    %499 = vmatprep.subr.mxu0 0.0
    %500 = vmatpush1.msra.mxu0 0.0
    %501 = vmatprep.subr.mxu0 0.0
    %502 = vmatpush1.msra.mxu0 0.0
    %503 = vmatprep.subr.mxu0 0.0
    %504 = vmatpush1.msra.mxu0 0.0
    %505 = vmatprep.subr.mxu0 0.0
    %506 = vmatpush1.msra.mxu0 0.0
    %507 = vmatprep.subr.mxu0 0.0
    %508 = vmatpush1.msra.mxu0 0.0
    %509 = vmatprep.subr.mxu0 0.0
    %510 = vmatpush1.msra.mxu0 0.0
    %511 = vmatprep.subr.mxu0 0.0
    %512 = vmatpush1.msra.mxu0 0.0
    %513 = vmatprep.subr.mxu0 0.0
    %514 = vmatpush1.msra.mxu0 0.0
    %515 = vmatprep.subr.mxu0 0.0
    %516 = vmatpush1.msra.mxu0 0.0
    %517 = vmatprep.subr.mxu0 0.0
    %518 = vmatpush1.msra.mxu0 0.0
    %519 = vmatprep.subr.mxu0 0.0
    %520 = vmatpush1.msra.mxu0 0.0
    %521 = vmatprep.subr.mxu0 0.0
    %522 = vmatpush1.msra.mxu0 0.0
    %523 = vmatprep.subr.mxu0 0.0
    %524 = vmatpush1.msra.mxu0 0.0
    %525 = vmatprep.subr.mxu0 0.0
    %526 = vmatpush1.msra.mxu0 0.0
    %527 = vmatprep.subr.mxu0 0.0
    %528 = vmatpush1.msra.mxu0 0.0
    %529 = vmatprep.subr.mxu0 0.0
    %530 = vmatpush1.msra.mxu0 0.0
    %531 = vmatprep.subr.mxu0 0.0
    %532 = vmatpush1.msra.mxu0 0.0
    %533 = vmatprep.subr.mxu0 0.0
    %534 = vmatpush1.msra.mxu0 0.0
    %535 = vmatprep.subr.mxu0 0.0
    %536 = vmatpush1.msra.mxu0 0.0
    %537 = vmatprep.subr.mxu0 0.0
    %538 = vmatpush1.msra.mxu0 0.0
    %539 = vmatprep.subr.mxu0 0.0
    %540 = vmatpush1.msra.mxu0 0.0
    %541 = vmatprep.subr.mxu0 0.0
    %542 = vmatpush1.msra.mxu0 0.0
    %543 = vmatprep.mubr.f32.mxu0 0.0
    %544 = vmatmul.mubr.f32.gmra.mrb[0].mxu0 %v316
    %v545 = vpop.f32.mrb[0].mxu0
    %v546 = vadd.f32 %v262, %v545
    %v547 = vpop.f32.mrb[0].mxu0
    %v548 = vadd.f32 %v262, %v547
    %549 = vmatprep.mubr.f32.mxu0 0.0
    %550 = vmatmul.mubr.f32.gmra.mrb[0].mxu0 %v319
    %v551 = vpop.f32.mrb[0].mxu0
    %v552 = vadd.f32 %v267, %v551
    %v553 = vpop.f32.mrb[0].mxu0
    %v554 = vadd.f32 %v267, %v553
    %555 = vmatprep.mubr.f32.mxu0 0.0
    %556 = vmatmul.mubr.f32.gmra.mrb[0].mxu0 %v322
    %v557 = vpop.f32.mrb[0].mxu0
    %v558 = vadd.f32 %v272, %v557
    %v559 = vpop.f32.mrb[0].mxu0
    %v560 = vadd.f32 %v272, %v559
    %561 = vmatprep.mubr.f32.mxu0 0.0
    %562 = vmatmul.mubr.f32.gmra.mrb[0].mxu0 %v325
    %v563 = vpop.f32.mrb[0].mxu0
    %v564 = vadd.f32 %v277, %v563
    %v565 = vpop.f32.mrb[0].mxu0
    %v566 = vadd.f32 %v277, %v565
    %567 = vmatprep.mubr.f32.mxu0 0.0
    %568 = vmatmul.mubr.f32.gmra.mrb[0].mxu0 %v328
    %v569 = vpop.f32.mrb[0].mxu0
    %v570 = vadd.f32 %v282, %v569
    %v571 = vpop.f32.mrb[0].mxu0
    %v572 = vadd.f32 %v282, %v571
    %573 = vmatprep.mubr.f32.mxu0 0.0
    %574 = vmatmul.mubr.f32.gmra.mrb[0].mxu0 %v331
    %v575 = vpop.f32.mrb[0].mxu0
    %v576 = vadd.f32 %v287, %v575
    %v577 = vpop.f32.mrb[0].mxu0
    %v578 = vadd.f32 %v287, %v577
    %579 = vmatprep.mubr.f32.mxu0 0.0
    %580 = vmatmul.mubr.f32.gmra.mrb[0].mxu0 %v334
    %v581 = vpop.f32.mrb[0].mxu0
    %v582 = vadd.f32 %v292, %v581
    %v583 = vpop.f32.mrb[0].mxu0
    %v584 = vadd.f32 %v292, %v583
    %585 = vmatprep.mubr.f32.mxu0 0.0
    %586 = vmatmul.mubr.f32.gmra.mrb[0].mxu0 %v337
    %v587 = vpop.f32.mrb[0].mxu0
    %v588 = vadd.f32 %v297, %v587
    %v589 = vpop.f32.mrb[0].mxu0
    %v590 = vadd.f32 %v297, %v589
    %591 = vmatprep.mubr.f32.mxu0 0.0
    %592 = vmatmul.mubr.f32.gmra.mrb[0].mxu0 %v340
    %v593 = vpop.f32.mrb[0].mxu0
    %v594 = vadd.f32 %v302, %v593
    %v595 = vpop.f32.mrb[0].mxu0
    %v596 = vadd.f32 %v302, %v595
    %597 = vmatprep.mubr.f32.mxu0 0.0
    %598 = vmatmul.mubr.f32.gmra.mrb[0].mxu0 %v343
    %v599 = vpop.f32.mrb[0].mxu0
    %v600 = vadd.f32 %v307, %v599
    %v601 = vpop.f32.mrb[0].mxu0
    %v602 = vadd.f32 %v307, %v601
    %603 = vmatprep.mubr.f32.mxu0 0.0
    %604 = vmatmul.mubr.f32.gmra.mrb[0].mxu0 %v346
    %v605 = vpop.f32.mrb[0].mxu0
    %v606 = vadd.f32 %v312, %v605
    %v607 = vpop.f32.mrb[0].mxu0
    %v608 = vadd.f32 %v312, %v607
    %609 = vdwg.mxu0
    %v610 = vmax.f32 %v463, %v465
    %611 = vmax.xlane.f32.xlu0 %v610
    %v612 = vpop.xlane.xlu0 %611
    %v613 = vmax.f32 %v469, %v471
    %614 = vmax.xlane.f32.xlu0 %v613
    %v615 = vpop.xlane.xlu0 %614
    %v616 = vsub.f32 %v463, %v612
    %v617 = vsub.f32 %v465, %v612
    %v618 = vsub.f32 %v469, %v615
    %v619 = vsub.f32 %v471, %v615
    %v620 = vmul.f32 %v616, 1.442695
    %v621 = vpow.pop %v620
    %v622 = vmul.f32 %v617, 1.442695
    %v623 = vpow.pop %v622
    %v624 = vmul.f32 %v618, 1.442695
    %v625 = vpow.pop %v624
    %v626 = vmul.f32 %v619, 1.442695
    %v627 = vpow.pop %v626
    %v628 = vadd.f32 %v621, %v623
    %629 = vadd.xlane.f32.xlu0 %v628
    %v630 = vpop.xlane.xlu0 %629
    %v631 = vadd.f32 %v625, %v627
    %632 = vadd.xlane.f32.xlu0 %v631
    %v633 = vpop.xlane.xlu0 %632
    %v634 = vrcp.pop %v630
    %v635 = vrcp.pop %v633
    %v636 = vmul.f32 %v621, %v634
    %v637 = vmul.f32 %v623, %v634
    %v638 = vmul.f32 %v625, %v635
    %v639 = vmul.f32 %v627, %v635
    %640 = vmatprep.subr.mxu0 %v477
    %641 = vmatpush1.xpose.msra.mxu0 %v475
    %642 = vmatprep.subr.mxu0 0.0
    %643 = vmatpush1.xpose.msra.mxu0 0.0
    %644 = vmatprep.subr.mxu0 0.0
    %645 = vmatpush1.xpose.msra.mxu0 0.0
    %646 = vmatprep.subr.mxu0 0.0
    %647 = vmatpush1.xpose.msra.mxu0 0.0
    %648 = vmatprep.subr.mxu0 0.0
    %649 = vmatpush1.xpose.msra.mxu0 0.0
    %650 = vmatprep.subr.mxu0 0.0
    %651 = vmatpush1.xpose.msra.mxu0 0.0
    %652 = vmatprep.subr.mxu0 0.0
    %653 = vmatpush1.xpose.msra.mxu0 0.0
    %654 = vmatprep.subr.mxu0 0.0
    %655 = vmatpush1.xpose.msra.mxu0 0.0
    %656 = vmatprep.subr.mxu0 0.0
    %657 = vmatpush1.xpose.msra.mxu0 0.0
    %658 = vmatprep.subr.mxu0 0.0
    %659 = vmatpush1.xpose.msra.mxu0 0.0
    %660 = vmatprep.subr.mxu0 0.0
    %661 = vmatpush1.xpose.msra.mxu0 0.0
    %662 = vmatprep.subr.mxu0 0.0
    %663 = vmatpush1.xpose.msra.mxu0 0.0
    %664 = vmatprep.subr.mxu0 0.0
    %665 = vmatpush1.xpose.msra.mxu0 0.0
    %666 = vmatprep.subr.mxu0 0.0
    %667 = vmatpush1.xpose.msra.mxu0 0.0
    %668 = vmatprep.subr.mxu0 0.0
    %669 = vmatpush1.xpose.msra.mxu0 0.0
    %670 = vmatprep.subr.mxu0 0.0
    %671 = vmatpush1.xpose.msra.mxu0 0.0
    %672 = vmatprep.subr.mxu0 0.0
    %673 = vmatpush1.xpose.msra.mxu0 0.0
    %674 = vmatprep.subr.mxu0 0.0
    %675 = vmatpush1.xpose.msra.mxu0 0.0
    %676 = vmatprep.subr.mxu0 0.0
    %677 = vmatpush1.xpose.msra.mxu0 0.0
    %678 = vmatprep.subr.mxu0 0.0
    %679 = vmatpush1.xpose.msra.mxu0 0.0
    %680 = vmatprep.subr.mxu0 0.0
    %681 = vmatpush1.xpose.msra.mxu0 0.0
    %682 = vmatprep.subr.mxu0 0.0
    %683 = vmatpush1.xpose.msra.mxu0 0.0
    %684 = vmatprep.subr.mxu0 0.0
    %685 = vmatpush1.xpose.msra.mxu0 0.0
    %686 = vmatprep.subr.mxu0 0.0
    %687 = vmatpush1.xpose.msra.mxu0 0.0
    %688 = vmatprep.subr.mxu0 0.0
    %689 = vmatpush1.xpose.msra.mxu0 0.0
    %690 = vmatprep.subr.mxu0 0.0
    %691 = vmatpush1.xpose.msra.mxu0 0.0
    %692 = vmatprep.subr.mxu0 0.0
    %693 = vmatpush1.xpose.msra.mxu0 0.0
    %694 = vmatprep.subr.mxu0 0.0
    %695 = vmatpush1.xpose.msra.mxu0 0.0
    %696 = vmatprep.subr.mxu0 0.0
    %697 = vmatpush1.xpose.msra.mxu0 0.0
    %698 = vmatprep.subr.mxu0 0.0
    %699 = vmatpush1.xpose.msra.mxu0 0.0
    %700 = vmatprep.subr.mxu0 0.0
    %701 = vmatpush1.xpose.msra.mxu0 0.0
    %702 = vmatprep.subr.mxu0 0.0
    %703 = vmatpush1.xpose.msra.mxu0 0.0
    %704 = vmatprep.mubr.f32.mxu0 %v637
    %705 = vmatmul.mubr.f32.gmra.mrb[0].mxu0 %v636
    %v706 = vpop.f32.mrb[0].mxu0
    %v707 = vadd.f32 0.0, %v706
    %v708 = vpop.f32.mrb[0].mxu0
    %709 = vmatprep.mubr.f32.mxu0 %v639
    %710 = vmatmul.mubr.f32.gmra.mrb[0].mxu0 %v638
    %v711 = vpop.f32.mrb[0].mxu0
    %v712 = vadd.f32 0.0, %v711
    %v713 = vpop.f32.mrb[0].mxu0
    %714 = vdwg.mxu0
    %v715 = vmax.f32 %v594, %v596
    %716 = vmax.xlane.f32.xlu0 %v715
    %v717 = vpop.xlane.xlu0 %716
    %v718 = vmax.f32 %v600, %v602
    %719 = vmax.xlane.f32.xlu0 %v718
    %v720 = vpop.xlane.xlu0 %719
    %v721 = vsub.f32 %v594, %v717
    %v722 = vsub.f32 %v596, %v717
    %v723 = vsub.f32 %v600, %v720
    %v724 = vsub.f32 %v602, %v720
    %v725 = vmul.f32 %v721, 1.442695
    %v726 = vpow.pop %v725
    %v727 = vmul.f32 %v722, 1.442695
    %v728 = vpow.pop %v727
    %v729 = vmul.f32 %v723, 1.442695
    %v730 = vpow.pop %v729
    %v731 = vmul.f32 %v724, 1.442695
    %v732 = vpow.pop %v731
    %v733 = vadd.f32 %v726, %v728
    %734 = vadd.xlane.f32.xlu0 %v733
    %v735 = vpop.xlane.xlu0 %734
    %v736 = vadd.f32 %v730, %v732
    %737 = vadd.xlane.f32.xlu0 %v736
    %v738 = vpop.xlane.xlu0 %737
    %v739 = vrcp.pop %v735
    %v740 = vrcp.pop %v738
    %v741 = vmul.f32 %v726, %v739
    %v742 = vmul.f32 %v728, %v739
    %v743 = vmul.f32 %v730, %v740
    %v744 = vmul.f32 %v732, %v740
    %745 = vmatprep.subr.mxu0 %v608
    %746 = vmatpush1.xpose.msra.mxu0 %v606
    %747 = vmatprep.subr.mxu0 0.0
    %748 = vmatpush1.xpose.msra.mxu0 0.0
    %749 = vmatprep.subr.mxu0 0.0
    %750 = vmatpush1.xpose.msra.mxu0 0.0
    %751 = vmatprep.subr.mxu0 0.0
    %752 = vmatpush1.xpose.msra.mxu0 0.0
    %753 = vmatprep.subr.mxu0 0.0
    %754 = vmatpush1.xpose.msra.mxu0 0.0
    %755 = vmatprep.subr.mxu0 0.0
    %756 = vmatpush1.xpose.msra.mxu0 0.0
    %757 = vmatprep.subr.mxu0 0.0
    %758 = vmatpush1.xpose.msra.mxu0 0.0
    %759 = vmatprep.subr.mxu0 0.0
    %760 = vmatpush1.xpose.msra.mxu0 0.0
    %761 = vmatprep.subr.mxu0 0.0
    %762 = vmatpush1.xpose.msra.mxu0 0.0
    %763 = vmatprep.subr.mxu0 0.0
    %764 = vmatpush1.xpose.msra.mxu0 0.0
    %765 = vmatprep.subr.mxu0 0.0
    %766 = vmatpush1.xpose.msra.mxu0 0.0
    %767 = vmatprep.subr.mxu0 0.0
    %768 = vmatpush1.xpose.msra.mxu0 0.0
    %769 = vmatprep.subr.mxu0 0.0
    %770 = vmatpush1.xpose.msra.mxu0 0.0
    %771 = vmatprep.subr.mxu0 0.0
    %772 = vmatpush1.xpose.msra.mxu0 0.0
    %773 = vmatprep.subr.mxu0 0.0
    %774 = vmatpush1.xpose.msra.mxu0 0.0
    %775 = vmatprep.subr.mxu0 0.0
    %776 = vmatpush1.xpose.msra.mxu0 0.0
    %777 = vmatprep.subr.mxu0 0.0
    %778 = vmatpush1.xpose.msra.mxu0 0.0
    %779 = vmatprep.subr.mxu0 0.0
    %780 = vmatpush1.xpose.msra.mxu0 0.0
    %781 = vmatprep.subr.mxu0 0.0
    %782 = vmatpush1.xpose.msra.mxu0 0.0
    %783 = vmatprep.subr.mxu0 0.0
    %784 = vmatpush1.xpose.msra.mxu0 0.0
    %785 = vmatprep.subr.mxu0 0.0
    %786 = vmatpush1.xpose.msra.mxu0 0.0
    %787 = vmatprep.subr.mxu0 0.0
    %788 = vmatpush1.xpose.msra.mxu0 0.0
    %789 = vmatprep.subr.mxu0 0.0
    %790 = vmatpush1.xpose.msra.mxu0 0.0
    %791 = vmatprep.subr.mxu0 0.0
    %792 = vmatpush1.xpose.msra.mxu0 0.0
    %793 = vmatprep.subr.mxu0 0.0
    %794 = vmatpush1.xpose.msra.mxu0 0.0
    %795 = vmatprep.subr.mxu0 0.0
    %796 = vmatpush1.xpose.msra.mxu0 0.0
    %797 = vmatprep.subr.mxu0 0.0
    %798 = vmatpush1.xpose.msra.mxu0 0.0
    %799 = vmatprep.subr.mxu0 0.0
    %800 = vmatpush1.xpose.msra.mxu0 0.0
    %801 = vmatprep.subr.mxu0 0.0
    %802 = vmatpush1.xpose.msra.mxu0 0.0
    %803 = vmatprep.subr.mxu0 0.0
    %804 = vmatpush1.xpose.msra.mxu0 0.0
    %805 = vmatprep.subr.mxu0 0.0
    %806 = vmatpush1.xpose.msra.mxu0 0.0
    %807 = vmatprep.subr.mxu0 0.0
    %808 = vmatpush1.xpose.msra.mxu0 0.0
    %809 = vmatprep.mubr.f32.mxu0 %v742
    %810 = vmatmul.mubr.f32.gmra.mrb[0].mxu0 %v741
    %v811 = vpop.f32.mrb[0].mxu0
    %v812 = vadd.f32 0.0, %v811
    %v813 = vpop.f32.mrb[0].mxu0
    %814 = vmatprep.mubr.f32.mxu0 %v744
    %815 = vmatmul.mubr.f32.gmra.mrb[0].mxu0 %v743
    %v816 = vpop.f32.mrb[0].mxu0
    %v817 = vadd.f32 0.0, %v816
    %v818 = vpop.f32.mrb[0].mxu0
    %819 = vdwg.mxu0
    %v822 = vrot.slane %v606, 6
    %v823 = vrot.slane %v608, 6
    %vm826 = vcmask 1041408
    %v827 = vsel %vm826, %v475, %v822
    %v828 = vsel %vm826, %v477, %v823
    %v829 = vpack.c.bf16 %v827, %v827
    %v830 = vpack.c.bf16 %v828, %v828
    %v831 = vld [vmem:[#allocation5] sm:$0xff]
    %v832 = vld [vmem:[#allocation5 + $0x8] sm:$0xff]
    %v833 = vld [vmem:[#allocation5 + $0x10] sm:$0xff]
    %v834 = vld [vmem:[#allocation5 + $0x18] sm:$0xff]
    %v835 = vld [vmem:[#allocation5 + $0x20] sm:$0xff]
    %v836 = vld [vmem:[#allocation5 + $0x28] sm:$0xff]
    %v837 = vld [vmem:[#allocation5 + $0x30] sm:$0xff]
    %v838 = vld [vmem:[#allocation5 + $0x38] sm:$0xff]
    %v839 = vld [vmem:[#allocation5 + $0x40] sm:$0xff]
    %v840 = vld [vmem:[#allocation5 + $0x48] sm:$0xff]
    %v841 = vld [vmem:[#allocation5 + $0x50] sm:$0xff]
    %v842 = vld [vmem:[#allocation5 + $0x58] sm:$0xff]
    %v843 = vld [vmem:[#allocation5 + $0x60] sm:$0xff]
    %v844 = vld [vmem:[#allocation5 + $0x68] sm:$0xff]
    %v845 = vld [vmem:[#allocation5 + $0x70] sm:$0xff]
    %v846 = vld [vmem:[#allocation5 + $0x78] sm:$0xff]
    %v847 = vld [vmem:[#allocation5 + $0x80] sm:$0xff]
    %v848 = vld [vmem:[#allocation5 + $0x88] sm:$0xff]
    %v849 = vld [vmem:[#allocation5 + $0x90] sm:$0xff]
    %v850 = vld [vmem:[#allocation5 + $0x98] sm:$0xff]
    %v851 = vld [vmem:[#allocation5 + $0xa0] sm:$0xff]
    %v852 = vld [vmem:[#allocation5 + $0xa8] sm:$0xff]
    %v853 = vld [vmem:[#allocation5 + $0xb0] sm:$0xff]
    %v854 = vld [vmem:[#allocation5 + $0xb8] sm:$0xff]
    %v855 = vld [vmem:[#allocation5 + $0xc0] sm:$0xff]
    %v856 = vld [vmem:[#allocation5 + $0xc8] sm:$0xff]
    %v857 = vld [vmem:[#allocation5 + $0xd0] sm:$0xff]
    %v858 = vld [vmem:[#allocation5 + $0xd8] sm:$0xff]
    %v859 = vld [vmem:[#allocation5 + $0xe0] sm:$0xff]
    %v860 = vld [vmem:[#allocation5 + $0xe8] sm:$0xff]
    %v861 = vld [vmem:[#allocation5 + $0xf0] sm:$0xff]
    %v862 = vld [vmem:[#allocation5 + $0xf8] sm:$0xff]
    %v863 = vld [vmem:[#allocation5 + $0x100] sm:$0xff]
    %v864 = vld [vmem:[#allocation5 + $0x108] sm:$0xff]
    %v865 = vld [vmem:[#allocation5 + $0x110] sm:$0xff]
    %v866 = vld [vmem:[#allocation5 + $0x118] sm:$0xff]
    %v867 = vld [vmem:[#allocation5 + $0x120] sm:$0xff]
    %v868 = vld [vmem:[#allocation5 + $0x128] sm:$0xff]
    %v869 = vld [vmem:[#allocation5 + $0x130] sm:$0xff]
    %v870 = vld [vmem:[#allocation5 + $0x138] sm:$0xff]
    %v871 = vld [vmem:[#allocation5 + $0x140] sm:$0xff]
    %v872 = vld [vmem:[#allocation5 + $0x148] sm:$0xff]
    %v873 = vld [vmem:[#allocation5 + $0x150] sm:$0xff]
    %v874 = vld [vmem:[#allocation5 + $0x158] sm:$0xff]
    %v875 = vld [vmem:[#allocation5 + $0x160] sm:$0xff]
    %v876 = vld [vmem:[#allocation5 + $0x168] sm:$0xff]
    %v877 = vld [vmem:[#allocation5 + $0x170] sm:$0xff]
    %v878 = vld [vmem:[#allocation5 + $0x178] sm:$0xff]
    %v879 = vld [vmem:[#allocation5 + $0x180] sm:$0xff]
    %v880 = vld [vmem:[#allocation5 + $0x188] sm:$0xff]
    %v881 = vld [vmem:[#allocation5 + $0x190] sm:$0xff]
    %v882 = vld [vmem:[#allocation5 + $0x198] sm:$0xff]
    %v883 = vld [vmem:[#allocation5 + $0x1a0] sm:$0xff]
    %v884 = vld [vmem:[#allocation5 + $0x1a8] sm:$0xff]
    %v885 = vld [vmem:[#allocation5 + $0x1b0] sm:$0xff]
    %v886 = vld [vmem:[#allocation5 + $0x1b8] sm:$0xff]
    %v887 = vld [vmem:[#allocation5 + $0x1c0] sm:$0xff]
    %v888 = vld [vmem:[#allocation5 + $0x1c8] sm:$0xff]
    %v889 = vld [vmem:[#allocation5 + $0x1d0] sm:$0xff]
    %v890 = vld [vmem:[#allocation5 + $0x1d8] sm:$0xff]
    %v891 = vld [vmem:[#allocation5 + $0x1e0] sm:$0xff]
    %v892 = vld [vmem:[#allocation5 + $0x1e8] sm:$0xff]
    %v893 = vld [vmem:[#allocation5 + $0x1f0] sm:$0xff]
    %v894 = vld [vmem:[#allocation5 + $0x1f8] sm:$0xff]
    %v895 = vld [vmem:[#allocation5 + $0x200] sm:$0xff]
    %v896 = vld [vmem:[#allocation5 + $0x208] sm:$0xff]
    %v897 = vld [vmem:[#allocation5 + $0x210] sm:$0xff]
    %v898 = vld [vmem:[#allocation5 + $0x218] sm:$0xff]
    %v899 = vld [vmem:[#allocation5 + $0x220] sm:$0xff]
    %v900 = vld [vmem:[#allocation5 + $0x228] sm:$0xff]
    %v901 = vld [vmem:[#allocation5 + $0x230] sm:$0xff]
    %v902 = vld [vmem:[#allocation5 + $0x238] sm:$0xff]
    %v903 = vld [vmem:[#allocation5 + $0x240] sm:$0xff]
    %v904 = vld [vmem:[#allocation5 + $0x248] sm:$0xff]
    %v905 = vld [vmem:[#allocation5 + $0x250] sm:$0xff]
    %v906 = vld [vmem:[#allocation5 + $0x258] sm:$0xff]
    %v907 = vld [vmem:[#allocation5 + $0x260] sm:$0xff]
    %v908 = vld [vmem:[#allocation5 + $0x268] sm:$0xff]
    %v909 = vld [vmem:[#allocation5 + $0x270] sm:$0xff]
    %v910 = vld [vmem:[#allocation5 + $0x278] sm:$0xff]
    %v911 = vld [vmem:[#allocation5 + $0x280] sm:$0xff]
    %v912 = vld [vmem:[#allocation5 + $0x288] sm:$0xff]
    %v913 = vld [vmem:[#allocation5 + $0x290] sm:$0xff]
    %v914 = vld [vmem:[#allocation5 + $0x298] sm:$0xff]
    %v915 = vld [vmem:[#allocation5 + $0x2a0] sm:$0xff]
    %v916 = vld [vmem:[#allocation5 + $0x2a8] sm:$0xff]
    %v917 = vld [vmem:[#allocation5 + $0x2b0] sm:$0xff]
    %v918 = vld [vmem:[#allocation5 + $0x2b8] sm:$0xff]
    %v919 = vld [vmem:[#allocation5 + $0x2c0] sm:$0xff]
    %v920 = vld [vmem:[#allocation5 + $0x2c8] sm:$0xff]
    %v921 = vld [vmem:[#allocation5 + $0x2d0] sm:$0xff]
    %v922 = vld [vmem:[#allocation5 + $0x2d8] sm:$0xff]
    %v923 = vld [vmem:[#allocation5 + $0x2e0] sm:$0xff]
    %v924 = vld [vmem:[#allocation5 + $0x2e8] sm:$0xff]
    %v925 = vld [vmem:[#allocation5 + $0x2f0] sm:$0xff]
    %v926 = vld [vmem:[#allocation5 + $0x2f8] sm:$0xff]
    %v927 = vld [vmem:[#allocation5 + $0x300] sm:$0xff]
    %v928 = vld [vmem:[#allocation5 + $0x308] sm:$0xff]
    %v929 = vld [vmem:[#allocation5 + $0x310] sm:$0xff]
    %v930 = vld [vmem:[#allocation5 + $0x318] sm:$0xff]
    %v931 = vld [vmem:[#allocation5 + $0x320] sm:$0xff]
    %v932 = vld [vmem:[#allocation5 + $0x328] sm:$0xff]
    %v933 = vld [vmem:[#allocation5 + $0x330] sm:$0xff]
    %v934 = vld [vmem:[#allocation5 + $0x338] sm:$0xff]
    %v935 = vld [vmem:[#allocation5 + $0x340] sm:$0xff]
    %v936 = vld [vmem:[#allocation5 + $0x348] sm:$0xff]
    %v937 = vld [vmem:[#allocation5 + $0x350] sm:$0xff]
    %v938 = vld [vmem:[#allocation5 + $0x358] sm:$0xff]
    %v939 = vld [vmem:[#allocation5 + $0x360] sm:$0xff]
    %v940 = vld [vmem:[#allocation5 + $0x368] sm:$0xff]
    %v941 = vld [vmem:[#allocation5 + $0x370] sm:$0xff]
    %v942 = vld [vmem:[#allocation5 + $0x378] sm:$0xff]
    %v943 = vld [vmem:[#allocation5 + $0x380] sm:$0xff]
    %v944 = vld [vmem:[#allocation5 + $0x388] sm:$0xff]
    %v945 = vld [vmem:[#allocation5 + $0x390] sm:$0xff]
    %v946 = vld [vmem:[#allocation5 + $0x398] sm:$0xff]
    %v947 = vld [vmem:[#allocation5 + $0x3a0] sm:$0xff]
    %v948 = vld [vmem:[#allocation5 + $0x3a8] sm:$0xff]
    %v949 = vld [vmem:[#allocation5 + $0x3b0] sm:$0xff]
    %v950 = vld [vmem:[#allocation5 + $0x3b8] sm:$0xff]
    %v951 = vld [vmem:[#allocation5 + $0x3c0] sm:$0xff]
    %v952 = vld [vmem:[#allocation5 + $0x3c8] sm:$0xff]
    %v953 = vld [vmem:[#allocation5 + $0x3d0] sm:$0xff]
    %v954 = vld [vmem:[#allocation5 + $0x3d8] sm:$0xff]
    %v955 = vld [vmem:[#allocation5 + $0x3e0] sm:$0xff]
    %v956 = vld [vmem:[#allocation5 + $0x3e8] sm:$0xff]
    %v957 = vld [vmem:[#allocation5 + $0x3f0] sm:$0xff]
    %v958 = vld [vmem:[#allocation5 + $0x3f8] sm:$0xff]
    %v959 = vld [vmem:[#allocation5 + $0x400] sm:$0xff]
    %v960 = vld [vmem:[#allocation5 + $0x408] sm:$0xff]
    %v961 = vld [vmem:[#allocation5 + $0x410] sm:$0xff]
    %v962 = vld [vmem:[#allocation5 + $0x418] sm:$0xff]
    %v963 = vld [vmem:[#allocation5 + $0x420] sm:$0xff]
    %v964 = vld [vmem:[#allocation5 + $0x428] sm:$0xff]
    %v965 = vld [vmem:[#allocation5 + $0x430] sm:$0xff]
    %v966 = vld [vmem:[#allocation5 + $0x438] sm:$0xff]
    %v967 = vld [vmem:[#allocation5 + $0x440] sm:$0xff]
    %v968 = vld [vmem:[#allocation5 + $0x448] sm:$0xff]
    %v969 = vld [vmem:[#allocation5 + $0x450] sm:$0xff]
    %v970 = vld [vmem:[#allocation5 + $0x458] sm:$0xff]
    %v971 = vld [vmem:[#allocation5 + $0x460] sm:$0xff]
    %v972 = vld [vmem:[#allocation5 + $0x468] sm:$0xff]
    %v973 = vld [vmem:[#allocation5 + $0x470] sm:$0xff]
    %v974 = vld [vmem:[#allocation5 + $0x478] sm:$0xff]
    %v975 = vld [vmem:[#allocation5 + $0x480] sm:$0xff]
    %v976 = vld [vmem:[#allocation5 + $0x488] sm:$0xff]
    %v977 = vld [vmem:[#allocation5 + $0x490] sm:$0xff]
    %v978 = vld [vmem:[#allocation5 + $0x498] sm:$0xff]
    %v979 = vld [vmem:[#allocation5 + $0x4a0] sm:$0xff]
    %v980 = vld [vmem:[#allocation5 + $0x4a8] sm:$0xff]
    %v981 = vld [vmem:[#allocation5 + $0x4b0] sm:$0xff]
    %v982 = vld [vmem:[#allocation5 + $0x4b8] sm:$0xff]
    %v983 = vld [vmem:[#allocation5 + $0x4c0] sm:$0xff]
    %v984 = vld [vmem:[#allocation5 + $0x4c8] sm:$0xff]
    %v985 = vld [vmem:[#allocation5 + $0x4d0] sm:$0xff]
    %v986 = vld [vmem:[#allocation5 + $0x4d8] sm:$0xff]
    %v987 = vld [vmem:[#allocation5 + $0x4e0] sm:$0xff]
    %v988 = vld [vmem:[#allocation5 + $0x4e8] sm:$0xff]
    %v989 = vld [vmem:[#allocation5 + $0x4f0] sm:$0xff]
    %v990 = vld [vmem:[#allocation5 + $0x4f8] sm:$0xff]
    %v991 = vld [vmem:[#allocation5 + $0x500] sm:$0xff]
    %v992 = vld [vmem:[#allocation5 + $0x508] sm:$0xff]
    %v993 = vld [vmem:[#allocation5 + $0x510] sm:$0xff]
    %v994 = vld [vmem:[#allocation5 + $0x518] sm:$0xff]
    %v995 = vld [vmem:[#allocation5 + $0x520] sm:$0xff]
    %v996 = vld [vmem:[#allocation5 + $0x528] sm:$0xff]
    %v997 = vld [vmem:[#allocation5 + $0x530] sm:$0xff]
    %v998 = vld [vmem:[#allocation5 + $0x538] sm:$0xff]
    %v999 = vld [vmem:[#allocation5 + $0x540] sm:$0xff]
    %v1000 = vld [vmem:[#allocation5 + $0x548] sm:$0xff]
    %v1001 = vld [vmem:[#allocation5 + $0x550] sm:$0xff]
    %v1002 = vld [vmem:[#allocation5 + $0x558] sm:$0xff]
    %v1003 = vld [vmem:[#allocation5 + $0x560] sm:$0xff]
    %v1004 = vld [vmem:[#allocation5 + $0x568] sm:$0xff]
    %v1005 = vld [vmem:[#allocation5 + $0x570] sm:$0xff]
    %v1006 = vld [vmem:[#allocation5 + $0x578] sm:$0xff]
    %v1007 = vld [vmem:[#allocation5 + $0x580] sm:$0xff]
    %v1008 = vld [vmem:[#allocation5 + $0x588] sm:$0xff]
    %v1009 = vld [vmem:[#allocation5 + $0x590] sm:$0xff]
    %v1010 = vld [vmem:[#allocation5 + $0x598] sm:$0xff]
    %v1011 = vld [vmem:[#allocation5 + $0x5a0] sm:$0xff]
    %v1012 = vld [vmem:[#allocation5 + $0x5a8] sm:$0xff]
    %v1013 = vld [vmem:[#allocation5 + $0x5b0] sm:$0xff]
    %v1014 = vld [vmem:[#allocation5 + $0x5b8] sm:$0xff]
    %v1015 = vld [vmem:[#allocation5 + $0x5c0] sm:$0xff]
    %v1016 = vld [vmem:[#allocation5 + $0x5c8] sm:$0xff]
    %v1017 = vld [vmem:[#allocation5 + $0x5d0] sm:$0xff]
    %v1018 = vld [vmem:[#allocation5 + $0x5d8] sm:$0xff]
    %v1019 = vld [vmem:[#allocation5 + $0x5e0] sm:$0xff]
    %v1020 = vld [vmem:[#allocation5 + $0x5e8] sm:$0xff]
    %v1021 = vld [vmem:[#allocation5 + $0x5f0] sm:$0xff]
    %v1022 = vld [vmem:[#allocation5 + $0x5f8] sm:$0xff]
    %v1023 = vld [vmem:[#allocation5 + $0x600] sm:$0xff]
    %v1024 = vld [vmem:[#allocation5 + $0x608] sm:$0xff]
    %v1025 = vld [vmem:[#allocation5 + $0x610] sm:$0xff]
    %v1026 = vld [vmem:[#allocation5 + $0x618] sm:$0xff]
    %v1027 = vld [vmem:[#allocation5 + $0x620] sm:$0xff]
    %v1028 = vld [vmem:[#allocation5 + $0x628] sm:$0xff]
    %v1029 = vld [vmem:[#allocation5 + $0x630] sm:$0xff]
    %v1030 = vld [vmem:[#allocation5 + $0x638] sm:$0xff]
    %v1031 = vld [vmem:[#allocation5 + $0x640] sm:$0xff]
    %v1032 = vld [vmem:[#allocation5 + $0x648] sm:$0xff]
    %v1033 = vld [vmem:[#allocation5 + $0x650] sm:$0xff]
    %v1034 = vld [vmem:[#allocation5 + $0x658] sm:$0xff]
    %v1035 = vld [vmem:[#allocation5 + $0x660] sm:$0xff]
    %v1036 = vld [vmem:[#allocation5 + $0x668] sm:$0xff]
    %v1037 = vld [vmem:[#allocation5 + $0x670] sm:$0xff]
    %v1038 = vld [vmem:[#allocation5 + $0x678] sm:$0xff]
    %v1039 = vld [vmem:[#allocation5 + $0x680] sm:$0xff]
    %v1040 = vld [vmem:[#allocation5 + $0x688] sm:$0xff]
    %v1041 = vld [vmem:[#allocation5 + $0x690] sm:$0xff]
    %v1042 = vld [vmem:[#allocation5 + $0x698] sm:$0xff]
    %v1043 = vld [vmem:[#allocation5 + $0x6a0] sm:$0xff]
    %v1044 = vld [vmem:[#allocation5 + $0x6a8] sm:$0xff]
    %v1045 = vld [vmem:[#allocation5 + $0x6b0] sm:$0xff]
    %v1046 = vld [vmem:[#allocation5 + $0x6b8] sm:$0xff]
    %v1047 = vld [vmem:[#allocation5 + $0x6c0] sm:$0xff]
    %v1048 = vld [vmem:[#allocation5 + $0x6c8] sm:$0xff]
    %v1049 = vld [vmem:[#allocation5 + $0x6d0] sm:$0xff]
    %v1050 = vld [vmem:[#allocation5 + $0x6d8] sm:$0xff]
    %v1051 = vld [vmem:[#allocation5 + $0x6e0] sm:$0xff]
    %v1052 = vld [vmem:[#allocation5 + $0x6e8] sm:$0xff]
    %v1053 = vld [vmem:[#allocation5 + $0x6f0] sm:$0xff]
    %v1054 = vld [vmem:[#allocation5 + $0x6f8] sm:$0xff]
    %v1055 = vld [vmem:[#allocation5 + $0x700] sm:$0xff]
    %v1056 = vld [vmem:[#allocation5 + $0x708] sm:$0xff]
    %v1057 = vld [vmem:[#allocation5 + $0x710] sm:$0xff]
    %v1058 = vld [vmem:[#allocation5 + $0x718] sm:$0xff]
    %v1059 = vld [vmem:[#allocation5 + $0x720] sm:$0xff]
    %v1060 = vld [vmem:[#allocation5 + $0x728] sm:$0xff]
    %v1061 = vld [vmem:[#allocation5 + $0x730] sm:$0xff]
    %v1062 = vld [vmem:[#allocation5 + $0x738] sm:$0xff]
    %v1063 = vld [vmem:[#allocation5 + $0x740] sm:$0xff]
    %v1064 = vld [vmem:[#allocation5 + $0x748] sm:$0xff]
    %v1065 = vld [vmem:[#allocation5 + $0x750] sm:$0xff]
    %v1066 = vld [vmem:[#allocation5 + $0x758] sm:$0xff]
    %v1067 = vld [vmem:[#allocation5 + $0x760] sm:$0xff]
    %v1068 = vld [vmem:[#allocation5 + $0x768] sm:$0xff]
    %v1069 = vld [vmem:[#allocation5 + $0x770] sm:$0xff]
    %v1070 = vld [vmem:[#allocation5 + $0x778] sm:$0xff]
    %v1071 = vld [vmem:[#allocation5 + $0x780] sm:$0xff]
    %v1072 = vld [vmem:[#allocation5 + $0x788] sm:$0xff]
    %v1073 = vld [vmem:[#allocation5 + $0x790] sm:$0xff]
    %v1074 = vld [vmem:[#allocation5 + $0x798] sm:$0xff]
    %v1075 = vld [vmem:[#allocation5 + $0x7a0] sm:$0xff]
    %v1076 = vld [vmem:[#allocation5 + $0x7a8] sm:$0xff]
    %v1077 = vld [vmem:[#allocation5 + $0x7b0] sm:$0xff]
    %v1078 = vld [vmem:[#allocation5 + $0x7b8] sm:$0xff]
    %v1079 = vld [vmem:[#allocation5 + $0x7c0] sm:$0xff]
    %v1080 = vld [vmem:[#allocation5 + $0x7c8] sm:$0xff]
    %v1081 = vld [vmem:[#allocation5 + $0x7d0] sm:$0xff]
    %v1082 = vld [vmem:[#allocation5 + $0x7d8] sm:$0xff]
    %v1083 = vld [vmem:[#allocation5 + $0x7e0] sm:$0xff]
    %v1084 = vld [vmem:[#allocation5 + $0x7e8] sm:$0xff]
    %v1085 = vld [vmem:[#allocation5 + $0x7f0] sm:$0xff]
    %v1086 = vld [vmem:[#allocation5 + $0x7f8] sm:$0xff]
    %v1087 = vld [vmem:[#allocation5 + $0x800] sm:$0xff]
    %v1088 = vld [vmem:[#allocation5 + $0x808] sm:$0xff]
    %v1089 = vld [vmem:[#allocation5 + $0x810] sm:$0xff]
    %v1090 = vld [vmem:[#allocation5 + $0x818] sm:$0xff]
    %v1091 = vld [vmem:[#allocation5 + $0x820] sm:$0xff]
    %v1092 = vld [vmem:[#allocation5 + $0x828] sm:$0xff]
    %v1093 = vld [vmem:[#allocation5 + $0x830] sm:$0xff]
    %v1094 = vld [vmem:[#allocation5 + $0x838] sm:$0xff]
    %v1095 = vld [vmem:[#allocation5 + $0x840] sm:$0xff]
    %v1096 = vld [vmem:[#allocation5 + $0x848] sm:$0xff]
    %v1097 = vld [vmem:[#allocation5 + $0x850] sm:$0xff]
    %v1098 = vld [vmem:[#allocation5 + $0x858] sm:$0xff]
    %v1099 = vld [vmem:[#allocation5 + $0x860] sm:$0xff]
    %v1100 = vld [vmem:[#allocation5 + $0x868] sm:$0xff]
    %v1101 = vld [vmem:[#allocation5 + $0x870] sm:$0xff]
    %v1102 = vld [vmem:[#allocation5 + $0x878] sm:$0xff]
    %v1103 = vld [vmem:[#allocation5 + $0x880] sm:$0xff]
    %v1104 = vld [vmem:[#allocation5 + $0x888] sm:$0xff]
    %v1105 = vld [vmem:[#allocation5 + $0x890] sm:$0xff]
    %v1106 = vld [vmem:[#allocation5 + $0x898] sm:$0xff]
    %v1107 = vld [vmem:[#allocation5 + $0x8a0] sm:$0xff]
    %v1108 = vld [vmem:[#allocation5 + $0x8a8] sm:$0xff]
    %v1109 = vld [vmem:[#allocation5 + $0x8b0] sm:$0xff]
    %v1110 = vld [vmem:[#allocation5 + $0x8b8] sm:$0xff]
    %v1111 = vld [vmem:[#allocation5 + $0x8c0] sm:$0xff]
    %v1112 = vld [vmem:[#allocation5 + $0x8c8] sm:$0xff]
    %v1113 = vld [vmem:[#allocation5 + $0x8d0] sm:$0xff]
    %v1114 = vld [vmem:[#allocation5 + $0x8d8] sm:$0xff]
    %v1115 = vld [vmem:[#allocation5 + $0x8e0] sm:$0xff]
    %v1116 = vld [vmem:[#allocation5 + $0x8e8] sm:$0xff]
    %v1117 = vld [vmem:[#allocation5 + $0x8f0] sm:$0xff]
    %v1118 = vld [vmem:[#allocation5 + $0x8f8] sm:$0xff]
    %v1119 = vld [vmem:[#allocation5 + $0x900] sm:$0xff]
    %v1120 = vld [vmem:[#allocation5 + $0x908] sm:$0xff]
    %v1121 = vld [vmem:[#allocation5 + $0x910] sm:$0xff]
    %v1122 = vld [vmem:[#allocation5 + $0x918] sm:$0xff]
    %v1123 = vld [vmem:[#allocation5 + $0x920] sm:$0xff]
    %v1124 = vld [vmem:[#allocation5 + $0x928] sm:$0xff]
    %v1125 = vld [vmem:[#allocation5 + $0x930] sm:$0xff]
    %v1126 = vld [vmem:[#allocation5 + $0x938] sm:$0xff]
    %v1127 = vld [vmem:[#allocation5 + $0x940] sm:$0xff]
    %v1128 = vld [vmem:[#allocation5 + $0x948] sm:$0xff]
    %v1129 = vld [vmem:[#allocation5 + $0x950] sm:$0xff]
    %v1130 = vld [vmem:[#allocation5 + $0x958] sm:$0xff]
    %v1131 = vld [vmem:[#allocation5 + $0x960] sm:$0xff]
    %v1132 = vld [vmem:[#allocation5 + $0x968] sm:$0xff]
    %v1133 = vld [vmem:[#allocation5 + $0x970] sm:$0xff]
    %v1134 = vld [vmem:[#allocation5 + $0x978] sm:$0xff]
    %v1135 = vld [vmem:[#allocation5 + $0x980] sm:$0xff]
    %v1136 = vld [vmem:[#allocation5 + $0x988] sm:$0xff]
    %v1137 = vld [vmem:[#allocation5 + $0x990] sm:$0xff]
    %v1138 = vld [vmem:[#allocation5 + $0x998] sm:$0xff]
    %v1139 = vld [vmem:[#allocation5 + $0x9a0] sm:$0xff]
    %v1140 = vld [vmem:[#allocation5 + $0x9a8] sm:$0xff]
    %v1141 = vld [vmem:[#allocation5 + $0x9b0] sm:$0xff]
    %v1142 = vld [vmem:[#allocation5 + $0x9b8] sm:$0xff]
    %v1143 = vld [vmem:[#allocation5 + $0x9c0] sm:$0xff]
    %v1144 = vld [vmem:[#allocation5 + $0x9c8] sm:$0xff]
    %v1145 = vld [vmem:[#allocation5 + $0x9d0] sm:$0xff]
    %v1146 = vld [vmem:[#allocation5 + $0x9d8] sm:$0xff]
    %v1147 = vld [vmem:[#allocation5 + $0x9e0] sm:$0xff]
    %v1148 = vld [vmem:[#allocation5 + $0x9e8] sm:$0xff]
    %v1149 = vld [vmem:[#allocation5 + $0x9f0] sm:$0xff]
    %v1150 = vld [vmem:[#allocation5 + $0x9f8] sm:$0xff]
    %v1151 = vld [vmem:[#allocation5 + $0xa00] sm:$0xff]
    %v1152 = vld [vmem:[#allocation5 + $0xa08] sm:$0xff]
    %v1153 = vld [vmem:[#allocation5 + $0xa10] sm:$0xff]
    %v1154 = vld [vmem:[#allocation5 + $0xa18] sm:$0xff]
    %v1155 = vld [vmem:[#allocation5 + $0xa20] sm:$0xff]
    %v1156 = vld [vmem:[#allocation5 + $0xa28] sm:$0xff]
    %v1157 = vld [vmem:[#allocation5 + $0xa30] sm:$0xff]
    %v1158 = vld [vmem:[#allocation5 + $0xa38] sm:$0xff]
    %v1159 = vld [vmem:[#allocation5 + $0xa40] sm:$0xff]
    %v1160 = vld [vmem:[#allocation5 + $0xa48] sm:$0xff]
    %v1161 = vld [vmem:[#allocation5 + $0xa50] sm:$0xff]
    %v1162 = vld [vmem:[#allocation5 + $0xa58] sm:$0xff]
    %v1163 = vld [vmem:[#allocation5 + $0xa60] sm:$0xff]
    %v1164 = vld [vmem:[#allocation5 + $0xa68] sm:$0xff]
    %v1165 = vld [vmem:[#allocation5 + $0xa70] sm:$0xff]
    %v1166 = vld [vmem:[#allocation5 + $0xa78] sm:$0xff]
    %v1167 = vld [vmem:[#allocation5 + $0xa80] sm:$0xff]
    %v1168 = vld [vmem:[#allocation5 + $0xa88] sm:$0xff]
    %v1169 = vld [vmem:[#allocation5 + $0xa90] sm:$0xff]
    %v1170 = vld [vmem:[#allocation5 + $0xa98] sm:$0xff]
    %v1171 = vld [vmem:[#allocation5 + $0xaa0] sm:$0xff]
    %v1172 = vld [vmem:[#allocation5 + $0xaa8] sm:$0xff]
    %v1173 = vld [vmem:[#allocation5 + $0xab0] sm:$0xff]
    %v1174 = vld [vmem:[#allocation5 + $0xab8] sm:$0xff]
    %v1175 = vld [vmem:[#allocation5 + $0xac0] sm:$0xff]
    %v1176 = vld [vmem:[#allocation5 + $0xac8] sm:$0xff]
    %v1177 = vld [vmem:[#allocation5 + $0xad0] sm:$0xff]
    %v1178 = vld [vmem:[#allocation5 + $0xad8] sm:$0xff]
    %v1179 = vld [vmem:[#allocation5 + $0xae0] sm:$0xff]
    %v1180 = vld [vmem:[#allocation5 + $0xae8] sm:$0xff]
    %v1181 = vld [vmem:[#allocation5 + $0xaf0] sm:$0xff]
    %v1182 = vld [vmem:[#allocation5 + $0xaf8] sm:$0xff]
    %v1183 = vld [vmem:[#allocation5 + $0xb00] sm:$0xff]
    %v1184 = vld [vmem:[#allocation5 + $0xb08] sm:$0xff]
    %v1185 = vld [vmem:[#allocation5 + $0xb10] sm:$0xff]
    %v1186 = vld [vmem:[#allocation5 + $0xb18] sm:$0xff]
    %v1187 = vld [vmem:[#allocation5 + $0xb20] sm:$0xff]
    %v1188 = vld [vmem:[#allocation5 + $0xb28] sm:$0xff]
    %v1189 = vld [vmem:[#allocation5 + $0xb30] sm:$0xff]
    %v1190 = vld [vmem:[#allocation5 + $0xb38] sm:$0xff]
    %v1191 = vld [vmem:[#allocation5 + $0xb40] sm:$0xff]
    %v1192 = vld [vmem:[#allocation5 + $0xb48] sm:$0xff]
    %v1193 = vld [vmem:[#allocation5 + $0xb50] sm:$0xff]
    %v1194 = vld [vmem:[#allocation5 + $0xb58] sm:$0xff]
    %v1195 = vld [vmem:[#allocation5 + $0xb60] sm:$0xff]
    %v1196 = vld [vmem:[#allocation5 + $0xb68] sm:$0xff]
    %v1197 = vld [vmem:[#allocation5 + $0xb70] sm:$0xff]
    %v1198 = vld [vmem:[#allocation5 + $0xb78] sm:$0xff]
    %v1199 = vld [vmem:[#allocation5 + $0xb80] sm:$0xff]
    %v1200 = vld [vmem:[#allocation5 + $0xb88] sm:$0xff]
    %v1201 = vld [vmem:[#allocation5 + $0xb90] sm:$0xff]
    %v1202 = vld [vmem:[#allocation5 + $0xb98] sm:$0xff]
    %v1203 = vld [vmem:[#allocation5 + $0xba0] sm:$0xff]
    %v1204 = vld [vmem:[#allocation5 + $0xba8] sm:$0xff]
    %v1205 = vld [vmem:[#allocation5 + $0xbb0] sm:$0xff]
    %v1206 = vld [vmem:[#allocation5 + $0xbb8] sm:$0xff]
    %v1207 = vld [vmem:[#allocation5 + $0xbc0] sm:$0xff]
    %v1208 = vld [vmem:[#allocation5 + $0xbc8] sm:$0xff]
    %v1209 = vld [vmem:[#allocation5 + $0xbd0] sm:$0xff]
    %v1210 = vld [vmem:[#allocation5 + $0xbd8] sm:$0xff]
    %v1211 = vld [vmem:[#allocation5 + $0xbe0] sm:$0xff]
    %v1212 = vld [vmem:[#allocation5 + $0xbe8] sm:$0xff]
    %v1213 = vld [vmem:[#allocation5 + $0xbf0] sm:$0xff]
    %v1214 = vld [vmem:[#allocation5 + $0xbf8] sm:$0xff]
    %v1215 = vld [vmem:[#allocation5 + $0xc00] sm:$0xff]
    %v1216 = vld [vmem:[#allocation5 + $0xc08] sm:$0xff]
    %v1217 = vld [vmem:[#allocation5 + $0xc10] sm:$0xff]
    %v1218 = vld [vmem:[#allocation5 + $0xc18] sm:$0xff]
    %v1219 = vld [vmem:[#allocation5 + $0xc20] sm:$0xff]
    %v1220 = vld [vmem:[#allocation5 + $0xc28] sm:$0xff]
    %v1221 = vld [vmem:[#allocation5 + $0xc30] sm:$0xff]
    %v1222 = vld [vmem:[#allocation5 + $0xc38] sm:$0xff]
    %v1223 = vld [vmem:[#allocation5 + $0xc40] sm:$0xff]
    %v1224 = vld [vmem:[#allocation5 + $0xc48] sm:$0xff]
    %v1225 = vld [vmem:[#allocation5 + $0xc50] sm:$0xff]
    %v1226 = vld [vmem:[#allocation5 + $0xc58] sm:$0xff]
    %v1227 = vld [vmem:[#allocation5 + $0xc60] sm:$0xff]
    %v1228 = vld [vmem:[#allocation5 + $0xc68] sm:$0xff]
    %v1229 = vld [vmem:[#allocation5 + $0xc70] sm:$0xff]
    %v1230 = vld [vmem:[#allocation5 + $0xc78] sm:$0xff]
    %v1231 = vld [vmem:[#allocation5 + $0xc80] sm:$0xff]
    %v1232 = vld [vmem:[#allocation5 + $0xc88] sm:$0xff]
    %v1233 = vld [vmem:[#allocation5 + $0xc90] sm:$0xff]
    %v1234 = vld [vmem:[#allocation5 + $0xc98] sm:$0xff]
    %v1235 = vld [vmem:[#allocation5 + $0xca0] sm:$0xff]
    %v1236 = vld [vmem:[#allocation5 + $0xca8] sm:$0xff]
    %v1237 = vld [vmem:[#allocation5 + $0xcb0] sm:$0xff]
    %v1238 = vld [vmem:[#allocation5 + $0xcb8] sm:$0xff]
    %v1239 = vld [vmem:[#allocation5 + $0xcc0] sm:$0xff]
    %v1240 = vld [vmem:[#allocation5 + $0xcc8] sm:$0xff]
    %v1241 = vld [vmem:[#allocation5 + $0xcd0] sm:$0xff]
    %v1242 = vld [vmem:[#allocation5 + $0xcd8] sm:$0xff]
    %v1243 = vld [vmem:[#allocation5 + $0xce0] sm:$0xff]
    %v1244 = vld [vmem:[#allocation5 + $0xce8] sm:$0xff]
    %v1245 = vld [vmem:[#allocation5 + $0xcf0] sm:$0xff]
    %v1246 = vld [vmem:[#allocation5 + $0xcf8] sm:$0xff]
    %v1247 = vld [vmem:[#allocation5 + $0xd00] sm:$0xff]
    %v1248 = vld [vmem:[#allocation5 + $0xd08] sm:$0xff]
    %v1249 = vld [vmem:[#allocation5 + $0xd10] sm:$0xff]
    %v1250 = vld [vmem:[#allocation5 + $0xd18] sm:$0xff]
    %v1251 = vld [vmem:[#allocation5 + $0xd20] sm:$0xff]
    %v1252 = vld [vmem:[#allocation5 + $0xd28] sm:$0xff]
    %v1253 = vld [vmem:[#allocation5 + $0xd30] sm:$0xff]
    %v1254 = vld [vmem:[#allocation5 + $0xd38] sm:$0xff]
    %v1255 = vld [vmem:[#allocation5 + $0xd40] sm:$0xff]
    %v1256 = vld [vmem:[#allocation5 + $0xd48] sm:$0xff]
    %v1257 = vld [vmem:[#allocation5 + $0xd50] sm:$0xff]
    %v1258 = vld [vmem:[#allocation5 + $0xd58] sm:$0xff]
    %v1259 = vld [vmem:[#allocation5 + $0xd60] sm:$0xff]
    %v1260 = vld [vmem:[#allocation5 + $0xd68] sm:$0xff]
    %v1261 = vld [vmem:[#allocation5 + $0xd70] sm:$0xff]
    %v1262 = vld [vmem:[#allocation5 + $0xd78] sm:$0xff]
    %v1263 = vld [vmem:[#allocation5 + $0xd80] sm:$0xff]
    %v1264 = vld [vmem:[#allocation5 + $0xd88] sm:$0xff]
    %v1265 = vld [vmem:[#allocation5 + $0xd90] sm:$0xff]
    %v1266 = vld [vmem:[#allocation5 + $0xd98] sm:$0xff]
    %v1267 = vld [vmem:[#allocation5 + $0xda0] sm:$0xff]
    %v1268 = vld [vmem:[#allocation5 + $0xda8] sm:$0xff]
    %v1269 = vld [vmem:[#allocation5 + $0xdb0] sm:$0xff]
    %v1270 = vld [vmem:[#allocation5 + $0xdb8] sm:$0xff]
    %v1271 = vld [vmem:[#allocation5 + $0xdc0] sm:$0xff]
    %v1272 = vld [vmem:[#allocation5 + $0xdc8] sm:$0xff]
    %v1273 = vld [vmem:[#allocation5 + $0xdd0] sm:$0xff]
    %v1274 = vld [vmem:[#allocation5 + $0xdd8] sm:$0xff]
    %v1275 = vld [vmem:[#allocation5 + $0xde0] sm:$0xff]
    %v1276 = vld [vmem:[#allocation5 + $0xde8] sm:$0xff]
    %v1277 = vld [vmem:[#allocation5 + $0xdf0] sm:$0xff]
    %v1278 = vld [vmem:[#allocation5 + $0xdf8] sm:$0xff]
    %v1279 = vld [vmem:[#allocation5 + $0xe00] sm:$0xff]
    %v1280 = vld [vmem:[#allocation5 + $0xe08] sm:$0xff]
    %v1281 = vld [vmem:[#allocation5 + $0xe10] sm:$0xff]
    %v1282 = vld [vmem:[#allocation5 + $0xe18] sm:$0xff]
    %v1283 = vld [vmem:[#allocation5 + $0xe20] sm:$0xff]
    %v1284 = vld [vmem:[#allocation5 + $0xe28] sm:$0xff]
    %v1285 = vld [vmem:[#allocation5 + $0xe30] sm:$0xff]
    %v1286 = vld [vmem:[#allocation5 + $0xe38] sm:$0xff]
    %v1287 = vld [vmem:[#allocation5 + $0xe40] sm:$0xff]
    %v1288 = vld [vmem:[#allocation5 + $0xe48] sm:$0xff]
    %v1289 = vld [vmem:[#allocation5 + $0xe50] sm:$0xff]
    %v1290 = vld [vmem:[#allocation5 + $0xe58] sm:$0xff]
    %v1291 = vld [vmem:[#allocation5 + $0xe60] sm:$0xff]
    %v1292 = vld [vmem:[#allocation5 + $0xe68] sm:$0xff]
    %v1293 = vld [vmem:[#allocation5 + $0xe70] sm:$0xff]
    %v1294 = vld [vmem:[#allocation5 + $0xe78] sm:$0xff]
    %v1295 = vld [vmem:[#allocation5 + $0xe80] sm:$0xff]
    %v1296 = vld [vmem:[#allocation5 + $0xe88] sm:$0xff]
    %v1297 = vld [vmem:[#allocation5 + $0xe90] sm:$0xff]
    %v1298 = vld [vmem:[#allocation5 + $0xe98] sm:$0xff]
    %v1299 = vld [vmem:[#allocation5 + $0xea0] sm:$0xff]
    %v1300 = vld [vmem:[#allocation5 + $0xea8] sm:$0xff]
    %v1301 = vld [vmem:[#allocation5 + $0xeb0] sm:$0xff]
    %v1302 = vld [vmem:[#allocation5 + $0xeb8] sm:$0xff]
    %v1303 = vld [vmem:[#allocation5 + $0xec0] sm:$0xff]
    %v1304 = vld [vmem:[#allocation5 + $0xec8] sm:$0xff]
    %v1305 = vld [vmem:[#allocation5 + $0xed0] sm:$0xff]
    %v1306 = vld [vmem:[#allocation5 + $0xed8] sm:$0xff]
    %v1307 = vld [vmem:[#allocation5 + $0xee0] sm:$0xff]
    %v1308 = vld [vmem:[#allocation5 + $0xee8] sm:$0xff]
    %v1309 = vld [vmem:[#allocation5 + $0xef0] sm:$0xff]
    %v1310 = vld [vmem:[#allocation5 + $0xef8] sm:$0xff]
    %v1311 = vld [vmem:[#allocation5 + $0xf00] sm:$0xff]
    %v1312 = vld [vmem:[#allocation5 + $0xf08] sm:$0xff]
    %v1313 = vld [vmem:[#allocation5 + $0xf10] sm:$0xff]
    %v1314 = vld [vmem:[#allocation5 + $0xf18] sm:$0xff]
    %v1315 = vld [vmem:[#allocation5 + $0xf20] sm:$0xff]
    %v1316 = vld [vmem:[#allocation5 + $0xf28] sm:$0xff]
    %v1317 = vld [vmem:[#allocation5 + $0xf30] sm:$0xff]
    %v1318 = vld [vmem:[#allocation5 + $0xf38] sm:$0xff]
    %v1319 = vld [vmem:[#allocation5 + $0xf40] sm:$0xff]
    %v1320 = vld [vmem:[#allocation5 + $0xf48] sm:$0xff]
    %v1321 = vld [vmem:[#allocation5 + $0xf50] sm:$0xff]
    %v1322 = vld [vmem:[#allocation5 + $0xf58] sm:$0xff]
    %v1323 = vld [vmem:[#allocation5 + $0xf60] sm:$0xff]
    %v1324 = vld [vmem:[#allocation5 + $0xf68] sm:$0xff]
    %v1325 = vld [vmem:[#allocation5 + $0xf70] sm:$0xff]
    %v1326 = vld [vmem:[#allocation5 + $0xf78] sm:$0xff]
    %v1327 = vld [vmem:[#allocation5 + $0xf80] sm:$0xff]
    %v1328 = vld [vmem:[#allocation5 + $0xf88] sm:$0xff]
    %v1329 = vld [vmem:[#allocation5 + $0xf90] sm:$0xff]
    %v1330 = vld [vmem:[#allocation5 + $0xf98] sm:$0xff]
    %v1331 = vld [vmem:[#allocation5 + $0xfa0] sm:$0xff]
    %v1332 = vld [vmem:[#allocation5 + $0xfa8] sm:$0xff]
    %v1333 = vld [vmem:[#allocation5 + $0xfb0] sm:$0xff]
    %v1334 = vld [vmem:[#allocation5 + $0xfb8] sm:$0xff]
    %v1335 = vld [vmem:[#allocation5 + $0xfc0] sm:$0xff]
    %v1336 = vld [vmem:[#allocation5 + $0xfc8] sm:$0xff]
    %v1337 = vld [vmem:[#allocation5 + $0xfd0] sm:$0xff]
    %v1338 = vld [vmem:[#allocation5 + $0xfd8] sm:$0xff]
    %v1339 = vld [vmem:[#allocation5 + $0xfe0] sm:$0xff]
    %v1340 = vld [vmem:[#allocation5 + $0xfe8] sm:$0xff]
    %v1341 = vld [vmem:[#allocation5 + $0xff0] sm:$0xff]
    %v1342 = vld [vmem:[#allocation5 + $0xff8] sm:$0xff]
    %v1855 = vunpack.c.l.b16 %v831
    %v1856 = vunpack.c.h.b16 %v831
    %v1857 = vunpack.c.l.b16 %v832
    %v1858 = vunpack.c.h.b16 %v832
    %v1859 = vunpack.c.l.b16 %v833
    %v1860 = vunpack.c.h.b16 %v833
    %v1861 = vunpack.c.l.b16 %v834
    %v1862 = vunpack.c.h.b16 %v834
    %v1863 = vunpack.c.l.b16 %v835
    %v1864 = vunpack.c.h.b16 %v835
    %v1865 = vunpack.c.l.b16 %v836
    %v1866 = vunpack.c.h.b16 %v836
    %v1867 = vunpack.c.l.b16 %v837
    %v1868 = vunpack.c.h.b16 %v837
    %v1869 = vunpack.c.l.b16 %v838
    %v1870 = vunpack.c.h.b16 %v838
    %v1871 = vunpack.c.l.b16 %v839
    %v1872 = vunpack.c.h.b16 %v839
    %v1873 = vunpack.c.l.b16 %v840
    %v1874 = vunpack.c.h.b16 %v840
    %v1875 = vunpack.c.l.b16 %v841
    %v1876 = vunpack.c.h.b16 %v841
    %v1877 = vunpack.c.l.b16 %v842
    %v1878 = vunpack.c.h.b16 %v842
    %v1879 = vunpack.c.l.b16 %v843
    %v1880 = vunpack.c.h.b16 %v843
    %v1881 = vunpack.c.l.b16 %v844
    %v1882 = vunpack.c.h.b16 %v844
    %v1883 = vunpack.c.l.b16 %v845
    %v1884 = vunpack.c.h.b16 %v845
    %v1885 = vunpack.c.l.b16 %v846
    %v1886 = vunpack.c.h.b16 %v846
    %v1887 = vunpack.c.l.b16 %v847
    %v1888 = vunpack.c.h.b16 %v847
    %v1889 = vunpack.c.l.b16 %v848
    %v1890 = vunpack.c.h.b16 %v848
    %v1891 = vunpack.c.l.b16 %v849
    %v1892 = vunpack.c.h.b16 %v849
    %v1893 = vunpack.c.l.b16 %v850
    %v1894 = vunpack.c.h.b16 %v850
    %v1895 = vunpack.c.l.b16 %v851
    %v1896 = vunpack.c.h.b16 %v851
    %v1897 = vunpack.c.l.b16 %v852
    %v1898 = vunpack.c.h.b16 %v852
    %v1899 = vunpack.c.l.b16 %v853
    %v1900 = vunpack.c.h.b16 %v853
    %v1901 = vunpack.c.l.b16 %v854
    %v1902 = vunpack.c.h.b16 %v854
    %v1903 = vunpack.c.l.b16 %v855
    %v1904 = vunpack.c.h.b16 %v855
    %v1905 = vunpack.c.l.b16 %v856
    %v1906 = vunpack.c.h.b16 %v856
    %v1907 = vunpack.c.l.b16 %v857
    %v1908 = vunpack.c.h.b16 %v857
    %v1909 = vunpack.c.l.b16 %v858
    %v1910 = vunpack.c.h.b16 %v858
    %v1911 = vunpack.c.l.b16 %v859
    %v1912 = vunpack.c.h.b16 %v859
    %v1913 = vunpack.c.l.b16 %v860
    %v1914 = vunpack.c.h.b16 %v860
    %v1915 = vunpack.c.l.b16 %v861
    %v1916 = vunpack.c.h.b16 %v861
    %v1917 = vunpack.c.l.b16 %v862
    %v1918 = vunpack.c.h.b16 %v862
    %v1919 = vunpack.c.l.b16 %v863
    %v1920 = vunpack.c.h.b16 %v863
    %v1921 = vunpack.c.l.b16 %v864
    %v1922 = vunpack.c.h.b16 %v864
    %v1923 = vunpack.c.l.b16 %v865
    %v1924 = vunpack.c.h.b16 %v865
    %v1925 = vunpack.c.l.b16 %v866
    %v1926 = vunpack.c.h.b16 %v866
    %v1927 = vunpack.c.l.b16 %v867
    %v1928 = vunpack.c.h.b16 %v867
    %v1929 = vunpack.c.l.b16 %v868
    %v1930 = vunpack.c.h.b16 %v868
    %v1931 = vunpack.c.l.b16 %v869
    %v1932 = vunpack.c.h.b16 %v869
    %v1933 = vunpack.c.l.b16 %v870
    %v1934 = vunpack.c.h.b16 %v870
    %v1935 = vunpack.c.l.b16 %v871
    %v1936 = vunpack.c.h.b16 %v871
    %v1937 = vunpack.c.l.b16 %v872
    %v1938 = vunpack.c.h.b16 %v872
    %v1939 = vunpack.c.l.b16 %v873
    %v1940 = vunpack.c.h.b16 %v873
    %v1941 = vunpack.c.l.b16 %v874
    %v1942 = vunpack.c.h.b16 %v874
    %v1943 = vunpack.c.l.b16 %v875
    %v1944 = vunpack.c.h.b16 %v875
    %v1945 = vunpack.c.l.b16 %v876
    %v1946 = vunpack.c.h.b16 %v876
    %v1947 = vunpack.c.l.b16 %v877
    %v1948 = vunpack.c.h.b16 %v877
    %v1949 = vunpack.c.l.b16 %v878
    %v1950 = vunpack.c.h.b16 %v878
    %v1951 = vunpack.c.l.b16 %v879
    %v1952 = vunpack.c.h.b16 %v879
    %v1953 = vunpack.c.l.b16 %v880
    %v1954 = vunpack.c.h.b16 %v880
    %v1955 = vunpack.c.l.b16 %v881
    %v1956 = vunpack.c.h.b16 %v881
    %v1957 = vunpack.c.l.b16 %v882
    %v1958 = vunpack.c.h.b16 %v882
    %v1959 = vunpack.c.l.b16 %v883
    %v1960 = vunpack.c.h.b16 %v883
    %v1961 = vunpack.c.l.b16 %v884
    %v1962 = vunpack.c.h.b16 %v884
    %v1963 = vunpack.c.l.b16 %v885
    %v1964 = vunpack.c.h.b16 %v885
    %v1965 = vunpack.c.l.b16 %v886
    %v1966 = vunpack.c.h.b16 %v886
    %v1967 = vunpack.c.l.b16 %v887
    %v1968 = vunpack.c.h.b16 %v887
    %v1969 = vunpack.c.l.b16 %v888
    %v1970 = vunpack.c.h.b16 %v888
    %v1971 = vunpack.c.l.b16 %v889
    %v1972 = vunpack.c.h.b16 %v889
    %v1973 = vunpack.c.l.b16 %v890
    %v1974 = vunpack.c.h.b16 %v890
    %v1975 = vunpack.c.l.b16 %v891
    %v1976 = vunpack.c.h.b16 %v891
    %v1977 = vunpack.c.l.b16 %v892
    %v1978 = vunpack.c.h.b16 %v892
    %v1979 = vunpack.c.l.b16 %v893
    %v1980 = vunpack.c.h.b16 %v893
    %v1981 = vunpack.c.l.b16 %v894
    %v1982 = vunpack.c.h.b16 %v894
    %v1983 = vunpack.c.l.b16 %v895
    %v1984 = vunpack.c.h.b16 %v895
    %v1985 = vunpack.c.l.b16 %v896
    %v1986 = vunpack.c.h.b16 %v896
    %v1987 = vunpack.c.l.b16 %v897
    %v1988 = vunpack.c.h.b16 %v897
    %v1989 = vunpack.c.l.b16 %v898
    %v1990 = vunpack.c.h.b16 %v898
    %v1991 = vunpack.c.l.b16 %v899
    %v1992 = vunpack.c.h.b16 %v899
    %v1993 = vunpack.c.l.b16 %v900
    %v1994 = vunpack.c.h.b16 %v900
    %v1995 = vunpack.c.l.b16 %v901
    %v1996 = vunpack.c.h.b16 %v901
    %v1997 = vunpack.c.l.b16 %v902
    %v1998 = vunpack.c.h.b16 %v902
    %v1999 = vunpack.c.l.b16 %v903
    %v2000 = vunpack.c.h.b16 %v903
    %v2001 = vunpack.c.l.b16 %v904
    %v2002 = vunpack.c.h.b16 %v904
    %v2003 = vunpack.c.l.b16 %v905
    %v2004 = vunpack.c.h.b16 %v905
    %v2005 = vunpack.c.l.b16 %v906
    %v2006 = vunpack.c.h.b16 %v906
    %v2007 = vunpack.c.l.b16 %v907
    %v2008 = vunpack.c.h.b16 %v907
    %v2009 = vunpack.c.l.b16 %v908
    %v2010 = vunpack.c.h.b16 %v908
    %v2011 = vunpack.c.l.b16 %v909
    %v2012 = vunpack.c.h.b16 %v909
    %v2013 = vunpack.c.l.b16 %v910
    %v2014 = vunpack.c.h.b16 %v910
    %v2015 = vunpack.c.l.b16 %v911
    %v2016 = vunpack.c.h.b16 %v911
    %v2017 = vunpack.c.l.b16 %v912
    %v2018 = vunpack.c.h.b16 %v912
    %v2019 = vunpack.c.l.b16 %v913
    %v2020 = vunpack.c.h.b16 %v913
    %v2021 = vunpack.c.l.b16 %v914
    %v2022 = vunpack.c.h.b16 %v914
    %v2023 = vunpack.c.l.b16 %v915
    %v2024 = vunpack.c.h.b16 %v915
    %v2025 = vunpack.c.l.b16 %v916
    %v2026 = vunpack.c.h.b16 %v916
    %v2027 = vunpack.c.l.b16 %v917
    %v2028 = vunpack.c.h.b16 %v917
    %v2029 = vunpack.c.l.b16 %v918
    %v2030 = vunpack.c.h.b16 %v918
    %v2031 = vunpack.c.l.b16 %v919
    %v2032 = vunpack.c.h.b16 %v919
    %v2033 = vunpack.c.l.b16 %v920
    %v2034 = vunpack.c.h.b16 %v920
    %v2035 = vunpack.c.l.b16 %v921
    %v2036 = vunpack.c.h.b16 %v921
    %v2037 = vunpack.c.l.b16 %v922
    %v2038 = vunpack.c.h.b16 %v922
    %v2039 = vunpack.c.l.b16 %v923
    %v2040 = vunpack.c.h.b16 %v923
    %v2041 = vunpack.c.l.b16 %v924
    %v2042 = vunpack.c.h.b16 %v924
    %v2043 = vunpack.c.l.b16 %v925
    %v2044 = vunpack.c.h.b16 %v925
    %v2045 = vunpack.c.l.b16 %v926
    %v2046 = vunpack.c.h.b16 %v926
    %v2047 = vunpack.c.l.b16 %v927
    %v2048 = vunpack.c.h.b16 %v927
    %v2049 = vunpack.c.l.b16 %v928
    %v2050 = vunpack.c.h.b16 %v928
    %v2051 = vunpack.c.l.b16 %v929
    %v2052 = vunpack.c.h.b16 %v929
    %v2053 = vunpack.c.l.b16 %v930
    %v2054 = vunpack.c.h.b16 %v930
    %v2055 = vunpack.c.l.b16 %v931
    %v2056 = vunpack.c.h.b16 %v931
    %v2057 = vunpack.c.l.b16 %v932
    %v2058 = vunpack.c.h.b16 %v932
    %v2059 = vunpack.c.l.b16 %v933
    %v2060 = vunpack.c.h.b16 %v933
    %v2061 = vunpack.c.l.b16 %v934
    %v2062 = vunpack.c.h.b16 %v934
    %v2063 = vunpack.c.l.b16 %v935
    %v2064 = vunpack.c.h.b16 %v935
    %v2065 = vunpack.c.l.b16 %v936
    %v2066 = vunpack.c.h.b16 %v936
    %v2067 = vunpack.c.l.b16 %v937
    %v2068 = vunpack.c.h.b16 %v937
    %v2069 = vunpack.c.l.b16 %v938
    %v2070 = vunpack.c.h.b16 %v938
    %v2071 = vunpack.c.l.b16 %v939
    %v2072 = vunpack.c.h.b16 %v939
    %v2073 = vunpack.c.l.b16 %v940
    %v2074 = vunpack.c.h.b16 %v940
    %v2075 = vunpack.c.l.b16 %v941
    %v2076 = vunpack.c.h.b16 %v941
    %v2077 = vunpack.c.l.b16 %v942
    %v2078 = vunpack.c.h.b16 %v942
    %v2079 = vunpack.c.l.b16 %v943
    %v2080 = vunpack.c.h.b16 %v943
    %v2081 = vunpack.c.l.b16 %v944
    %v2082 = vunpack.c.h.b16 %v944
    %v2083 = vunpack.c.l.b16 %v945
    %v2084 = vunpack.c.h.b16 %v945
    %v2085 = vunpack.c.l.b16 %v946
    %v2086 = vunpack.c.h.b16 %v946
    %v2087 = vunpack.c.l.b16 %v947
    %v2088 = vunpack.c.h.b16 %v947
    %v2089 = vunpack.c.l.b16 %v948
    %v2090 = vunpack.c.h.b16 %v948
    %v2091 = vunpack.c.l.b16 %v949
    %v2092 = vunpack.c.h.b16 %v949
    %v2093 = vunpack.c.l.b16 %v950
    %v2094 = vunpack.c.h.b16 %v950
    %v2095 = vunpack.c.l.b16 %v951
    %v2096 = vunpack.c.h.b16 %v951
    %v2097 = vunpack.c.l.b16 %v952
    %v2098 = vunpack.c.h.b16 %v952
    %v2099 = vunpack.c.l.b16 %v953
    %v2100 = vunpack.c.h.b16 %v953
    %v2101 = vunpack.c.l.b16 %v954
    %v2102 = vunpack.c.h.b16 %v954
    %v2103 = vunpack.c.l.b16 %v955
    %v2104 = vunpack.c.h.b16 %v955
    %v2105 = vunpack.c.l.b16 %v956
    %v2106 = vunpack.c.h.b16 %v956
    %v2107 = vunpack.c.l.b16 %v957
    %v2108 = vunpack.c.h.b16 %v957
    %v2109 = vunpack.c.l.b16 %v958
    %v2110 = vunpack.c.h.b16 %v958
    %v2111 = vunpack.c.l.b16 %v959
    %v2112 = vunpack.c.h.b16 %v959
    %v2113 = vunpack.c.l.b16 %v960
    %v2114 = vunpack.c.h.b16 %v960
    %v2115 = vunpack.c.l.b16 %v961
    %v2116 = vunpack.c.h.b16 %v961
    %v2117 = vunpack.c.l.b16 %v962
    %v2118 = vunpack.c.h.b16 %v962
    %v2119 = vunpack.c.l.b16 %v963
    %v2120 = vunpack.c.h.b16 %v963
    %v2121 = vunpack.c.l.b16 %v964
    %v2122 = vunpack.c.h.b16 %v964
    %v2123 = vunpack.c.l.b16 %v965
    %v2124 = vunpack.c.h.b16 %v965
    %v2125 = vunpack.c.l.b16 %v966
    %v2126 = vunpack.c.h.b16 %v966
    %v2127 = vunpack.c.l.b16 %v967
    %v2128 = vunpack.c.h.b16 %v967
    %v2129 = vunpack.c.l.b16 %v968
    %v2130 = vunpack.c.h.b16 %v968
    %v2131 = vunpack.c.l.b16 %v969
    %v2132 = vunpack.c.h.b16 %v969
    %v2133 = vunpack.c.l.b16 %v970
    %v2134 = vunpack.c.h.b16 %v970
    %v2135 = vunpack.c.l.b16 %v971
    %v2136 = vunpack.c.h.b16 %v971
    %v2137 = vunpack.c.l.b16 %v972
    %v2138 = vunpack.c.h.b16 %v972
    %v2139 = vunpack.c.l.b16 %v973
    %v2140 = vunpack.c.h.b16 %v973
    %v2141 = vunpack.c.l.b16 %v974
    %v2142 = vunpack.c.h.b16 %v974
    %v2143 = vunpack.c.l.b16 %v975
    %v2144 = vunpack.c.h.b16 %v975
    %v2145 = vunpack.c.l.b16 %v976
    %v2146 = vunpack.c.h.b16 %v976
    %v2147 = vunpack.c.l.b16 %v977
    %v2148 = vunpack.c.h.b16 %v977
    %v2149 = vunpack.c.l.b16 %v978
    %v2150 = vunpack.c.h.b16 %v978
    %v2151 = vunpack.c.l.b16 %v979
    %v2152 = vunpack.c.h.b16 %v979
    %v2153 = vunpack.c.l.b16 %v980
    %v2154 = vunpack.c.h.b16 %v980
    %v2155 = vunpack.c.l.b16 %v981
    %v2156 = vunpack.c.h.b16 %v981
    %v2157 = vunpack.c.l.b16 %v982
    %v2158 = vunpack.c.h.b16 %v982
    %v2159 = vunpack.c.l.b16 %v983
    %v2160 = vunpack.c.h.b16 %v983
    %v2161 = vunpack.c.l.b16 %v984
    %v2162 = vunpack.c.h.b16 %v984
    %v2163 = vunpack.c.l.b16 %v985
    %v2164 = vunpack.c.h.b16 %v985
    %v2165 = vunpack.c.l.b16 %v986
    %v2166 = vunpack.c.h.b16 %v986
    %v2167 = vunpack.c.l.b16 %v987
    %v2168 = vunpack.c.h.b16 %v987
    %v2169 = vunpack.c.l.b16 %v988
    %v2170 = vunpack.c.h.b16 %v988
    %v2171 = vunpack.c.l.b16 %v989
    %v2172 = vunpack.c.h.b16 %v989
    %v2173 = vunpack.c.l.b16 %v990
    %v2174 = vunpack.c.h.b16 %v990
    %v2175 = vunpack.c.l.b16 %v991
    %v2176 = vunpack.c.h.b16 %v991
    %v2177 = vunpack.c.l.b16 %v992
    %v2178 = vunpack.c.h.b16 %v992
    %v2179 = vunpack.c.l.b16 %v993
    %v2180 = vunpack.c.h.b16 %v993
    %v2181 = vunpack.c.l.b16 %v994
    %v2182 = vunpack.c.h.b16 %v994
    %v2183 = vunpack.c.l.b16 %v995
    %v2184 = vunpack.c.h.b16 %v995
    %v2185 = vunpack.c.l.b16 %v996
    %v2186 = vunpack.c.h.b16 %v996
    %v2187 = vunpack.c.l.b16 %v997
    %v2188 = vunpack.c.h.b16 %v997
    %v2189 = vunpack.c.l.b16 %v998
    %v2190 = vunpack.c.h.b16 %v998
    %v2191 = vunpack.c.l.b16 %v999
    %v2192 = vunpack.c.h.b16 %v999
    %v2193 = vunpack.c.l.b16 %v1000
    %v2194 = vunpack.c.h.b16 %v1000
    %v2195 = vunpack.c.l.b16 %v1001
    %v2196 = vunpack.c.h.b16 %v1001
    %v2197 = vunpack.c.l.b16 %v1002
    %v2198 = vunpack.c.h.b16 %v1002
    %v2199 = vunpack.c.l.b16 %v1003
    %v2200 = vunpack.c.h.b16 %v1003
    %v2201 = vunpack.c.l.b16 %v1004
    %v2202 = vunpack.c.h.b16 %v1004
    %v2203 = vunpack.c.l.b16 %v1005
    %v2204 = vunpack.c.h.b16 %v1005
    %v2205 = vunpack.c.l.b16 %v1006
    %v2206 = vunpack.c.h.b16 %v1006
    %v2207 = vunpack.c.l.b16 %v1007
    %v2208 = vunpack.c.h.b16 %v1007
    %v2209 = vunpack.c.l.b16 %v1008
    %v2210 = vunpack.c.h.b16 %v1008
    %v2211 = vunpack.c.l.b16 %v1009
    %v2212 = vunpack.c.h.b16 %v1009
    %v2213 = vunpack.c.l.b16 %v1010
    %v2214 = vunpack.c.h.b16 %v1010
    %v2215 = vunpack.c.l.b16 %v1011
    %v2216 = vunpack.c.h.b16 %v1011
    %v2217 = vunpack.c.l.b16 %v1012
    %v2218 = vunpack.c.h.b16 %v1012
    %v2219 = vunpack.c.l.b16 %v1013
    %v2220 = vunpack.c.h.b16 %v1013
    %v2221 = vunpack.c.l.b16 %v1014
    %v2222 = vunpack.c.h.b16 %v1014
    %v2223 = vunpack.c.l.b16 %v1015
    %v2224 = vunpack.c.h.b16 %v1015
    %v2225 = vunpack.c.l.b16 %v1016
    %v2226 = vunpack.c.h.b16 %v1016
    %v2227 = vunpack.c.l.b16 %v1017
    %v2228 = vunpack.c.h.b16 %v1017
    %v2229 = vunpack.c.l.b16 %v1018
    %v2230 = vunpack.c.h.b16 %v1018
    %v2231 = vunpack.c.l.b16 %v1019
    %v2232 = vunpack.c.h.b16 %v1019
    %v2233 = vunpack.c.l.b16 %v1020
    %v2234 = vunpack.c.h.b16 %v1020
    %v2235 = vunpack.c.l.b16 %v1021
    %v2236 = vunpack.c.h.b16 %v1021
    %v2237 = vunpack.c.l.b16 %v1022
    %v2238 = vunpack.c.h.b16 %v1022
    %v2239 = vunpack.c.l.b16 %v1023
    %v2240 = vunpack.c.h.b16 %v1023
    %v2241 = vunpack.c.l.b16 %v1024
    %v2242 = vunpack.c.h.b16 %v1024
    %v2243 = vunpack.c.l.b16 %v1025
    %v2244 = vunpack.c.h.b16 %v1025
    %v2245 = vunpack.c.l.b16 %v1026
    %v2246 = vunpack.c.h.b16 %v1026
    %v2247 = vunpack.c.l.b16 %v1027
    %v2248 = vunpack.c.h.b16 %v1027
    %v2249 = vunpack.c.l.b16 %v1028
    %v2250 = vunpack.c.h.b16 %v1028
    %v2251 = vunpack.c.l.b16 %v1029
    %v2252 = vunpack.c.h.b16 %v1029
    %v2253 = vunpack.c.l.b16 %v1030
    %v2254 = vunpack.c.h.b16 %v1030
    %v2255 = vunpack.c.l.b16 %v1031
    %v2256 = vunpack.c.h.b16 %v1031
    %v2257 = vunpack.c.l.b16 %v1032
    %v2258 = vunpack.c.h.b16 %v1032
    %v2259 = vunpack.c.l.b16 %v1033
    %v2260 = vunpack.c.h.b16 %v1033
    %v2261 = vunpack.c.l.b16 %v1034
    %v2262 = vunpack.c.h.b16 %v1034
    %v2263 = vunpack.c.l.b16 %v1035
    %v2264 = vunpack.c.h.b16 %v1035
    %v2265 = vunpack.c.l.b16 %v1036
    %v2266 = vunpack.c.h.b16 %v1036
    %v2267 = vunpack.c.l.b16 %v1037
    %v2268 = vunpack.c.h.b16 %v1037
    %v2269 = vunpack.c.l.b16 %v1038
    %v2270 = vunpack.c.h.b16 %v1038
    %v2271 = vunpack.c.l.b16 %v1039
    %v2272 = vunpack.c.h.b16 %v1039
    %v2273 = vunpack.c.l.b16 %v1040
    %v2274 = vunpack.c.h.b16 %v1040
    %v2275 = vunpack.c.l.b16 %v1041
    %v2276 = vunpack.c.h.b16 %v1041
    %v2277 = vunpack.c.l.b16 %v1042
    %v2278 = vunpack.c.h.b16 %v1042
    %v2279 = vunpack.c.l.b16 %v1043
    %v2280 = vunpack.c.h.b16 %v1043
    %v2281 = vunpack.c.l.b16 %v1044
    %v2282 = vunpack.c.h.b16 %v1044
    %v2283 = vunpack.c.l.b16 %v1045
    %v2284 = vunpack.c.h.b16 %v1045
    %v2285 = vunpack.c.l.b16 %v1046
    %v2286 = vunpack.c.h.b16 %v1046
    %v2287 = vunpack.c.l.b16 %v1047
    %v2288 = vunpack.c.h.b16 %v1047
    %v2289 = vunpack.c.l.b16 %v1048
    %v2290 = vunpack.c.h.b16 %v1048
    %v2291 = vunpack.c.l.b16 %v1049
    %v2292 = vunpack.c.h.b16 %v1049
    %v2293 = vunpack.c.l.b16 %v1050
    %v2294 = vunpack.c.h.b16 %v1050
    %v2295 = vunpack.c.l.b16 %v1051
    %v2296 = vunpack.c.h.b16 %v1051
    %v2297 = vunpack.c.l.b16 %v1052
    %v2298 = vunpack.c.h.b16 %v1052
    %v2299 = vunpack.c.l.b16 %v1053
    %v2300 = vunpack.c.h.b16 %v1053
    %v2301 = vunpack.c.l.b16 %v1054
    %v2302 = vunpack.c.h.b16 %v1054
    %v2303 = vunpack.c.l.b16 %v1055
    %v2304 = vunpack.c.h.b16 %v1055
    %v2305 = vunpack.c.l.b16 %v1056
    %v2306 = vunpack.c.h.b16 %v1056
    %v2307 = vunpack.c.l.b16 %v1057
    %v2308 = vunpack.c.h.b16 %v1057
    %v2309 = vunpack.c.l.b16 %v1058
    %v2310 = vunpack.c.h.b16 %v1058
    %v2311 = vunpack.c.l.b16 %v1059
    %v2312 = vunpack.c.h.b16 %v1059
    %v2313 = vunpack.c.l.b16 %v1060
    %v2314 = vunpack.c.h.b16 %v1060
    %v2315 = vunpack.c.l.b16 %v1061
    %v2316 = vunpack.c.h.b16 %v1061
    %v2317 = vunpack.c.l.b16 %v1062
    %v2318 = vunpack.c.h.b16 %v1062
    %v2319 = vunpack.c.l.b16 %v1063
    %v2320 = vunpack.c.h.b16 %v1063
    %v2321 = vunpack.c.l.b16 %v1064
    %v2322 = vunpack.c.h.b16 %v1064
    %v2323 = vunpack.c.l.b16 %v1065
    %v2324 = vunpack.c.h.b16 %v1065
    %v2325 = vunpack.c.l.b16 %v1066
    %v2326 = vunpack.c.h.b16 %v1066
    %v2327 = vunpack.c.l.b16 %v1067
    %v2328 = vunpack.c.h.b16 %v1067
    %v2329 = vunpack.c.l.b16 %v1068
    %v2330 = vunpack.c.h.b16 %v1068
    %v2331 = vunpack.c.l.b16 %v1069
    %v2332 = vunpack.c.h.b16 %v1069
    %v2333 = vunpack.c.l.b16 %v1070
    %v2334 = vunpack.c.h.b16 %v1070
    %v2335 = vunpack.c.l.b16 %v1071
    %v2336 = vunpack.c.h.b16 %v1071
    %v2337 = vunpack.c.l.b16 %v1072
    %v2338 = vunpack.c.h.b16 %v1072
    %v2339 = vunpack.c.l.b16 %v1073
    %v2340 = vunpack.c.h.b16 %v1073
    %v2341 = vunpack.c.l.b16 %v1074
    %v2342 = vunpack.c.h.b16 %v1074
    %v2343 = vunpack.c.l.b16 %v1075
    %v2344 = vunpack.c.h.b16 %v1075
    %v2345 = vunpack.c.l.b16 %v1076
    %v2346 = vunpack.c.h.b16 %v1076
    %v2347 = vunpack.c.l.b16 %v1077
    %v2348 = vunpack.c.h.b16 %v1077
    %v2349 = vunpack.c.l.b16 %v1078
    %v2350 = vunpack.c.h.b16 %v1078
    %v2351 = vunpack.c.l.b16 %v1079
    %v2352 = vunpack.c.h.b16 %v1079
    %v2353 = vunpack.c.l.b16 %v1080
    %v2354 = vunpack.c.h.b16 %v1080
    %v2355 = vunpack.c.l.b16 %v1081
    %v2356 = vunpack.c.h.b16 %v1081
    %v2357 = vunpack.c.l.b16 %v1082
    %v2358 = vunpack.c.h.b16 %v1082
    %v2359 = vunpack.c.l.b16 %v1083
    %v2360 = vunpack.c.h.b16 %v1083
    %v2361 = vunpack.c.l.b16 %v1084
    %v2362 = vunpack.c.h.b16 %v1084
    %v2363 = vunpack.c.l.b16 %v1085
    %v2364 = vunpack.c.h.b16 %v1085
    %v2365 = vunpack.c.l.b16 %v1086
    %v2366 = vunpack.c.h.b16 %v1086
    %v2367 = vunpack.c.l.b16 %v1087
    %v2368 = vunpack.c.h.b16 %v1087
    %v2369 = vunpack.c.l.b16 %v1088
    %v2370 = vunpack.c.h.b16 %v1088
    %v2371 = vunpack.c.l.b16 %v1089
    %v2372 = vunpack.c.h.b16 %v1089
    %v2373 = vunpack.c.l.b16 %v1090
    %v2374 = vunpack.c.h.b16 %v1090
    %v2375 = vunpack.c.l.b16 %v1091
    %v2376 = vunpack.c.h.b16 %v1091
    %v2377 = vunpack.c.l.b16 %v1092
    %v2378 = vunpack.c.h.b16 %v1092
    %v2379 = vunpack.c.l.b16 %v1093
    %v2380 = vunpack.c.h.b16 %v1093
    %v2381 = vunpack.c.l.b16 %v1094
    %v2382 = vunpack.c.h.b16 %v1094
    %v2383 = vunpack.c.l.b16 %v1095
    %v2384 = vunpack.c.h.b16 %v1095
    %v2385 = vunpack.c.l.b16 %v1096
    %v2386 = vunpack.c.h.b16 %v1096
    %v2387 = vunpack.c.l.b16 %v1097
    %v2388 = vunpack.c.h.b16 %v1097
    %v2389 = vunpack.c.l.b16 %v1098
    %v2390 = vunpack.c.h.b16 %v1098
    %v2391 = vunpack.c.l.b16 %v1099
    %v2392 = vunpack.c.h.b16 %v1099
    %v2393 = vunpack.c.l.b16 %v1100
    %v2394 = vunpack.c.h.b16 %v1100
    %v2395 = vunpack.c.l.b16 %v1101
    %v2396 = vunpack.c.h.b16 %v1101
    %v2397 = vunpack.c.l.b16 %v1102
    %v2398 = vunpack.c.h.b16 %v1102
    %v2399 = vunpack.c.l.b16 %v1103
    %v2400 = vunpack.c.h.b16 %v1103
    %v2401 = vunpack.c.l.b16 %v1104
    %v2402 = vunpack.c.h.b16 %v1104
    %v2403 = vunpack.c.l.b16 %v1105
    %v2404 = vunpack.c.h.b16 %v1105
    %v2405 = vunpack.c.l.b16 %v1106
    %v2406 = vunpack.c.h.b16 %v1106
    %v2407 = vunpack.c.l.b16 %v1107
    %v2408 = vunpack.c.h.b16 %v1107
    %v2409 = vunpack.c.l.b16 %v1108
    %v2410 = vunpack.c.h.b16 %v1108
    %v2411 = vunpack.c.l.b16 %v1109
    %v2412 = vunpack.c.h.b16 %v1109
    %v2413 = vunpack.c.l.b16 %v1110
    %v2414 = vunpack.c.h.b16 %v1110
    %v2415 = vunpack.c.l.b16 %v1111
    %v2416 = vunpack.c.h.b16 %v1111
    %v2417 = vunpack.c.l.b16 %v1112
    %v2418 = vunpack.c.h.b16 %v1112
    %v2419 = vunpack.c.l.b16 %v1113
    %v2420 = vunpack.c.h.b16 %v1113
    %v2421 = vunpack.c.l.b16 %v1114
    %v2422 = vunpack.c.h.b16 %v1114
    %v2423 = vunpack.c.l.b16 %v1115
    %v2424 = vunpack.c.h.b16 %v1115
    %v2425 = vunpack.c.l.b16 %v1116
    %v2426 = vunpack.c.h.b16 %v1116
    %v2427 = vunpack.c.l.b16 %v1117
    %v2428 = vunpack.c.h.b16 %v1117
    %v2429 = vunpack.c.l.b16 %v1118
    %v2430 = vunpack.c.h.b16 %v1118
    %v2431 = vunpack.c.l.b16 %v1119
    %v2432 = vunpack.c.h.b16 %v1119
    %v2433 = vunpack.c.l.b16 %v1120
    %v2434 = vunpack.c.h.b16 %v1120
    %v2435 = vunpack.c.l.b16 %v1121
    %v2436 = vunpack.c.h.b16 %v1121
    %v2437 = vunpack.c.l.b16 %v1122
    %v2438 = vunpack.c.h.b16 %v1122
    %v2439 = vunpack.c.l.b16 %v1123
    %v2440 = vunpack.c.h.b16 %v1123
    %v2441 = vunpack.c.l.b16 %v1124
    %v2442 = vunpack.c.h.b16 %v1124
    %v2443 = vunpack.c.l.b16 %v1125
    %v2444 = vunpack.c.h.b16 %v1125
    %v2445 = vunpack.c.l.b16 %v1126
    %v2446 = vunpack.c.h.b16 %v1126
    %v2447 = vunpack.c.l.b16 %v1127
    %v2448 = vunpack.c.h.b16 %v1127
    %v2449 = vunpack.c.l.b16 %v1128
    %v2450 = vunpack.c.h.b16 %v1128
    %v2451 = vunpack.c.l.b16 %v1129
    %v2452 = vunpack.c.h.b16 %v1129
    %v2453 = vunpack.c.l.b16 %v1130
    %v2454 = vunpack.c.h.b16 %v1130
    %v2455 = vunpack.c.l.b16 %v1131
    %v2456 = vunpack.c.h.b16 %v1131
    %v2457 = vunpack.c.l.b16 %v1132
    %v2458 = vunpack.c.h.b16 %v1132
    %v2459 = vunpack.c.l.b16 %v1133
    %v2460 = vunpack.c.h.b16 %v1133
    %v2461 = vunpack.c.l.b16 %v1134
    %v2462 = vunpack.c.h.b16 %v1134
    %v2463 = vunpack.c.l.b16 %v1135
    %v2464 = vunpack.c.h.b16 %v1135
    %v2465 = vunpack.c.l.b16 %v1136
    %v2466 = vunpack.c.h.b16 %v1136
    %v2467 = vunpack.c.l.b16 %v1137
    %v2468 = vunpack.c.h.b16 %v1137
    %v2469 = vunpack.c.l.b16 %v1138
    %v2470 = vunpack.c.h.b16 %v1138
    %v2471 = vunpack.c.l.b16 %v1139
    %v2472 = vunpack.c.h.b16 %v1139
    %v2473 = vunpack.c.l.b16 %v1140
    %v2474 = vunpack.c.h.b16 %v1140
    %v2475 = vunpack.c.l.b16 %v1141
    %v2476 = vunpack.c.h.b16 %v1141
    %v2477 = vunpack.c.l.b16 %v1142
    %v2478 = vunpack.c.h.b16 %v1142
    %v2479 = vunpack.c.l.b16 %v1143
    %v2480 = vunpack.c.h.b16 %v1143
    %v2481 = vunpack.c.l.b16 %v1144
    %v2482 = vunpack.c.h.b16 %v1144
    %v2483 = vunpack.c.l.b16 %v1145
    %v2484 = vunpack.c.h.b16 %v1145
    %v2485 = vunpack.c.l.b16 %v1146
    %v2486 = vunpack.c.h.b16 %v1146
    %v2487 = vunpack.c.l.b16 %v1147
    %v2488 = vunpack.c.h.b16 %v1147
    %v2489 = vunpack.c.l.b16 %v1148
    %v2490 = vunpack.c.h.b16 %v1148
    %v2491 = vunpack.c.l.b16 %v1149
    %v2492 = vunpack.c.h.b16 %v1149
    %v2493 = vunpack.c.l.b16 %v1150
    %v2494 = vunpack.c.h.b16 %v1150
    %v2495 = vunpack.c.l.b16 %v1151
    %v2496 = vunpack.c.h.b16 %v1151
    %v2497 = vunpack.c.l.b16 %v1152
    %v2498 = vunpack.c.h.b16 %v1152
    %v2499 = vunpack.c.l.b16 %v1153
    %v2500 = vunpack.c.h.b16 %v1153
    %v2501 = vunpack.c.l.b16 %v1154
    %v2502 = vunpack.c.h.b16 %v1154
    %v2503 = vunpack.c.l.b16 %v1155
    %v2504 = vunpack.c.h.b16 %v1155
    %v2505 = vunpack.c.l.b16 %v1156
    %v2506 = vunpack.c.h.b16 %v1156
    %v2507 = vunpack.c.l.b16 %v1157
    %v2508 = vunpack.c.h.b16 %v1157
    %v2509 = vunpack.c.l.b16 %v1158
    %v2510 = vunpack.c.h.b16 %v1158
    %v2511 = vunpack.c.l.b16 %v1159
    %v2512 = vunpack.c.h.b16 %v1159
    %v2513 = vunpack.c.l.b16 %v1160
    %v2514 = vunpack.c.h.b16 %v1160
    %v2515 = vunpack.c.l.b16 %v1161
    %v2516 = vunpack.c.h.b16 %v1161
    %v2517 = vunpack.c.l.b16 %v1162
    %v2518 = vunpack.c.h.b16 %v1162
    %v2519 = vunpack.c.l.b16 %v1163
    %v2520 = vunpack.c.h.b16 %v1163
    %v2521 = vunpack.c.l.b16 %v1164
    %v2522 = vunpack.c.h.b16 %v1164
    %v2523 = vunpack.c.l.b16 %v1165
    %v2524 = vunpack.c.h.b16 %v1165
    %v2525 = vunpack.c.l.b16 %v1166
    %v2526 = vunpack.c.h.b16 %v1166
    %v2527 = vunpack.c.l.b16 %v1167
    %v2528 = vunpack.c.h.b16 %v1167
    %v2529 = vunpack.c.l.b16 %v1168
    %v2530 = vunpack.c.h.b16 %v1168
    %v2531 = vunpack.c.l.b16 %v1169
    %v2532 = vunpack.c.h.b16 %v1169
    %v2533 = vunpack.c.l.b16 %v1170
    %v2534 = vunpack.c.h.b16 %v1170
    %v2535 = vunpack.c.l.b16 %v1171
    %v2536 = vunpack.c.h.b16 %v1171
    %v2537 = vunpack.c.l.b16 %v1172
    %v2538 = vunpack.c.h.b16 %v1172
    %v2539 = vunpack.c.l.b16 %v1173
    %v2540 = vunpack.c.h.b16 %v1173
    %v2541 = vunpack.c.l.b16 %v1174
    %v2542 = vunpack.c.h.b16 %v1174
    %v2543 = vunpack.c.l.b16 %v1175
    %v2544 = vunpack.c.h.b16 %v1175
    %v2545 = vunpack.c.l.b16 %v1176
    %v2546 = vunpack.c.h.b16 %v1176
    %v2547 = vunpack.c.l.b16 %v1177
    %v2548 = vunpack.c.h.b16 %v1177
    %v2549 = vunpack.c.l.b16 %v1178
    %v2550 = vunpack.c.h.b16 %v1178
    %v2551 = vunpack.c.l.b16 %v1179
    %v2552 = vunpack.c.h.b16 %v1179
    %v2553 = vunpack.c.l.b16 %v1180
    %v2554 = vunpack.c.h.b16 %v1180
    %v2555 = vunpack.c.l.b16 %v1181
    %v2556 = vunpack.c.h.b16 %v1181
    %v2557 = vunpack.c.l.b16 %v1182
    %v2558 = vunpack.c.h.b16 %v1182
    %v2559 = vunpack.c.l.b16 %v1183
    %v2560 = vunpack.c.h.b16 %v1183
    %v2561 = vunpack.c.l.b16 %v1184
    %v2562 = vunpack.c.h.b16 %v1184
    %v2563 = vunpack.c.l.b16 %v1185
    %v2564 = vunpack.c.h.b16 %v1185
    %v2565 = vunpack.c.l.b16 %v1186
    %v2566 = vunpack.c.h.b16 %v1186
    %v2567 = vunpack.c.l.b16 %v1187
    %v2568 = vunpack.c.h.b16 %v1187
    %v2569 = vunpack.c.l.b16 %v1188
    %v2570 = vunpack.c.h.b16 %v1188
    %v2571 = vunpack.c.l.b16 %v1189
    %v2572 = vunpack.c.h.b16 %v1189
    %v2573 = vunpack.c.l.b16 %v1190
    %v2574 = vunpack.c.h.b16 %v1190
    %v2575 = vunpack.c.l.b16 %v1191
    %v2576 = vunpack.c.h.b16 %v1191
    %v2577 = vunpack.c.l.b16 %v1192
    %v2578 = vunpack.c.h.b16 %v1192
    %v2579 = vunpack.c.l.b16 %v1193
    %v2580 = vunpack.c.h.b16 %v1193
    %v2581 = vunpack.c.l.b16 %v1194
    %v2582 = vunpack.c.h.b16 %v1194
    %v2583 = vunpack.c.l.b16 %v1195
    %v2584 = vunpack.c.h.b16 %v1195
    %v2585 = vunpack.c.l.b16 %v1196
    %v2586 = vunpack.c.h.b16 %v1196
    %v2587 = vunpack.c.l.b16 %v1197
    %v2588 = vunpack.c.h.b16 %v1197
    %v2589 = vunpack.c.l.b16 %v1198
    %v2590 = vunpack.c.h.b16 %v1198
    %v2591 = vunpack.c.l.b16 %v1199
    %v2592 = vunpack.c.h.b16 %v1199
    %v2593 = vunpack.c.l.b16 %v1200
    %v2594 = vunpack.c.h.b16 %v1200
    %v2595 = vunpack.c.l.b16 %v1201
    %v2596 = vunpack.c.h.b16 %v1201
    %v2597 = vunpack.c.l.b16 %v1202
    %v2598 = vunpack.c.h.b16 %v1202
    %v2599 = vunpack.c.l.b16 %v1203
    %v2600 = vunpack.c.h.b16 %v1203
    %v2601 = vunpack.c.l.b16 %v1204
    %v2602 = vunpack.c.h.b16 %v1204
    %v2603 = vunpack.c.l.b16 %v1205
    %v2604 = vunpack.c.h.b16 %v1205
    %v2605 = vunpack.c.l.b16 %v1206
    %v2606 = vunpack.c.h.b16 %v1206
    %v2607 = vunpack.c.l.b16 %v1207
    %v2608 = vunpack.c.h.b16 %v1207
    %v2609 = vunpack.c.l.b16 %v1208
    %v2610 = vunpack.c.h.b16 %v1208
    %v2611 = vunpack.c.l.b16 %v1209
    %v2612 = vunpack.c.h.b16 %v1209
    %v2613 = vunpack.c.l.b16 %v1210
    %v2614 = vunpack.c.h.b16 %v1210
    %v2615 = vunpack.c.l.b16 %v1211
    %v2616 = vunpack.c.h.b16 %v1211
    %v2617 = vunpack.c.l.b16 %v1212
    %v2618 = vunpack.c.h.b16 %v1212
    %v2619 = vunpack.c.l.b16 %v1213
    %v2620 = vunpack.c.h.b16 %v1213
    %v2621 = vunpack.c.l.b16 %v1214
    %v2622 = vunpack.c.h.b16 %v1214
    %v2623 = vunpack.c.l.b16 %v1215
    %v2624 = vunpack.c.h.b16 %v1215
    %v2625 = vunpack.c.l.b16 %v1216
    %v2626 = vunpack.c.h.b16 %v1216
    %v2627 = vunpack.c.l.b16 %v1217
    %v2628 = vunpack.c.h.b16 %v1217
    %v2629 = vunpack.c.l.b16 %v1218
    %v2630 = vunpack.c.h.b16 %v1218
    %v2631 = vunpack.c.l.b16 %v1219
    %v2632 = vunpack.c.h.b16 %v1219
    %v2633 = vunpack.c.l.b16 %v1220
    %v2634 = vunpack.c.h.b16 %v1220
    %v2635 = vunpack.c.l.b16 %v1221
    %v2636 = vunpack.c.h.b16 %v1221
    %v2637 = vunpack.c.l.b16 %v1222
    %v2638 = vunpack.c.h.b16 %v1222
    %v2639 = vunpack.c.l.b16 %v1223
    %v2640 = vunpack.c.h.b16 %v1223
    %v2641 = vunpack.c.l.b16 %v1224
    %v2642 = vunpack.c.h.b16 %v1224
    %v2643 = vunpack.c.l.b16 %v1225
    %v2644 = vunpack.c.h.b16 %v1225
    %v2645 = vunpack.c.l.b16 %v1226
    %v2646 = vunpack.c.h.b16 %v1226
    %v2647 = vunpack.c.l.b16 %v1227
    %v2648 = vunpack.c.h.b16 %v1227
    %v2649 = vunpack.c.l.b16 %v1228
    %v2650 = vunpack.c.h.b16 %v1228
    %v2651 = vunpack.c.l.b16 %v1229
    %v2652 = vunpack.c.h.b16 %v1229
    %v2653 = vunpack.c.l.b16 %v1230
    %v2654 = vunpack.c.h.b16 %v1230
    %v2655 = vunpack.c.l.b16 %v1231
    %v2656 = vunpack.c.h.b16 %v1231
    %v2657 = vunpack.c.l.b16 %v1232
    %v2658 = vunpack.c.h.b16 %v1232
    %v2659 = vunpack.c.l.b16 %v1233
    %v2660 = vunpack.c.h.b16 %v1233
    %v2661 = vunpack.c.l.b16 %v1234
    %v2662 = vunpack.c.h.b16 %v1234
    %v2663 = vunpack.c.l.b16 %v1235
    %v2664 = vunpack.c.h.b16 %v1235
    %v2665 = vunpack.c.l.b16 %v1236
    %v2666 = vunpack.c.h.b16 %v1236
    %v2667 = vunpack.c.l.b16 %v1237
    %v2668 = vunpack.c.h.b16 %v1237
    %v2669 = vunpack.c.l.b16 %v1238
    %v2670 = vunpack.c.h.b16 %v1238
    %v2671 = vunpack.c.l.b16 %v1239
    %v2672 = vunpack.c.h.b16 %v1239
    %v2673 = vunpack.c.l.b16 %v1240
    %v2674 = vunpack.c.h.b16 %v1240
    %v2675 = vunpack.c.l.b16 %v1241
    %v2676 = vunpack.c.h.b16 %v1241
    %v2677 = vunpack.c.l.b16 %v1242
    %v2678 = vunpack.c.h.b16 %v1242
    %v2679 = vunpack.c.l.b16 %v1243
    %v2680 = vunpack.c.h.b16 %v1243
    %v2681 = vunpack.c.l.b16 %v1244
    %v2682 = vunpack.c.h.b16 %v1244
    %v2683 = vunpack.c.l.b16 %v1245
    %v2684 = vunpack.c.h.b16 %v1245
    %v2685 = vunpack.c.l.b16 %v1246
    %v2686 = vunpack.c.h.b16 %v1246
    %v2687 = vunpack.c.l.b16 %v1247
    %v2688 = vunpack.c.h.b16 %v1247
    %v2689 = vunpack.c.l.b16 %v1248
    %v2690 = vunpack.c.h.b16 %v1248
    %v2691 = vunpack.c.l.b16 %v1249
    %v2692 = vunpack.c.h.b16 %v1249
    %v2693 = vunpack.c.l.b16 %v1250
    %v2694 = vunpack.c.h.b16 %v1250
    %v2695 = vunpack.c.l.b16 %v1251
    %v2696 = vunpack.c.h.b16 %v1251
    %v2697 = vunpack.c.l.b16 %v1252
    %v2698 = vunpack.c.h.b16 %v1252
    %v2699 = vunpack.c.l.b16 %v1253
    %v2700 = vunpack.c.h.b16 %v1253
    %v2701 = vunpack.c.l.b16 %v1254
    %v2702 = vunpack.c.h.b16 %v1254
    %v2703 = vunpack.c.l.b16 %v1255
    %v2704 = vunpack.c.h.b16 %v1255
    %v2705 = vunpack.c.l.b16 %v1256
    %v2706 = vunpack.c.h.b16 %v1256
    %v2707 = vunpack.c.l.b16 %v1257
    %v2708 = vunpack.c.h.b16 %v1257
    %v2709 = vunpack.c.l.b16 %v1258
    %v2710 = vunpack.c.h.b16 %v1258
    %v2711 = vunpack.c.l.b16 %v1259
    %v2712 = vunpack.c.h.b16 %v1259
    %v2713 = vunpack.c.l.b16 %v1260
    %v2714 = vunpack.c.h.b16 %v1260
    %v2715 = vunpack.c.l.b16 %v1261
    %v2716 = vunpack.c.h.b16 %v1261
    %v2717 = vunpack.c.l.b16 %v1262
    %v2718 = vunpack.c.h.b16 %v1262
    %v2719 = vunpack.c.l.b16 %v1263
    %v2720 = vunpack.c.h.b16 %v1263
    %v2721 = vunpack.c.l.b16 %v1264
    %v2722 = vunpack.c.h.b16 %v1264
    %v2723 = vunpack.c.l.b16 %v1265
    %v2724 = vunpack.c.h.b16 %v1265
    %v2725 = vunpack.c.l.b16 %v1266
    %v2726 = vunpack.c.h.b16 %v1266
    %v2727 = vunpack.c.l.b16 %v1267
    %v2728 = vunpack.c.h.b16 %v1267
    %v2729 = vunpack.c.l.b16 %v1268
    %v2730 = vunpack.c.h.b16 %v1268
    %v2731 = vunpack.c.l.b16 %v1269
    %v2732 = vunpack.c.h.b16 %v1269
    %v2733 = vunpack.c.l.b16 %v1270
    %v2734 = vunpack.c.h.b16 %v1270
    %v2735 = vunpack.c.l.b16 %v1271
    %v2736 = vunpack.c.h.b16 %v1271
    %v2737 = vunpack.c.l.b16 %v1272
    %v2738 = vunpack.c.h.b16 %v1272
    %v2739 = vunpack.c.l.b16 %v1273
    %v2740 = vunpack.c.h.b16 %v1273
    %v2741 = vunpack.c.l.b16 %v1274
    %v2742 = vunpack.c.h.b16 %v1274
    %v2743 = vunpack.c.l.b16 %v1275
    %v2744 = vunpack.c.h.b16 %v1275
    %v2745 = vunpack.c.l.b16 %v1276
    %v2746 = vunpack.c.h.b16 %v1276
    %v2747 = vunpack.c.l.b16 %v1277
    %v2748 = vunpack.c.h.b16 %v1277
    %v2749 = vunpack.c.l.b16 %v1278
    %v2750 = vunpack.c.h.b16 %v1278
    %v2751 = vunpack.c.l.b16 %v1279
    %v2752 = vunpack.c.h.b16 %v1279
    %v2753 = vunpack.c.l.b16 %v1280
    %v2754 = vunpack.c.h.b16 %v1280
    %v2755 = vunpack.c.l.b16 %v1281
    %v2756 = vunpack.c.h.b16 %v1281
    %v2757 = vunpack.c.l.b16 %v1282
    %v2758 = vunpack.c.h.b16 %v1282
    %v2759 = vunpack.c.l.b16 %v1283
    %v2760 = vunpack.c.h.b16 %v1283
    %v2761 = vunpack.c.l.b16 %v1284
    %v2762 = vunpack.c.h.b16 %v1284
    %v2763 = vunpack.c.l.b16 %v1285
    %v2764 = vunpack.c.h.b16 %v1285
    %v2765 = vunpack.c.l.b16 %v1286
    %v2766 = vunpack.c.h.b16 %v1286
    %v2767 = vunpack.c.l.b16 %v1287
    %v2768 = vunpack.c.h.b16 %v1287
    %v2769 = vunpack.c.l.b16 %v1288
    %v2770 = vunpack.c.h.b16 %v1288
    %v2771 = vunpack.c.l.b16 %v1289
    %v2772 = vunpack.c.h.b16 %v1289
    %v2773 = vunpack.c.l.b16 %v1290
    %v2774 = vunpack.c.h.b16 %v1290
    %v2775 = vunpack.c.l.b16 %v1291
    %v2776 = vunpack.c.h.b16 %v1291
    %v2777 = vunpack.c.l.b16 %v1292
    %v2778 = vunpack.c.h.b16 %v1292
    %v2779 = vunpack.c.l.b16 %v1293
    %v2780 = vunpack.c.h.b16 %v1293
    %v2781 = vunpack.c.l.b16 %v1294
    %v2782 = vunpack.c.h.b16 %v1294
    %v2783 = vunpack.c.l.b16 %v1295
    %v2784 = vunpack.c.h.b16 %v1295
    %v2785 = vunpack.c.l.b16 %v1296
    %v2786 = vunpack.c.h.b16 %v1296
    %v2787 = vunpack.c.l.b16 %v1297
    %v2788 = vunpack.c.h.b16 %v1297
    %v2789 = vunpack.c.l.b16 %v1298
    %v2790 = vunpack.c.h.b16 %v1298
    %v2791 = vunpack.c.l.b16 %v1299
    %v2792 = vunpack.c.h.b16 %v1299
    %v2793 = vunpack.c.l.b16 %v1300
    %v2794 = vunpack.c.h.b16 %v1300
    %v2795 = vunpack.c.l.b16 %v1301
    %v2796 = vunpack.c.h.b16 %v1301
    %v2797 = vunpack.c.l.b16 %v1302
    %v2798 = vunpack.c.h.b16 %v1302
    %v2799 = vunpack.c.l.b16 %v1303
    %v2800 = vunpack.c.h.b16 %v1303
    %v2801 = vunpack.c.l.b16 %v1304
    %v2802 = vunpack.c.h.b16 %v1304
    %v2803 = vunpack.c.l.b16 %v1305
    %v2804 = vunpack.c.h.b16 %v1305
    %v2805 = vunpack.c.l.b16 %v1306
    %v2806 = vunpack.c.h.b16 %v1306
    %v2807 = vunpack.c.l.b16 %v1307
    %v2808 = vunpack.c.h.b16 %v1307
    %v2809 = vunpack.c.l.b16 %v1308
    %v2810 = vunpack.c.h.b16 %v1308
    %v2811 = vunpack.c.l.b16 %v1309
    %v2812 = vunpack.c.h.b16 %v1309
    %v2813 = vunpack.c.l.b16 %v1310
    %v2814 = vunpack.c.h.b16 %v1310
    %v2815 = vunpack.c.l.b16 %v1311
    %v2816 = vunpack.c.h.b16 %v1311
    %v2817 = vunpack.c.l.b16 %v1312
    %v2818 = vunpack.c.h.b16 %v1312
    %v2819 = vunpack.c.l.b16 %v1313
    %v2820 = vunpack.c.h.b16 %v1313
    %v2821 = vunpack.c.l.b16 %v1314
    %v2822 = vunpack.c.h.b16 %v1314
    %v2823 = vunpack.c.l.b16 %v1315
    %v2824 = vunpack.c.h.b16 %v1315
    %v2825 = vunpack.c.l.b16 %v1316
    %v2826 = vunpack.c.h.b16 %v1316
    %v2827 = vunpack.c.l.b16 %v1317
    %v2828 = vunpack.c.h.b16 %v1317
    %v2829 = vunpack.c.l.b16 %v1318
    %v2830 = vunpack.c.h.b16 %v1318
    %v2831 = vunpack.c.l.b16 %v1319
    %v2832 = vunpack.c.h.b16 %v1319
    %v2833 = vunpack.c.l.b16 %v1320
    %v2834 = vunpack.c.h.b16 %v1320
    %v2835 = vunpack.c.l.b16 %v1321
    %v2836 = vunpack.c.h.b16 %v1321
    %v2837 = vunpack.c.l.b16 %v1322
    %v2838 = vunpack.c.h.b16 %v1322
    %v2839 = vunpack.c.l.b16 %v1323
    %v2840 = vunpack.c.h.b16 %v1323
    %v2841 = vunpack.c.l.b16 %v1324
    %v2842 = vunpack.c.h.b16 %v1324
    %v2843 = vunpack.c.l.b16 %v1325
    %v2844 = vunpack.c.h.b16 %v1325
    %v2845 = vunpack.c.l.b16 %v1326
    %v2846 = vunpack.c.h.b16 %v1326
    %v2847 = vunpack.c.l.b16 %v1327
    %v2848 = vunpack.c.h.b16 %v1327
    %v2849 = vunpack.c.l.b16 %v1328
    %v2850 = vunpack.c.h.b16 %v1328
    %v2851 = vunpack.c.l.b16 %v1329
    %v2852 = vunpack.c.h.b16 %v1329
    %v2853 = vunpack.c.l.b16 %v1330
    %v2854 = vunpack.c.h.b16 %v1330
    %v2855 = vunpack.c.l.b16 %v1331
    %v2856 = vunpack.c.h.b16 %v1331
    %v2857 = vunpack.c.l.b16 %v1332
    %v2858 = vunpack.c.h.b16 %v1332
    %v2859 = vunpack.c.l.b16 %v1333
    %v2860 = vunpack.c.h.b16 %v1333
    %v2861 = vunpack.c.l.b16 %v1334
    %v2862 = vunpack.c.h.b16 %v1334
    %v2863 = vunpack.c.l.b16 %v1335
    %v2864 = vunpack.c.h.b16 %v1335
    %v2865 = vunpack.c.l.b16 %v1336
    %v2866 = vunpack.c.h.b16 %v1336
    %v2867 = vunpack.c.l.b16 %v1337
    %v2868 = vunpack.c.h.b16 %v1337
    %v2869 = vunpack.c.l.b16 %v1338
    %v2870 = vunpack.c.h.b16 %v1338
    %v2871 = vunpack.c.l.b16 %v1339
    %v2872 = vunpack.c.h.b16 %v1339
    %v2873 = vunpack.c.l.b16 %v1340
    %v2874 = vunpack.c.h.b16 %v1340
    %v2875 = vunpack.c.l.b16 %v1341
    %v2876 = vunpack.c.h.b16 %v1341
    %v2877 = vunpack.c.l.b16 %v1342
    %v2878 = vunpack.c.h.b16 %v1342
    %v2879 = vpack.c.b16 %v1887, %v1855
    %v2880 = vpack.c.b16 %v1888, %v1856
    %v2881 = vpack.c.b16 %v1889, %v1857
    %v2882 = vpack.c.b16 %v1890, %v1858
    %v2883 = vpack.c.b16 %v1891, %v1859
    %v2884 = vpack.c.b16 %v1892, %v1860
    %v2885 = vpack.c.b16 %v1893, %v1861
    %v2886 = vpack.c.b16 %v1894, %v1862
    %v2887 = vpack.c.b16 %v1895, %v1863
    %v2888 = vpack.c.b16 %v1896, %v1864
    %v2889 = vpack.c.b16 %v1897, %v1865
    %v2890 = vpack.c.b16 %v1898, %v1866
    %v2891 = vpack.c.b16 %v1899, %v1867
    %v2892 = vpack.c.b16 %v1900, %v1868
    %v2893 = vpack.c.b16 %v1901, %v1869
    %v2894 = vpack.c.b16 %v1902, %v1870
    %v2895 = vpack.c.b16 %v1903, %v1871
    %v2896 = vpack.c.b16 %v1904, %v1872
    %v2897 = vpack.c.b16 %v1905, %v1873
    %v2898 = vpack.c.b16 %v1906, %v1874
    %v2899 = vpack.c.b16 %v1907, %v1875
    %v2900 = vpack.c.b16 %v1908, %v1876
    %v2901 = vpack.c.b16 %v1909, %v1877
    %v2902 = vpack.c.b16 %v1910, %v1878
    %v2903 = vpack.c.b16 %v1911, %v1879
    %v2904 = vpack.c.b16 %v1912, %v1880
    %v2905 = vpack.c.b16 %v1913, %v1881
    %v2906 = vpack.c.b16 %v1914, %v1882
    %v2907 = vpack.c.b16 %v1915, %v1883
    %v2908 = vpack.c.b16 %v1916, %v1884
    %v2909 = vpack.c.b16 %v1917, %v1885
    %v2910 = vpack.c.b16 %v1918, %v1886
    %v2911 = vpack.c.b16 %v1951, %v1919
    %v2912 = vpack.c.b16 %v1952, %v1920
    %v2913 = vpack.c.b16 %v1953, %v1921
    %v2914 = vpack.c.b16 %v1954, %v1922
    %v2915 = vpack.c.b16 %v1955, %v1923
    %v2916 = vpack.c.b16 %v1956, %v1924
    %v2917 = vpack.c.b16 %v1957, %v1925
    %v2918 = vpack.c.b16 %v1958, %v1926
    %v2919 = vpack.c.b16 %v1959, %v1927
    %v2920 = vpack.c.b16 %v1960, %v1928
    %v2921 = vpack.c.b16 %v1961, %v1929
    %v2922 = vpack.c.b16 %v1962, %v1930
    %v2923 = vpack.c.b16 %v1963, %v1931
    %v2924 = vpack.c.b16 %v1964, %v1932
    %v2925 = vpack.c.b16 %v1965, %v1933
    %v2926 = vpack.c.b16 %v1966, %v1934
    %v2927 = vpack.c.b16 %v1967, %v1935
    %v2928 = vpack.c.b16 %v1968, %v1936
    %v2929 = vpack.c.b16 %v1969, %v1937
    %v2930 = vpack.c.b16 %v1970, %v1938
    %v2931 = vpack.c.b16 %v1971, %v1939
    %v2932 = vpack.c.b16 %v1972, %v1940
    %v2933 = vpack.c.b16 %v1973, %v1941
    %v2934 = vpack.c.b16 %v1974, %v1942
    %v2935 = vpack.c.b16 %v1975, %v1943
    %v2936 = vpack.c.b16 %v1976, %v1944
    %v2937 = vpack.c.b16 %v1977, %v1945
    %v2938 = vpack.c.b16 %v1978, %v1946
    %v2939 = vpack.c.b16 %v1979, %v1947
    %v2940 = vpack.c.b16 %v1980, %v1948
    %v2941 = vpack.c.b16 %v1981, %v1949
    %v2942 = vpack.c.b16 %v1982, %v1950
    %v2943 = vpack.c.b16 %v2015, %v1983
    %v2944 = vpack.c.b16 %v2016, %v1984
    %v2945 = vpack.c.b16 %v2017, %v1985
    %v2946 = vpack.c.b16 %v2018, %v1986
    %v2947 = vpack.c.b16 %v2019, %v1987
    %v2948 = vpack.c.b16 %v2020, %v1988
    %v2949 = vpack.c.b16 %v2021, %v1989
    %v2950 = vpack.c.b16 %v2022, %v1990
    %v2951 = vpack.c.b16 %v2023, %v1991
    %v2952 = vpack.c.b16 %v2024, %v1992
    %v2953 = vpack.c.b16 %v2025, %v1993
    %v2954 = vpack.c.b16 %v2026, %v1994
    %v2955 = vpack.c.b16 %v2027, %v1995
    %v2956 = vpack.c.b16 %v2028, %v1996
    %v2957 = vpack.c.b16 %v2029, %v1997
    %v2958 = vpack.c.b16 %v2030, %v1998
    %v2959 = vpack.c.b16 %v2031, %v1999
    %v2960 = vpack.c.b16 %v2032, %v2000
    %v2961 = vpack.c.b16 %v2033, %v2001
    %v2962 = vpack.c.b16 %v2034, %v2002
    %v2963 = vpack.c.b16 %v2035, %v2003
    %v2964 = vpack.c.b16 %v2036, %v2004
    %v2965 = vpack.c.b16 %v2037, %v2005
    %v2966 = vpack.c.b16 %v2038, %v2006
    %v2967 = vpack.c.b16 %v2039, %v2007
    %v2968 = vpack.c.b16 %v2040, %v2008
    %v2969 = vpack.c.b16 %v2041, %v2009
    %v2970 = vpack.c.b16 %v2042, %v2010
    %v2971 = vpack.c.b16 %v2043, %v2011
    %v2972 = vpack.c.b16 %v2044, %v2012
    %v2973 = vpack.c.b16 %v2045, %v2013
    %v2974 = vpack.c.b16 %v2046, %v2014
    %v2975 = vpack.c.b16 %v2079, %v2047
    %v2976 = vpack.c.b16 %v2080, %v2048
    %v2977 = vpack.c.b16 %v2081, %v2049
    %v2978 = vpack.c.b16 %v2082, %v2050
    %v2979 = vpack.c.b16 %v2083, %v2051
    %v2980 = vpack.c.b16 %v2084, %v2052
    %v2981 = vpack.c.b16 %v2085, %v2053
    %v2982 = vpack.c.b16 %v2086, %v2054
    %v2983 = vpack.c.b16 %v2087, %v2055
    %v2984 = vpack.c.b16 %v2088, %v2056
    %v2985 = vpack.c.b16 %v2089, %v2057
    %v2986 = vpack.c.b16 %v2090, %v2058
    %v2987 = vpack.c.b16 %v2091, %v2059
    %v2988 = vpack.c.b16 %v2092, %v2060
    %v2989 = vpack.c.b16 %v2093, %v2061
    %v2990 = vpack.c.b16 %v2094, %v2062
    %v2991 = vpack.c.b16 %v2095, %v2063
    %v2992 = vpack.c.b16 %v2096, %v2064
    %v2993 = vpack.c.b16 %v2097, %v2065
    %v2994 = vpack.c.b16 %v2098, %v2066
    %v2995 = vpack.c.b16 %v2099, %v2067
    %v2996 = vpack.c.b16 %v2100, %v2068
    %v2997 = vpack.c.b16 %v2101, %v2069
    %v2998 = vpack.c.b16 %v2102, %v2070
    %v2999 = vpack.c.b16 %v2103, %v2071
    %v3000 = vpack.c.b16 %v2104, %v2072
    %v3001 = vpack.c.b16 %v2105, %v2073
    %v3002 = vpack.c.b16 %v2106, %v2074
    %v3003 = vpack.c.b16 %v2107, %v2075
    %v3004 = vpack.c.b16 %v2108, %v2076
    %v3005 = vpack.c.b16 %v2109, %v2077
    %v3006 = vpack.c.b16 %v2110, %v2078
    %v3007 = vpack.c.b16 %v2143, %v2111
    %v3008 = vpack.c.b16 %v2144, %v2112
    %v3009 = vpack.c.b16 %v2145, %v2113
    %v3010 = vpack.c.b16 %v2146, %v2114
    %v3011 = vpack.c.b16 %v2147, %v2115
    %v3012 = vpack.c.b16 %v2148, %v2116
    %v3013 = vpack.c.b16 %v2149, %v2117
    %v3014 = vpack.c.b16 %v2150, %v2118
    %v3015 = vpack.c.b16 %v2151, %v2119
    %v3016 = vpack.c.b16 %v2152, %v2120
    %v3017 = vpack.c.b16 %v2153, %v2121
    %v3018 = vpack.c.b16 %v2154, %v2122
    %v3019 = vpack.c.b16 %v2155, %v2123
    %v3020 = vpack.c.b16 %v2156, %v2124
    %v3021 = vpack.c.b16 %v2157, %v2125
    %v3022 = vpack.c.b16 %v2158, %v2126
    %v3023 = vpack.c.b16 %v2159, %v2127
    %v3024 = vpack.c.b16 %v2160, %v2128
    %v3025 = vpack.c.b16 %v2161, %v2129
    %v3026 = vpack.c.b16 %v2162, %v2130
    %v3027 = vpack.c.b16 %v2163, %v2131
    %v3028 = vpack.c.b16 %v2164, %v2132
    %v3029 = vpack.c.b16 %v2165, %v2133
    %v3030 = vpack.c.b16 %v2166, %v2134
    %v3031 = vpack.c.b16 %v2167, %v2135
    %v3032 = vpack.c.b16 %v2168, %v2136
    %v3033 = vpack.c.b16 %v2169, %v2137
    %v3034 = vpack.c.b16 %v2170, %v2138
    %v3035 = vpack.c.b16 %v2171, %v2139
    %v3036 = vpack.c.b16 %v2172, %v2140
    %v3037 = vpack.c.b16 %v2173, %v2141
    %v3038 = vpack.c.b16 %v2174, %v2142
    %v3039 = vpack.c.b16 %v2207, %v2175
    %v3040 = vpack.c.b16 %v2208, %v2176
    %v3041 = vpack.c.b16 %v2209, %v2177
    %v3042 = vpack.c.b16 %v2210, %v2178
    %v3043 = vpack.c.b16 %v2211, %v2179
    %v3044 = vpack.c.b16 %v2212, %v2180
    %v3045 = vpack.c.b16 %v2213, %v2181
    %v3046 = vpack.c.b16 %v2214, %v2182
    %v3047 = vpack.c.b16 %v2215, %v2183
    %v3048 = vpack.c.b16 %v2216, %v2184
    %v3049 = vpack.c.b16 %v2217, %v2185
    %v3050 = vpack.c.b16 %v2218, %v2186
    %v3051 = vpack.c.b16 %v2219, %v2187
    %v3052 = vpack.c.b16 %v2220, %v2188
    %v3053 = vpack.c.b16 %v2221, %v2189
    %v3054 = vpack.c.b16 %v2222, %v2190
    %v3055 = vpack.c.b16 %v2223, %v2191
    %v3056 = vpack.c.b16 %v2224, %v2192
    %v3057 = vpack.c.b16 %v2225, %v2193
    %v3058 = vpack.c.b16 %v2226, %v2194
    %v3059 = vpack.c.b16 %v2227, %v2195
    %v3060 = vpack.c.b16 %v2228, %v2196
    %v3061 = vpack.c.b16 %v2229, %v2197
    %v3062 = vpack.c.b16 %v2230, %v2198
    %v3063 = vpack.c.b16 %v2231, %v2199
    %v3064 = vpack.c.b16 %v2232, %v2200
    %v3065 = vpack.c.b16 %v2233, %v2201
    %v3066 = vpack.c.b16 %v2234, %v2202
    %v3067 = vpack.c.b16 %v2235, %v2203
    %v3068 = vpack.c.b16 %v2236, %v2204
    %v3069 = vpack.c.b16 %v2237, %v2205
    %v3070 = vpack.c.b16 %v2238, %v2206
    %v3071 = vpack.c.b16 %v2271, %v2239
    %v3072 = vpack.c.b16 %v2272, %v2240
    %v3073 = vpack.c.b16 %v2273, %v2241
    %v3074 = vpack.c.b16 %v2274, %v2242
    %v3075 = vpack.c.b16 %v2275, %v2243
    %v3076 = vpack.c.b16 %v2276, %v2244
    %v3077 = vpack.c.b16 %v2277, %v2245
    %v3078 = vpack.c.b16 %v2278, %v2246
    %v3079 = vpack.c.b16 %v2279, %v2247
    %v3080 = vpack.c.b16 %v2280, %v2248
    %v3081 = vpack.c.b16 %v2281, %v2249
    %v3082 = vpack.c.b16 %v2282, %v2250
    %v3083 = vpack.c.b16 %v2283, %v2251
    %v3084 = vpack.c.b16 %v2284, %v2252
    %v3085 = vpack.c.b16 %v2285, %v2253
    %v3086 = vpack.c.b16 %v2286, %v2254
    %v3087 = vpack.c.b16 %v2287, %v2255
    %v3088 = vpack.c.b16 %v2288, %v2256
    %v3089 = vpack.c.b16 %v2289, %v2257
    %v3090 = vpack.c.b16 %v2290, %v2258
    %v3091 = vpack.c.b16 %v2291, %v2259
    %v3092 = vpack.c.b16 %v2292, %v2260
    %v3093 = vpack.c.b16 %v2293, %v2261
    %v3094 = vpack.c.b16 %v2294, %v2262
    %v3095 = vpack.c.b16 %v2295, %v2263
    %v3096 = vpack.c.b16 %v2296, %v2264
    %v3097 = vpack.c.b16 %v2297, %v2265
    %v3098 = vpack.c.b16 %v2298, %v2266
    %v3099 = vpack.c.b16 %v2299, %v2267
    %v3100 = vpack.c.b16 %v2300, %v2268
    %v3101 = vpack.c.b16 %v2301, %v2269
    %v3102 = vpack.c.b16 %v2302, %v2270
    %v3103 = vpack.c.b16 %v2335, %v2303
    %v3104 = vpack.c.b16 %v2336, %v2304
    %v3105 = vpack.c.b16 %v2337, %v2305
    %v3106 = vpack.c.b16 %v2338, %v2306
    %v3107 = vpack.c.b16 %v2339, %v2307
    %v3108 = vpack.c.b16 %v2340, %v2308
    %v3109 = vpack.c.b16 %v2341, %v2309
    %v3110 = vpack.c.b16 %v2342, %v2310
    %v3111 = vpack.c.b16 %v2343, %v2311
    %v3112 = vpack.c.b16 %v2344, %v2312
    %v3113 = vpack.c.b16 %v2345, %v2313
    %v3114 = vpack.c.b16 %v2346, %v2314
    %v3115 = vpack.c.b16 %v2347, %v2315
    %v3116 = vpack.c.b16 %v2348, %v2316
    %v3117 = vpack.c.b16 %v2349, %v2317
    %v3118 = vpack.c.b16 %v2350, %v2318
    %v3119 = vpack.c.b16 %v2351, %v2319
    %v3120 = vpack.c.b16 %v2352, %v2320
    %v3121 = vpack.c.b16 %v2353, %v2321
    %v3122 = vpack.c.b16 %v2354, %v2322
    %v3123 = vpack.c.b16 %v2355, %v2323
    %v3124 = vpack.c.b16 %v2356, %v2324
    %v3125 = vpack.c.b16 %v2357, %v2325
    %v3126 = vpack.c.b16 %v2358, %v2326
    %v3127 = vpack.c.b16 %v2359, %v2327
    %v3128 = vpack.c.b16 %v2360, %v2328
    %v3129 = vpack.c.b16 %v2361, %v2329
    %v3130 = vpack.c.b16 %v2362, %v2330
    %v3131 = vpack.c.b16 %v2363, %v2331
    %v3132 = vpack.c.b16 %v2364, %v2332
    %v3133 = vpack.c.b16 %v2365, %v2333
    %v3134 = vpack.c.b16 %v2366, %v2334
    %v3135 = vpack.c.b16 %v2399, %v2367
    %v3136 = vpack.c.b16 %v2400, %v2368
    %v3137 = vpack.c.b16 %v2401, %v2369
    %v3138 = vpack.c.b16 %v2402, %v2370
    %v3139 = vpack.c.b16 %v2403, %v2371
    %v3140 = vpack.c.b16 %v2404, %v2372
    %v3141 = vpack.c.b16 %v2405, %v2373
    %v3142 = vpack.c.b16 %v2406, %v2374
    %v3143 = vpack.c.b16 %v2407, %v2375
    %v3144 = vpack.c.b16 %v2408, %v2376
    %v3145 = vpack.c.b16 %v2409, %v2377
    %v3146 = vpack.c.b16 %v2410, %v2378
    %v3147 = vpack.c.b16 %v2411, %v2379
    %v3148 = vpack.c.b16 %v2412, %v2380
    %v3149 = vpack.c.b16 %v2413, %v2381
    %v3150 = vpack.c.b16 %v2414, %v2382
    %v3151 = vpack.c.b16 %v2415, %v2383
    %v3152 = vpack.c.b16 %v2416, %v2384
    %v3153 = vpack.c.b16 %v2417, %v2385
    %v3154 = vpack.c.b16 %v2418, %v2386
    %v3155 = vpack.c.b16 %v2419, %v2387
    %v3156 = vpack.c.b16 %v2420, %v2388
    %v3157 = vpack.c.b16 %v2421, %v2389
    %v3158 = vpack.c.b16 %v2422, %v2390
    %v3159 = vpack.c.b16 %v2423, %v2391
    %v3160 = vpack.c.b16 %v2424, %v2392
    %v3161 = vpack.c.b16 %v2425, %v2393
    %v3162 = vpack.c.b16 %v2426, %v2394
    %v3163 = vpack.c.b16 %v2427, %v2395
    %v3164 = vpack.c.b16 %v2428, %v2396
    %v3165 = vpack.c.b16 %v2429, %v2397
    %v3166 = vpack.c.b16 %v2430, %v2398
    %v3167 = vpack.c.b16 %v2463, %v2431
    %v3168 = vpack.c.b16 %v2464, %v2432
    %v3169 = vpack.c.b16 %v2465, %v2433
    %v3170 = vpack.c.b16 %v2466, %v2434
    %v3171 = vpack.c.b16 %v2467, %v2435
    %v3172 = vpack.c.b16 %v2468, %v2436
    %v3173 = vpack.c.b16 %v2469, %v2437
    %v3174 = vpack.c.b16 %v2470, %v2438
    %v3175 = vpack.c.b16 %v2471, %v2439
    %v3176 = vpack.c.b16 %v2472, %v2440
    %v3177 = vpack.c.b16 %v2473, %v2441
    %v3178 = vpack.c.b16 %v2474, %v2442
    %v3179 = vpack.c.b16 %v2475, %v2443
    %v3180 = vpack.c.b16 %v2476, %v2444
    %v3181 = vpack.c.b16 %v2477, %v2445
    %v3182 = vpack.c.b16 %v2478, %v2446
    %v3183 = vpack.c.b16 %v2479, %v2447
    %v3184 = vpack.c.b16 %v2480, %v2448
    %v3185 = vpack.c.b16 %v2481, %v2449
    %v3186 = vpack.c.b16 %v2482, %v2450
    %v3187 = vpack.c.b16 %v2483, %v2451
    %v3188 = vpack.c.b16 %v2484, %v2452
    %v3189 = vpack.c.b16 %v2485, %v2453
    %v3190 = vpack.c.b16 %v2486, %v2454
    %v3191 = vpack.c.b16 %v2487, %v2455
    %v3192 = vpack.c.b16 %v2488, %v2456
    %v3193 = vpack.c.b16 %v2489, %v2457
    %v3194 = vpack.c.b16 %v2490, %v2458
    %v3195 = vpack.c.b16 %v2491, %v2459
    %v3196 = vpack.c.b16 %v2492, %v2460
    %v3197 = vpack.c.b16 %v2493, %v2461
    %v3198 = vpack.c.b16 %v2494, %v2462
    %v3199 = vpack.c.b16 %v2527, %v2495
    %v3200 = vpack.c.b16 %v2528, %v2496
    %v3201 = vpack.c.b16 %v2529, %v2497
    %v3202 = vpack.c.b16 %v2530, %v2498
    %v3203 = vpack.c.b16 %v2531, %v2499
    %v3204 = vpack.c.b16 %v2532, %v2500
    %v3205 = vpack.c.b16 %v2533, %v2501
    %v3206 = vpack.c.b16 %v2534, %v2502
    %v3207 = vpack.c.b16 %v2535, %v2503
    %v3208 = vpack.c.b16 %v2536, %v2504
    %v3209 = vpack.c.b16 %v2537, %v2505
    %v3210 = vpack.c.b16 %v2538, %v2506
    %v3211 = vpack.c.b16 %v2539, %v2507
    %v3212 = vpack.c.b16 %v2540, %v2508
    %v3213 = vpack.c.b16 %v2541, %v2509
    %v3214 = vpack.c.b16 %v2542, %v2510
    %v3215 = vpack.c.b16 %v2543, %v2511
    %v3216 = vpack.c.b16 %v2544, %v2512
    %v3217 = vpack.c.b16 %v2545, %v2513
    %v3218 = vpack.c.b16 %v2546, %v2514
    %v3219 = vpack.c.b16 %v2547, %v2515
    %v3220 = vpack.c.b16 %v2548, %v2516
    %v3221 = vpack.c.b16 %v2549, %v2517
    %v3222 = vpack.c.b16 %v2550, %v2518
    %v3223 = vpack.c.b16 %v2551, %v2519
    %v3224 = vpack.c.b16 %v2552, %v2520
    %v3225 = vpack.c.b16 %v2553, %v2521
    %v3226 = vpack.c.b16 %v2554, %v2522
    %v3227 = vpack.c.b16 %v2555, %v2523
    %v3228 = vpack.c.b16 %v2556, %v2524
    %v3229 = vpack.c.b16 %v2557, %v2525
    %v3230 = vpack.c.b16 %v2558, %v2526
    %v3231 = vpack.c.b16 %v2591, %v2559
    %v3232 = vpack.c.b16 %v2592, %v2560
    %v3233 = vpack.c.b16 %v2593, %v2561
    %v3234 = vpack.c.b16 %v2594, %v2562
    %v3235 = vpack.c.b16 %v2595, %v2563
    %v3236 = vpack.c.b16 %v2596, %v2564
    %v3237 = vpack.c.b16 %v2597, %v2565
    %v3238 = vpack.c.b16 %v2598, %v2566
    %v3239 = vpack.c.b16 %v2599, %v2567
    %v3240 = vpack.c.b16 %v2600, %v2568
    %v3241 = vpack.c.b16 %v2601, %v2569
    %v3242 = vpack.c.b16 %v2602, %v2570
    %v3243 = vpack.c.b16 %v2603, %v2571
    %v3244 = vpack.c.b16 %v2604, %v2572
    %v3245 = vpack.c.b16 %v2605, %v2573
    %v3246 = vpack.c.b16 %v2606, %v2574
    %v3247 = vpack.c.b16 %v2607, %v2575
    %v3248 = vpack.c.b16 %v2608, %v2576
    %v3249 = vpack.c.b16 %v2609, %v2577
    %v3250 = vpack.c.b16 %v2610, %v2578
    %v3251 = vpack.c.b16 %v2611, %v2579
    %v3252 = vpack.c.b16 %v2612, %v2580
    %v3253 = vpack.c.b16 %v2613, %v2581
    %v3254 = vpack.c.b16 %v2614, %v2582
    %v3255 = vpack.c.b16 %v2615, %v2583
    %v3256 = vpack.c.b16 %v2616, %v2584
    %v3257 = vpack.c.b16 %v2617, %v2585
    %v3258 = vpack.c.b16 %v2618, %v2586
    %v3259 = vpack.c.b16 %v2619, %v2587
    %v3260 = vpack.c.b16 %v2620, %v2588
    %v3261 = vpack.c.b16 %v2621, %v2589
    %v3262 = vpack.c.b16 %v2622, %v2590
    %v3263 = vpack.c.b16 %v2655, %v2623
    %v3264 = vpack.c.b16 %v2656, %v2624
    %v3265 = vpack.c.b16 %v2657, %v2625
    %v3266 = vpack.c.b16 %v2658, %v2626
    %v3267 = vpack.c.b16 %v2659, %v2627
    %v3268 = vpack.c.b16 %v2660, %v2628
    %v3269 = vpack.c.b16 %v2661, %v2629
    %v3270 = vpack.c.b16 %v2662, %v2630
    %v3271 = vpack.c.b16 %v2663, %v2631
    %v3272 = vpack.c.b16 %v2664, %v2632
    %v3273 = vpack.c.b16 %v2665, %v2633
    %v3274 = vpack.c.b16 %v2666, %v2634
    %v3275 = vpack.c.b16 %v2667, %v2635
    %v3276 = vpack.c.b16 %v2668, %v2636
    %v3277 = vpack.c.b16 %v2669, %v2637
    %v3278 = vpack.c.b16 %v2670, %v2638
    %v3279 = vpack.c.b16 %v2671, %v2639
    %v3280 = vpack.c.b16 %v2672, %v2640
    %v3281 = vpack.c.b16 %v2673, %v2641
    %v3282 = vpack.c.b16 %v2674, %v2642
    %v3283 = vpack.c.b16 %v2675, %v2643
    %v3284 = vpack.c.b16 %v2676, %v2644
    %v3285 = vpack.c.b16 %v2677, %v2645
    %v3286 = vpack.c.b16 %v2678, %v2646
    %v3287 = vpack.c.b16 %v2679, %v2647
    %v3288 = vpack.c.b16 %v2680, %v2648
    %v3289 = vpack.c.b16 %v2681, %v2649
    %v3290 = vpack.c.b16 %v2682, %v2650
    %v3291 = vpack.c.b16 %v2683, %v2651
    %v3292 = vpack.c.b16 %v2684, %v2652
    %v3293 = vpack.c.b16 %v2685, %v2653
    %v3294 = vpack.c.b16 %v2686, %v2654
    %v3295 = vpack.c.b16 %v2719, %v2687
    %v3296 = vpack.c.b16 %v2720, %v2688
    %v3297 = vpack.c.b16 %v2721, %v2689
    %v3298 = vpack.c.b16 %v2722, %v2690
    %v3299 = vpack.c.b16 %v2723, %v2691
    %v3300 = vpack.c.b16 %v2724, %v2692
    %v3301 = vpack.c.b16 %v2725, %v2693
    %v3302 = vpack.c.b16 %v2726, %v2694
    %v3303 = vpack.c.b16 %v2727, %v2695
    %v3304 = vpack.c.b16 %v2728, %v2696
    %v3305 = vpack.c.b16 %v2729, %v2697
    %v3306 = vpack.c.b16 %v2730, %v2698
    %v3307 = vpack.c.b16 %v2731, %v2699
    %v3308 = vpack.c.b16 %v2732, %v2700
    %v3309 = vpack.c.b16 %v2733, %v2701
    %v3310 = vpack.c.b16 %v2734, %v2702
    %v3311 = vpack.c.b16 %v2735, %v2703
    %v3312 = vpack.c.b16 %v2736, %v2704
    %v3313 = vpack.c.b16 %v2737, %v2705
    %v3314 = vpack.c.b16 %v2738, %v2706
    %v3315 = vpack.c.b16 %v2739, %v2707
    %v3316 = vpack.c.b16 %v2740, %v2708
    %v3317 = vpack.c.b16 %v2741, %v2709
    %v3318 = vpack.c.b16 %v2742, %v2710
    %v3319 = vpack.c.b16 %v2743, %v2711
    %v3320 = vpack.c.b16 %v2744, %v2712
    %v3321 = vpack.c.b16 %v2745, %v2713
    %v3322 = vpack.c.b16 %v2746, %v2714
    %v3323 = vpack.c.b16 %v2747, %v2715
    %v3324 = vpack.c.b16 %v2748, %v2716
    %v3325 = vpack.c.b16 %v2749, %v2717
    %v3326 = vpack.c.b16 %v2750, %v2718
    %v3327 = vpack.c.b16 %v2783, %v2751
    %v3328 = vpack.c.b16 %v2784, %v2752
    %v3329 = vpack.c.b16 %v2785, %v2753
    %v3330 = vpack.c.b16 %v2786, %v2754
    %v3331 = vpack.c.b16 %v2787, %v2755
    %v3332 = vpack.c.b16 %v2788, %v2756
    %v3333 = vpack.c.b16 %v2789, %v2757
    %v3334 = vpack.c.b16 %v2790, %v2758
    %v3335 = vpack.c.b16 %v2791, %v2759
    %v3336 = vpack.c.b16 %v2792, %v2760
    %v3337 = vpack.c.b16 %v2793, %v2761
    %v3338 = vpack.c.b16 %v2794, %v2762
    %v3339 = vpack.c.b16 %v2795, %v2763
    %v3340 = vpack.c.b16 %v2796, %v2764
    %v3341 = vpack.c.b16 %v2797, %v2765
    %v3342 = vpack.c.b16 %v2798, %v2766
    %v3343 = vpack.c.b16 %v2799, %v2767
    %v3344 = vpack.c.b16 %v2800, %v2768
    %v3345 = vpack.c.b16 %v2801, %v2769
    %v3346 = vpack.c.b16 %v2802, %v2770
    %v3347 = vpack.c.b16 %v2803, %v2771
    %v3348 = vpack.c.b16 %v2804, %v2772
    %v3349 = vpack.c.b16 %v2805, %v2773
    %v3350 = vpack.c.b16 %v2806, %v2774
    %v3351 = vpack.c.b16 %v2807, %v2775
    %v3352 = vpack.c.b16 %v2808, %v2776
    %v3353 = vpack.c.b16 %v2809, %v2777
    %v3354 = vpack.c.b16 %v2810, %v2778
    %v3355 = vpack.c.b16 %v2811, %v2779
    %v3356 = vpack.c.b16 %v2812, %v2780
    %v3357 = vpack.c.b16 %v2813, %v2781
    %v3358 = vpack.c.b16 %v2814, %v2782
    %v3359 = vpack.c.b16 %v2847, %v2815
    %v3360 = vpack.c.b16 %v2848, %v2816
    %v3361 = vpack.c.b16 %v2849, %v2817
    %v3362 = vpack.c.b16 %v2850, %v2818
    %v3363 = vpack.c.b16 %v2851, %v2819
    %v3364 = vpack.c.b16 %v2852, %v2820
    %v3365 = vpack.c.b16 %v2853, %v2821
    %v3366 = vpack.c.b16 %v2854, %v2822
    %v3367 = vpack.c.b16 %v2855, %v2823
    %v3368 = vpack.c.b16 %v2856, %v2824
    %v3369 = vpack.c.b16 %v2857, %v2825
    %v3370 = vpack.c.b16 %v2858, %v2826
    %v3371 = vpack.c.b16 %v2859, %v2827
    %v3372 = vpack.c.b16 %v2860, %v2828
    %v3373 = vpack.c.b16 %v2861, %v2829
    %v3374 = vpack.c.b16 %v2862, %v2830
    %v3375 = vpack.c.b16 %v2863, %v2831
    %v3376 = vpack.c.b16 %v2864, %v2832
    %v3377 = vpack.c.b16 %v2865, %v2833
    %v3378 = vpack.c.b16 %v2866, %v2834
    %v3379 = vpack.c.b16 %v2867, %v2835
    %v3380 = vpack.c.b16 %v2868, %v2836
    %v3381 = vpack.c.b16 %v2869, %v2837
    %v3382 = vpack.c.b16 %v2870, %v2838
    %v3383 = vpack.c.b16 %v2871, %v2839
    %v3384 = vpack.c.b16 %v2872, %v2840
    %v3385 = vpack.c.b16 %v2873, %v2841
    %v3386 = vpack.c.b16 %v2874, %v2842
    %v3387 = vpack.c.b16 %v2875, %v2843
    %v3388 = vpack.c.b16 %v2876, %v2844
    %v3389 = vpack.c.b16 %v2877, %v2845
    %v3390 = vpack.c.b16 %v2878, %v2846
    %3903 = vmatprep.subr.bf16.mxu0 %v2880
    %3904 = vmatpush1.bf16.msra.mxu0 %v2879
    %3905 = vmatprep.subr.bf16.mxu0 %v2912
    %3906 = vmatpush1.bf16.msra.mxu0 %v2911
    %3907 = vmatprep.subr.bf16.mxu0 %v2944
    %3908 = vmatpush1.bf16.msra.mxu0 %v2943
    %3909 = vmatprep.subr.bf16.mxu0 %v2976
    %3910 = vmatpush1.bf16.msra.mxu0 %v2975
    %3911 = vmatprep.subr.bf16.mxu0 %v3008
    %3912 = vmatpush1.bf16.msra.mxu0 %v3007
    %3913 = vmatprep.subr.bf16.mxu0 %v3040
    %3914 = vmatpush1.bf16.msra.mxu0 %v3039
    %3915 = vmatprep.subr.bf16.mxu0 %v3072
    %3916 = vmatpush1.bf16.msra.mxu0 %v3071
    %3917 = vmatprep.subr.bf16.mxu0 %v3104
    %3918 = vmatpush1.bf16.msra.mxu0 %v3103
    %3919 = vmatprep.subr.bf16.mxu0 %v3136
    %3920 = vmatpush1.bf16.msra.mxu0 %v3135
    %3921 = vmatprep.subr.bf16.mxu0 %v3168
    %3922 = vmatpush1.bf16.msra.mxu0 %v3167
    %3923 = vmatprep.subr.bf16.mxu0 %v3200
    %3924 = vmatpush1.bf16.msra.mxu0 %v3199
    %3925 = vmatprep.subr.bf16.mxu0 %v3232
    %3926 = vmatpush1.bf16.msra.mxu0 %v3231
    %3927 = vmatprep.subr.bf16.mxu0 %v3264
    %3928 = vmatpush1.bf16.msra.mxu0 %v3263
    %3929 = vmatprep.subr.bf16.mxu0 %v3296
    %3930 = vmatpush1.bf16.msra.mxu0 %v3295
    %3931 = vmatprep.subr.bf16.mxu0 %v3328
    %3932 = vmatpush1.bf16.msra.mxu0 %v3327
    %3933 = vmatprep.subr.bf16.mxu0 %v3360
    %3934 = vmatpush1.bf16.msra.mxu0 %v3359
    %3935 = vmatprep.mubr.bf16.mxu0 %v830
    %3936 = vmatmul.mubr.bf16.gmra.mrb[0].mxu0 %v829
    %v3937 = vpop.f32.mrb[0].mxu0
    %v3938 = vadd.f32 0.0, %v3937
    %v3939 = vpop.f32.mrb[0].mxu0
    %v3940 = vadd.f32 0.0, %v3939
    %v3941 = vpop.f32.mrb[0].mxu0
    %v3942 = vpop.f32.mrb[0].mxu0
    %3943 = vdwg.mxu0
    %3944 = vmatprep.subr.bf16.mxu0 %v2882
    %3945 = vmatpush1.bf16.msra.mxu0 %v2881
    %3946 = vmatprep.subr.bf16.mxu0 %v2914
    %3947 = vmatpush1.bf16.msra.mxu0 %v2913
    %3948 = vmatprep.subr.bf16.mxu0 %v2946
    %3949 = vmatpush1.bf16.msra.mxu0 %v2945
    %3950 = vmatprep.subr.bf16.mxu0 %v2978
    %3951 = vmatpush1.bf16.msra.mxu0 %v2977
    %3952 = vmatprep.subr.bf16.mxu0 %v3010
    %3953 = vmatpush1.bf16.msra.mxu0 %v3009
    %3954 = vmatprep.subr.bf16.mxu0 %v3042
    %3955 = vmatpush1.bf16.msra.mxu0 %v3041
    %3956 = vmatprep.subr.bf16.mxu0 %v3074
    %3957 = vmatpush1.bf16.msra.mxu0 %v3073
    %3958 = vmatprep.subr.bf16.mxu0 %v3106
    %3959 = vmatpush1.bf16.msra.mxu0 %v3105
    %3960 = vmatprep.subr.bf16.mxu0 %v3138
    %3961 = vmatpush1.bf16.msra.mxu0 %v3137
    %3962 = vmatprep.subr.bf16.mxu0 %v3170
    %3963 = vmatpush1.bf16.msra.mxu0 %v3169
    %3964 = vmatprep.subr.bf16.mxu0 %v3202
    %3965 = vmatpush1.bf16.msra.mxu0 %v3201
    %3966 = vmatprep.subr.bf16.mxu0 %v3234
    %3967 = vmatpush1.bf16.msra.mxu0 %v3233
    %3968 = vmatprep.subr.bf16.mxu0 %v3266
    %3969 = vmatpush1.bf16.msra.mxu0 %v3265
    %3970 = vmatprep.subr.bf16.mxu0 %v3298
    %3971 = vmatpush1.bf16.msra.mxu0 %v3297
    %3972 = vmatprep.subr.bf16.mxu0 %v3330
    %3973 = vmatpush1.bf16.msra.mxu0 %v3329
    %3974 = vmatprep.subr.bf16.mxu0 %v3362
    %3975 = vmatpush1.bf16.msra.mxu0 %v3361
    %3976 = vmatprep.mubr.bf16.mxu0 %v830
    %3977 = vmatmul.mubr.bf16.gmra.mrb[0].mxu0 %v829
    %v3978 = vpop.f32.mrb[0].mxu0
    %v3979 = vadd.f32 0.0, %v3978
    %v3980 = vpop.f32.mrb[0].mxu0
    %v3981 = vadd.f32 0.0, %v3980
    %v3982 = vpop.f32.mrb[0].mxu0
    %v3983 = vpop.f32.mrb[0].mxu0
    %3984 = vdwg.mxu0
    %3985 = vmatprep.subr.bf16.mxu0 %v2884
    %3986 = vmatpush1.bf16.msra.mxu0 %v2883
    %3987 = vmatprep.subr.bf16.mxu0 %v2916
    %3988 = vmatpush1.bf16.msra.mxu0 %v2915
    %3989 = vmatprep.subr.bf16.mxu0 %v2948
    %3990 = vmatpush1.bf16.msra.mxu0 %v2947
    %3991 = vmatprep.subr.bf16.mxu0 %v2980
    %3992 = vmatpush1.bf16.msra.mxu0 %v2979
    %3993 = vmatprep.subr.bf16.mxu0 %v3012
    %3994 = vmatpush1.bf16.msra.mxu0 %v3011
    %3995 = vmatprep.subr.bf16.mxu0 %v3044
    %3996 = vmatpush1.bf16.msra.mxu0 %v3043
    %3997 = vmatprep.subr.bf16.mxu0 %v3076
    %3998 = vmatpush1.bf16.msra.mxu0 %v3075
    %3999 = vmatprep.subr.bf16.mxu0 %v3108
    %4000 = vmatpush1.bf16.msra.mxu0 %v3107
    %4001 = vmatprep.subr.bf16.mxu0 %v3140
    %4002 = vmatpush1.bf16.msra.mxu0 %v3139
    %4003 = vmatprep.subr.bf16.mxu0 %v3172
    %4004 = vmatpush1.bf16.msra.mxu0 %v3171
    %4005 = vmatprep.subr.bf16.mxu0 %v3204
    %4006 = vmatpush1.bf16.msra.mxu0 %v3203
    %4007 = vmatprep.subr.bf16.mxu0 %v3236
    %4008 = vmatpush1.bf16.msra.mxu0 %v3235
    %4009 = vmatprep.subr.bf16.mxu0 %v3268
    %4010 = vmatpush1.bf16.msra.mxu0 %v3267
    %4011 = vmatprep.subr.bf16.mxu0 %v3300
    %4012 = vmatpush1.bf16.msra.mxu0 %v3299
    %4013 = vmatprep.subr.bf16.mxu0 %v3332
    %4014 = vmatpush1.bf16.msra.mxu0 %v3331
    %4015 = vmatprep.subr.bf16.mxu0 %v3364
    %4016 = vmatpush1.bf16.msra.mxu0 %v3363
    %4017 = vmatprep.mubr.bf16.mxu0 %v830
    %4018 = vmatmul.mubr.bf16.gmra.mrb[0].mxu0 %v829
    %v4019 = vpop.f32.mrb[0].mxu0
    %v4020 = vadd.f32 0.0, %v4019
    %v4021 = vpop.f32.mrb[0].mxu0
    %v4022 = vadd.f32 0.0, %v4021
    %v4023 = vpop.f32.mrb[0].mxu0
    %v4024 = vpop.f32.mrb[0].mxu0
    %4025 = vdwg.mxu0
    %4026 = vmatprep.subr.bf16.mxu0 %v2886
    %4027 = vmatpush1.bf16.msra.mxu0 %v2885
    %4028 = vmatprep.subr.bf16.mxu0 %v2918
    %4029 = vmatpush1.bf16.msra.mxu0 %v2917
    %4030 = vmatprep.subr.bf16.mxu0 %v2950
    %4031 = vmatpush1.bf16.msra.mxu0 %v2949
    %4032 = vmatprep.subr.bf16.mxu0 %v2982
    %4033 = vmatpush1.bf16.msra.mxu0 %v2981
    %4034 = vmatprep.subr.bf16.mxu0 %v3014
    %4035 = vmatpush1.bf16.msra.mxu0 %v3013
    %4036 = vmatprep.subr.bf16.mxu0 %v3046
    %4037 = vmatpush1.bf16.msra.mxu0 %v3045
    %4038 = vmatprep.subr.bf16.mxu0 %v3078
    %4039 = vmatpush1.bf16.msra.mxu0 %v3077
    %4040 = vmatprep.subr.bf16.mxu0 %v3110
    %4041 = vmatpush1.bf16.msra.mxu0 %v3109
    %4042 = vmatprep.subr.bf16.mxu0 %v3142
    %4043 = vmatpush1.bf16.msra.mxu0 %v3141
    %4044 = vmatprep.subr.bf16.mxu0 %v3174
    %4045 = vmatpush1.bf16.msra.mxu0 %v3173
    %4046 = vmatprep.subr.bf16.mxu0 %v3206
    %4047 = vmatpush1.bf16.msra.mxu0 %v3205
    %4048 = vmatprep.subr.bf16.mxu0 %v3238
    %4049 = vmatpush1.bf16.msra.mxu0 %v3237
    %4050 = vmatprep.subr.bf16.mxu0 %v3270
    %4051 = vmatpush1.bf16.msra.mxu0 %v3269
    %4052 = vmatprep.subr.bf16.mxu0 %v3302
    %4053 = vmatpush1.bf16.msra.mxu0 %v3301
    %4054 = vmatprep.subr.bf16.mxu0 %v3334
    %4055 = vmatpush1.bf16.msra.mxu0 %v3333
    %4056 = vmatprep.subr.bf16.mxu0 %v3366
    %4057 = vmatpush1.bf16.msra.mxu0 %v3365
    %4058 = vmatprep.mubr.bf16.mxu0 %v830
    %4059 = vmatmul.mubr.bf16.gmra.mrb[0].mxu0 %v829
    %v4060 = vpop.f32.mrb[0].mxu0
    %v4061 = vadd.f32 0.0, %v4060
    %v4062 = vpop.f32.mrb[0].mxu0
    %v4063 = vadd.f32 0.0, %v4062
    %v4064 = vpop.f32.mrb[0].mxu0
    %v4065 = vpop.f32.mrb[0].mxu0
    %4066 = vdwg.mxu0
    %4067 = vmatprep.subr.bf16.mxu0 %v2888
    %4068 = vmatpush1.bf16.msra.mxu0 %v2887
    %4069 = vmatprep.subr.bf16.mxu0 %v2920
    %4070 = vmatpush1.bf16.msra.mxu0 %v2919
    %4071 = vmatprep.subr.bf16.mxu0 %v2952
    %4072 = vmatpush1.bf16.msra.mxu0 %v2951
    %4073 = vmatprep.subr.bf16.mxu0 %v2984
    %4074 = vmatpush1.bf16.msra.mxu0 %v2983
    %4075 = vmatprep.subr.bf16.mxu0 %v3016
    %4076 = vmatpush1.bf16.msra.mxu0 %v3015
    %4077 = vmatprep.subr.bf16.mxu0 %v3048
    %4078 = vmatpush1.bf16.msra.mxu0 %v3047
    %4079 = vmatprep.subr.bf16.mxu0 %v3080
    %4080 = vmatpush1.bf16.msra.mxu0 %v3079
    %4081 = vmatprep.subr.bf16.mxu0 %v3112
    %4082 = vmatpush1.bf16.msra.mxu0 %v3111
    %4083 = vmatprep.subr.bf16.mxu0 %v3144
    %4084 = vmatpush1.bf16.msra.mxu0 %v3143
    %4085 = vmatprep.subr.bf16.mxu0 %v3176
    %4086 = vmatpush1.bf16.msra.mxu0 %v3175
    %4087 = vmatprep.subr.bf16.mxu0 %v3208
    %4088 = vmatpush1.bf16.msra.mxu0 %v3207
    %4089 = vmatprep.subr.bf16.mxu0 %v3240
    %4090 = vmatpush1.bf16.msra.mxu0 %v3239
    %4091 = vmatprep.subr.bf16.mxu0 %v3272
    %4092 = vmatpush1.bf16.msra.mxu0 %v3271
    %4093 = vmatprep.subr.bf16.mxu0 %v3304
    %4094 = vmatpush1.bf16.msra.mxu0 %v3303
    %4095 = vmatprep.subr.bf16.mxu0 %v3336
    %4096 = vmatpush1.bf16.msra.mxu0 %v3335
    %4097 = vmatprep.subr.bf16.mxu0 %v3368
    %4098 = vmatpush1.bf16.msra.mxu0 %v3367
    %4099 = vmatprep.mubr.bf16.mxu0 %v830
    %4100 = vmatmul.mubr.bf16.gmra.mrb[0].mxu0 %v829
    %v4101 = vpop.f32.mrb[0].mxu0
    %v4102 = vadd.f32 0.0, %v4101
    %v4103 = vpop.f32.mrb[0].mxu0
    %v4104 = vadd.f32 0.0, %v4103
    %v4105 = vpop.f32.mrb[0].mxu0
    %v4106 = vpop.f32.mrb[0].mxu0
    %4107 = vdwg.mxu0
    %4108 = vmatprep.subr.bf16.mxu0 %v2890
    %4109 = vmatpush1.bf16.msra.mxu0 %v2889
    %4110 = vmatprep.subr.bf16.mxu0 %v2922
    %4111 = vmatpush1.bf16.msra.mxu0 %v2921
    %4112 = vmatprep.subr.bf16.mxu0 %v2954
    %4113 = vmatpush1.bf16.msra.mxu0 %v2953
    %4114 = vmatprep.subr.bf16.mxu0 %v2986
    %4115 = vmatpush1.bf16.msra.mxu0 %v2985
    %4116 = vmatprep.subr.bf16.mxu0 %v3018
    %4117 = vmatpush1.bf16.msra.mxu0 %v3017
    %4118 = vmatprep.subr.bf16.mxu0 %v3050
    %4119 = vmatpush1.bf16.msra.mxu0 %v3049
    %4120 = vmatprep.subr.bf16.mxu0 %v3082
    %4121 = vmatpush1.bf16.msra.mxu0 %v3081
    %4122 = vmatprep.subr.bf16.mxu0 %v3114
    %4123 = vmatpush1.bf16.msra.mxu0 %v3113
    %4124 = vmatprep.subr.bf16.mxu0 %v3146
    %4125 = vmatpush1.bf16.msra.mxu0 %v3145
    %4126 = vmatprep.subr.bf16.mxu0 %v3178
    %4127 = vmatpush1.bf16.msra.mxu0 %v3177
    %4128 = vmatprep.subr.bf16.mxu0 %v3210
    %4129 = vmatpush1.bf16.msra.mxu0 %v3209
    %4130 = vmatprep.subr.bf16.mxu0 %v3242
    %4131 = vmatpush1.bf16.msra.mxu0 %v3241
    %4132 = vmatprep.subr.bf16.mxu0 %v3274
    %4133 = vmatpush1.bf16.msra.mxu0 %v3273
    %4134 = vmatprep.subr.bf16.mxu0 %v3306
    %4135 = vmatpush1.bf16.msra.mxu0 %v3305
    %4136 = vmatprep.subr.bf16.mxu0 %v3338
    %4137 = vmatpush1.bf16.msra.mxu0 %v3337
    %4138 = vmatprep.subr.bf16.mxu0 %v3370
    %4139 = vmatpush1.bf16.msra.mxu0 %v3369
    %4140 = vmatprep.mubr.bf16.mxu0 %v830
    %4141 = vmatmul.mubr.bf16.gmra.mrb[0].mxu0 %v829
    %v4142 = vpop.f32.mrb[0].mxu0
    %v4143 = vadd.f32 0.0, %v4142
    %v4144 = vpop.f32.mrb[0].mxu0
    %v4145 = vadd.f32 0.0, %v4144
    %v4146 = vpop.f32.mrb[0].mxu0
    %v4147 = vpop.f32.mrb[0].mxu0
    %4148 = vdwg.mxu0
    %4149 = vmatprep.subr.bf16.mxu0 %v2892
    %4150 = vmatpush1.bf16.msra.mxu0 %v2891
    %4151 = vmatprep.subr.bf16.mxu0 %v2924
    %4152 = vmatpush1.bf16.msra.mxu0 %v2923
    %4153 = vmatprep.subr.bf16.mxu0 %v2956
    %4154 = vmatpush1.bf16.msra.mxu0 %v2955
    %4155 = vmatprep.subr.bf16.mxu0 %v2988
    %4156 = vmatpush1.bf16.msra.mxu0 %v2987
    %4157 = vmatprep.subr.bf16.mxu0 %v3020
    %4158 = vmatpush1.bf16.msra.mxu0 %v3019
    %4159 = vmatprep.subr.bf16.mxu0 %v3052
    %4160 = vmatpush1.bf16.msra.mxu0 %v3051
    %4161 = vmatprep.subr.bf16.mxu0 %v3084
    %4162 = vmatpush1.bf16.msra.mxu0 %v3083
    %4163 = vmatprep.subr.bf16.mxu0 %v3116
    %4164 = vmatpush1.bf16.msra.mxu0 %v3115
    %4165 = vmatprep.subr.bf16.mxu0 %v3148
    %4166 = vmatpush1.bf16.msra.mxu0 %v3147
    %4167 = vmatprep.subr.bf16.mxu0 %v3180
    %4168 = vmatpush1.bf16.msra.mxu0 %v3179
    %4169 = vmatprep.subr.bf16.mxu0 %v3212
    %4170 = vmatpush1.bf16.msra.mxu0 %v3211
    %4171 = vmatprep.subr.bf16.mxu0 %v3244
    %4172 = vmatpush1.bf16.msra.mxu0 %v3243
    %4173 = vmatprep.subr.bf16.mxu0 %v3276
    %4174 = vmatpush1.bf16.msra.mxu0 %v3275
    %4175 = vmatprep.subr.bf16.mxu0 %v3308
    %4176 = vmatpush1.bf16.msra.mxu0 %v3307
    %4177 = vmatprep.subr.bf16.mxu0 %v3340
    %4178 = vmatpush1.bf16.msra.mxu0 %v3339
    %4179 = vmatprep.subr.bf16.mxu0 %v3372
    %4180 = vmatpush1.bf16.msra.mxu0 %v3371
    %4181 = vmatprep.mubr.bf16.mxu0 %v830
    %4182 = vmatmul.mubr.bf16.gmra.mrb[0].mxu0 %v829
    %v4183 = vpop.f32.mrb[0].mxu0
    %v4184 = vadd.f32 0.0, %v4183
    %v4185 = vpop.f32.mrb[0].mxu0
    %v4186 = vadd.f32 0.0, %v4185
    %v4187 = vpop.f32.mrb[0].mxu0
    %v4188 = vpop.f32.mrb[0].mxu0
    %4189 = vdwg.mxu0
    %4190 = vmatprep.subr.bf16.mxu0 %v2894
    %4191 = vmatpush1.bf16.msra.mxu0 %v2893
    %4192 = vmatprep.subr.bf16.mxu0 %v2926
    %4193 = vmatpush1.bf16.msra.mxu0 %v2925
    %4194 = vmatprep.subr.bf16.mxu0 %v2958
    %4195 = vmatpush1.bf16.msra.mxu0 %v2957
    %4196 = vmatprep.subr.bf16.mxu0 %v2990
    %4197 = vmatpush1.bf16.msra.mxu0 %v2989
    %4198 = vmatprep.subr.bf16.mxu0 %v3022
    %4199 = vmatpush1.bf16.msra.mxu0 %v3021
    %4200 = vmatprep.subr.bf16.mxu0 %v3054
    %4201 = vmatpush1.bf16.msra.mxu0 %v3053
    %4202 = vmatprep.subr.bf16.mxu0 %v3086
    %4203 = vmatpush1.bf16.msra.mxu0 %v3085
    %4204 = vmatprep.subr.bf16.mxu0 %v3118
    %4205 = vmatpush1.bf16.msra.mxu0 %v3117
    %4206 = vmatprep.subr.bf16.mxu0 %v3150
    %4207 = vmatpush1.bf16.msra.mxu0 %v3149
    %4208 = vmatprep.subr.bf16.mxu0 %v3182
    %4209 = vmatpush1.bf16.msra.mxu0 %v3181
    %4210 = vmatprep.subr.bf16.mxu0 %v3214
    %4211 = vmatpush1.bf16.msra.mxu0 %v3213
    %4212 = vmatprep.subr.bf16.mxu0 %v3246
    %4213 = vmatpush1.bf16.msra.mxu0 %v3245
    %4214 = vmatprep.subr.bf16.mxu0 %v3278
    %4215 = vmatpush1.bf16.msra.mxu0 %v3277
    %4216 = vmatprep.subr.bf16.mxu0 %v3310
    %4217 = vmatpush1.bf16.msra.mxu0 %v3309
    %4218 = vmatprep.subr.bf16.mxu0 %v3342
    %4219 = vmatpush1.bf16.msra.mxu0 %v3341
    %4220 = vmatprep.subr.bf16.mxu0 %v3374
    %4221 = vmatpush1.bf16.msra.mxu0 %v3373
    %4222 = vmatprep.mubr.bf16.mxu0 %v830
    %4223 = vmatmul.mubr.bf16.gmra.mrb[0].mxu0 %v829
    %v4224 = vpop.f32.mrb[0].mxu0
    %v4225 = vadd.f32 0.0, %v4224
    %v4226 = vpop.f32.mrb[0].mxu0
    %v4227 = vadd.f32 0.0, %v4226
    %v4228 = vpop.f32.mrb[0].mxu0
    %v4229 = vpop.f32.mrb[0].mxu0
    %4230 = vdwg.mxu0
    %4231 = vmatprep.subr.bf16.mxu0 %v2896
    %4232 = vmatpush1.bf16.msra.mxu0 %v2895
    %4233 = vmatprep.subr.bf16.mxu0 %v2928
    %4234 = vmatpush1.bf16.msra.mxu0 %v2927
    %4235 = vmatprep.subr.bf16.mxu0 %v2960
    %4236 = vmatpush1.bf16.msra.mxu0 %v2959
    %4237 = vmatprep.subr.bf16.mxu0 %v2992
    %4238 = vmatpush1.bf16.msra.mxu0 %v2991
    %4239 = vmatprep.subr.bf16.mxu0 %v3024
    %4240 = vmatpush1.bf16.msra.mxu0 %v3023
    %4241 = vmatprep.subr.bf16.mxu0 %v3056
    %4242 = vmatpush1.bf16.msra.mxu0 %v3055
    %4243 = vmatprep.subr.bf16.mxu0 %v3088
    %4244 = vmatpush1.bf16.msra.mxu0 %v3087
    %4245 = vmatprep.subr.bf16.mxu0 %v3120
    %4246 = vmatpush1.bf16.msra.mxu0 %v3119
    %4247 = vmatprep.subr.bf16.mxu0 %v3152
    %4248 = vmatpush1.bf16.msra.mxu0 %v3151
    %4249 = vmatprep.subr.bf16.mxu0 %v3184
    %4250 = vmatpush1.bf16.msra.mxu0 %v3183
    %4251 = vmatprep.subr.bf16.mxu0 %v3216
    %4252 = vmatpush1.bf16.msra.mxu0 %v3215
    %4253 = vmatprep.subr.bf16.mxu0 %v3248
    %4254 = vmatpush1.bf16.msra.mxu0 %v3247
    %4255 = vmatprep.subr.bf16.mxu0 %v3280
    %4256 = vmatpush1.bf16.msra.mxu0 %v3279
    %4257 = vmatprep.subr.bf16.mxu0 %v3312
    %4258 = vmatpush1.bf16.msra.mxu0 %v3311
    %4259 = vmatprep.subr.bf16.mxu0 %v3344
    %4260 = vmatpush1.bf16.msra.mxu0 %v3343
    %4261 = vmatprep.subr.bf16.mxu0 %v3376
    %4262 = vmatpush1.bf16.msra.mxu0 %v3375
    %4263 = vmatprep.mubr.bf16.mxu0 %v830
    %4264 = vmatmul.mubr.bf16.gmra.mrb[0].mxu0 %v829
    %v4265 = vpop.f32.mrb[0].mxu0
    %v4266 = vadd.f32 0.0, %v4265
    %v4267 = vpop.f32.mrb[0].mxu0
    %v4268 = vadd.f32 0.0, %v4267
    %v4269 = vpop.f32.mrb[0].mxu0
    %v4270 = vpop.f32.mrb[0].mxu0
    %4271 = vdwg.mxu0
    %4272 = vmatprep.subr.bf16.mxu0 %v2898
    %4273 = vmatpush1.bf16.msra.mxu0 %v2897
    %4274 = vmatprep.subr.bf16.mxu0 %v2930
    %4275 = vmatpush1.bf16.msra.mxu0 %v2929
    %4276 = vmatprep.subr.bf16.mxu0 %v2962
    %4277 = vmatpush1.bf16.msra.mxu0 %v2961
    %4278 = vmatprep.subr.bf16.mxu0 %v2994
    %4279 = vmatpush1.bf16.msra.mxu0 %v2993
    %4280 = vmatprep.subr.bf16.mxu0 %v3026
    %4281 = vmatpush1.bf16.msra.mxu0 %v3025
    %4282 = vmatprep.subr.bf16.mxu0 %v3058
    %4283 = vmatpush1.bf16.msra.mxu0 %v3057
    %4284 = vmatprep.subr.bf16.mxu0 %v3090
    %4285 = vmatpush1.bf16.msra.mxu0 %v3089
    %4286 = vmatprep.subr.bf16.mxu0 %v3122
    %4287 = vmatpush1.bf16.msra.mxu0 %v3121
    %4288 = vmatprep.subr.bf16.mxu0 %v3154
    %4289 = vmatpush1.bf16.msra.mxu0 %v3153
    %4290 = vmatprep.subr.bf16.mxu0 %v3186
    %4291 = vmatpush1.bf16.msra.mxu0 %v3185
    %4292 = vmatprep.subr.bf16.mxu0 %v3218
    %4293 = vmatpush1.bf16.msra.mxu0 %v3217
    %4294 = vmatprep.subr.bf16.mxu0 %v3250
    %4295 = vmatpush1.bf16.msra.mxu0 %v3249
    %4296 = vmatprep.subr.bf16.mxu0 %v3282
    %4297 = vmatpush1.bf16.msra.mxu0 %v3281
    %4298 = vmatprep.subr.bf16.mxu0 %v3314
    %4299 = vmatpush1.bf16.msra.mxu0 %v3313
    %4300 = vmatprep.subr.bf16.mxu0 %v3346
    %4301 = vmatpush1.bf16.msra.mxu0 %v3345
    %4302 = vmatprep.subr.bf16.mxu0 %v3378
    %4303 = vmatpush1.bf16.msra.mxu0 %v3377
    %4304 = vmatprep.mubr.bf16.mxu0 %v830
    %4305 = vmatmul.mubr.bf16.gmra.mrb[0].mxu0 %v829
    %v4306 = vpop.f32.mrb[0].mxu0
    %v4307 = vadd.f32 0.0, %v4306
    %v4308 = vpop.f32.mrb[0].mxu0
    %v4309 = vadd.f32 0.0, %v4308
    %v4310 = vpop.f32.mrb[0].mxu0
    %v4311 = vpop.f32.mrb[0].mxu0
    %4312 = vdwg.mxu0
    %4313 = vmatprep.subr.bf16.mxu0 %v2900
    %4314 = vmatpush1.bf16.msra.mxu0 %v2899
    %4315 = vmatprep.subr.bf16.mxu0 %v2932
    %4316 = vmatpush1.bf16.msra.mxu0 %v2931
    %4317 = vmatprep.subr.bf16.mxu0 %v2964
    %4318 = vmatpush1.bf16.msra.mxu0 %v2963
    %4319 = vmatprep.subr.bf16.mxu0 %v2996
    %4320 = vmatpush1.bf16.msra.mxu0 %v2995
    %4321 = vmatprep.subr.bf16.mxu0 %v3028
    %4322 = vmatpush1.bf16.msra.mxu0 %v3027
    %4323 = vmatprep.subr.bf16.mxu0 %v3060
    %4324 = vmatpush1.bf16.msra.mxu0 %v3059
    %4325 = vmatprep.subr.bf16.mxu0 %v3092
    %4326 = vmatpush1.bf16.msra.mxu0 %v3091
    %4327 = vmatprep.subr.bf16.mxu0 %v3124
    %4328 = vmatpush1.bf16.msra.mxu0 %v3123
    %4329 = vmatprep.subr.bf16.mxu0 %v3156
    %4330 = vmatpush1.bf16.msra.mxu0 %v3155
    %4331 = vmatprep.subr.bf16.mxu0 %v3188
    %4332 = vmatpush1.bf16.msra.mxu0 %v3187
    %4333 = vmatprep.subr.bf16.mxu0 %v3220
    %4334 = vmatpush1.bf16.msra.mxu0 %v3219
    %4335 = vmatprep.subr.bf16.mxu0 %v3252
    %4336 = vmatpush1.bf16.msra.mxu0 %v3251
    %4337 = vmatprep.subr.bf16.mxu0 %v3284
    %4338 = vmatpush1.bf16.msra.mxu0 %v3283
    %4339 = vmatprep.subr.bf16.mxu0 %v3316
    %4340 = vmatpush1.bf16.msra.mxu0 %v3315
    %4341 = vmatprep.subr.bf16.mxu0 %v3348
    %4342 = vmatpush1.bf16.msra.mxu0 %v3347
    %4343 = vmatprep.subr.bf16.mxu0 %v3380
    %4344 = vmatpush1.bf16.msra.mxu0 %v3379
    %4345 = vmatprep.mubr.bf16.mxu0 %v830
    %4346 = vmatmul.mubr.bf16.gmra.mrb[0].mxu0 %v829
    %v4347 = vpop.f32.mrb[0].mxu0
    %v4348 = vadd.f32 0.0, %v4347
    %v4349 = vpop.f32.mrb[0].mxu0
    %v4350 = vadd.f32 0.0, %v4349
    %v4351 = vpop.f32.mrb[0].mxu0
    %v4352 = vpop.f32.mrb[0].mxu0
    %4353 = vdwg.mxu0
    %4354 = vmatprep.subr.bf16.mxu0 %v2902
    %4355 = vmatpush1.bf16.msra.mxu0 %v2901
    %4356 = vmatprep.subr.bf16.mxu0 %v2934
    %4357 = vmatpush1.bf16.msra.mxu0 %v2933
    %4358 = vmatprep.subr.bf16.mxu0 %v2966
    %4359 = vmatpush1.bf16.msra.mxu0 %v2965
    %4360 = vmatprep.subr.bf16.mxu0 %v2998
    %4361 = vmatpush1.bf16.msra.mxu0 %v2997
    %4362 = vmatprep.subr.bf16.mxu0 %v3030
    %4363 = vmatpush1.bf16.msra.mxu0 %v3029
    %4364 = vmatprep.subr.bf16.mxu0 %v3062
    %4365 = vmatpush1.bf16.msra.mxu0 %v3061
    %4366 = vmatprep.subr.bf16.mxu0 %v3094
    %4367 = vmatpush1.bf16.msra.mxu0 %v3093
    %4368 = vmatprep.subr.bf16.mxu0 %v3126
    %4369 = vmatpush1.bf16.msra.mxu0 %v3125
    %4370 = vmatprep.subr.bf16.mxu0 %v3158
    %4371 = vmatpush1.bf16.msra.mxu0 %v3157
    %4372 = vmatprep.subr.bf16.mxu0 %v3190
    %4373 = vmatpush1.bf16.msra.mxu0 %v3189
    %4374 = vmatprep.subr.bf16.mxu0 %v3222
    %4375 = vmatpush1.bf16.msra.mxu0 %v3221
    %4376 = vmatprep.subr.bf16.mxu0 %v3254
    %4377 = vmatpush1.bf16.msra.mxu0 %v3253
    %4378 = vmatprep.subr.bf16.mxu0 %v3286
    %4379 = vmatpush1.bf16.msra.mxu0 %v3285
    %4380 = vmatprep.subr.bf16.mxu0 %v3318
    %4381 = vmatpush1.bf16.msra.mxu0 %v3317
    %4382 = vmatprep.subr.bf16.mxu0 %v3350
    %4383 = vmatpush1.bf16.msra.mxu0 %v3349
    %4384 = vmatprep.subr.bf16.mxu0 %v3382
    %4385 = vmatpush1.bf16.msra.mxu0 %v3381
    %4386 = vmatprep.mubr.bf16.mxu0 %v830
    %4387 = vmatmul.mubr.bf16.gmra.mrb[0].mxu0 %v829
    %v4388 = vpop.f32.mrb[0].mxu0
    %v4389 = vadd.f32 0.0, %v4388
    %v4390 = vpop.f32.mrb[0].mxu0
    %v4391 = vadd.f32 0.0, %v4390
    %v4392 = vpop.f32.mrb[0].mxu0
    %v4393 = vpop.f32.mrb[0].mxu0
    %4394 = vdwg.mxu0
    %4395 = vmatprep.subr.bf16.mxu0 %v2904
    %4396 = vmatpush1.bf16.msra.mxu0 %v2903
    %4397 = vmatprep.subr.bf16.mxu0 %v2936
    %4398 = vmatpush1.bf16.msra.mxu0 %v2935
    %4399 = vmatprep.subr.bf16.mxu0 %v2968
    %4400 = vmatpush1.bf16.msra.mxu0 %v2967
    %4401 = vmatprep.subr.bf16.mxu0 %v3000
    %4402 = vmatpush1.bf16.msra.mxu0 %v2999
    %4403 = vmatprep.subr.bf16.mxu0 %v3032
    %4404 = vmatpush1.bf16.msra.mxu0 %v3031
    %4405 = vmatprep.subr.bf16.mxu0 %v3064
    %4406 = vmatpush1.bf16.msra.mxu0 %v3063
    %4407 = vmatprep.subr.bf16.mxu0 %v3096
    %4408 = vmatpush1.bf16.msra.mxu0 %v3095
    %4409 = vmatprep.subr.bf16.mxu0 %v3128
    %4410 = vmatpush1.bf16.msra.mxu0 %v3127
    %4411 = vmatprep.subr.bf16.mxu0 %v3160
    %4412 = vmatpush1.bf16.msra.mxu0 %v3159
    %4413 = vmatprep.subr.bf16.mxu0 %v3192
    %4414 = vmatpush1.bf16.msra.mxu0 %v3191
    %4415 = vmatprep.subr.bf16.mxu0 %v3224
    %4416 = vmatpush1.bf16.msra.mxu0 %v3223
    %4417 = vmatprep.subr.bf16.mxu0 %v3256
    %4418 = vmatpush1.bf16.msra.mxu0 %v3255
    %4419 = vmatprep.subr.bf16.mxu0 %v3288
    %4420 = vmatpush1.bf16.msra.mxu0 %v3287
    %4421 = vmatprep.subr.bf16.mxu0 %v3320
    %4422 = vmatpush1.bf16.msra.mxu0 %v3319
    %4423 = vmatprep.subr.bf16.mxu0 %v3352
    %4424 = vmatpush1.bf16.msra.mxu0 %v3351
    %4425 = vmatprep.subr.bf16.mxu0 %v3384
    %4426 = vmatpush1.bf16.msra.mxu0 %v3383
    %4427 = vmatprep.mubr.bf16.mxu0 %v830
    %4428 = vmatmul.mubr.bf16.gmra.mrb[0].mxu0 %v829
    %v4429 = vpop.f32.mrb[0].mxu0
    %v4430 = vadd.f32 0.0, %v4429
    %v4431 = vpop.f32.mrb[0].mxu0
    %v4432 = vadd.f32 0.0, %v4431
    %v4433 = vpop.f32.mrb[0].mxu0
    %v4434 = vpop.f32.mrb[0].mxu0
    %4435 = vdwg.mxu0
    %4436 = vmatprep.subr.bf16.mxu0 %v2906
    %4437 = vmatpush1.bf16.msra.mxu0 %v2905
    %4438 = vmatprep.subr.bf16.mxu0 %v2938
    %4439 = vmatpush1.bf16.msra.mxu0 %v2937
    %4440 = vmatprep.subr.bf16.mxu0 %v2970
    %4441 = vmatpush1.bf16.msra.mxu0 %v2969
    %4442 = vmatprep.subr.bf16.mxu0 %v3002
    %4443 = vmatpush1.bf16.msra.mxu0 %v3001
    %4444 = vmatprep.subr.bf16.mxu0 %v3034
    %4445 = vmatpush1.bf16.msra.mxu0 %v3033
    %4446 = vmatprep.subr.bf16.mxu0 %v3066
    %4447 = vmatpush1.bf16.msra.mxu0 %v3065
    %4448 = vmatprep.subr.bf16.mxu0 %v3098
    %4449 = vmatpush1.bf16.msra.mxu0 %v3097
    %4450 = vmatprep.subr.bf16.mxu0 %v3130
    %4451 = vmatpush1.bf16.msra.mxu0 %v3129
    %4452 = vmatprep.subr.bf16.mxu0 %v3162
    %4453 = vmatpush1.bf16.msra.mxu0 %v3161
    %4454 = vmatprep.subr.bf16.mxu0 %v3194
    %4455 = vmatpush1.bf16.msra.mxu0 %v3193
    %4456 = vmatprep.subr.bf16.mxu0 %v3226
    %4457 = vmatpush1.bf16.msra.mxu0 %v3225
    %4458 = vmatprep.subr.bf16.mxu0 %v3258
    %4459 = vmatpush1.bf16.msra.mxu0 %v3257
    %4460 = vmatprep.subr.bf16.mxu0 %v3290
    %4461 = vmatpush1.bf16.msra.mxu0 %v3289
    %4462 = vmatprep.subr.bf16.mxu0 %v3322
    %4463 = vmatpush1.bf16.msra.mxu0 %v3321
    %4464 = vmatprep.subr.bf16.mxu0 %v3354
    %4465 = vmatpush1.bf16.msra.mxu0 %v3353
    %4466 = vmatprep.subr.bf16.mxu0 %v3386
    %4467 = vmatpush1.bf16.msra.mxu0 %v3385
    %4468 = vmatprep.mubr.bf16.mxu0 %v830
    %4469 = vmatmul.mubr.bf16.gmra.mrb[0].mxu0 %v829
    %v4470 = vpop.f32.mrb[0].mxu0
    %v4471 = vadd.f32 0.0, %v4470
    %v4472 = vpop.f32.mrb[0].mxu0
    %v4473 = vadd.f32 0.0, %v4472
    %v4474 = vpop.f32.mrb[0].mxu0
    %v4475 = vpop.f32.mrb[0].mxu0
    %4476 = vdwg.mxu0
    %4477 = vmatprep.subr.bf16.mxu0 %v2908
    %4478 = vmatpush1.bf16.msra.mxu0 %v2907
    %4479 = vmatprep.subr.bf16.mxu0 %v2940
    %4480 = vmatpush1.bf16.msra.mxu0 %v2939
    %4481 = vmatprep.subr.bf16.mxu0 %v2972
    %4482 = vmatpush1.bf16.msra.mxu0 %v2971
    %4483 = vmatprep.subr.bf16.mxu0 %v3004
    %4484 = vmatpush1.bf16.msra.mxu0 %v3003
    %4485 = vmatprep.subr.bf16.mxu0 %v3036
    %4486 = vmatpush1.bf16.msra.mxu0 %v3035
    %4487 = vmatprep.subr.bf16.mxu0 %v3068
    %4488 = vmatpush1.bf16.msra.mxu0 %v3067
    %4489 = vmatprep.subr.bf16.mxu0 %v3100
    %4490 = vmatpush1.bf16.msra.mxu0 %v3099
    %4491 = vmatprep.subr.bf16.mxu0 %v3132
    %4492 = vmatpush1.bf16.msra.mxu0 %v3131
    %4493 = vmatprep.subr.bf16.mxu0 %v3164
    %4494 = vmatpush1.bf16.msra.mxu0 %v3163
    %4495 = vmatprep.subr.bf16.mxu0 %v3196
    %4496 = vmatpush1.bf16.msra.mxu0 %v3195
    %4497 = vmatprep.subr.bf16.mxu0 %v3228
    %4498 = vmatpush1.bf16.msra.mxu0 %v3227
    %4499 = vmatprep.subr.bf16.mxu0 %v3260
    %4500 = vmatpush1.bf16.msra.mxu0 %v3259
    %4501 = vmatprep.subr.bf16.mxu0 %v3292
    %4502 = vmatpush1.bf16.msra.mxu0 %v3291
    %4503 = vmatprep.subr.bf16.mxu0 %v3324
    %4504 = vmatpush1.bf16.msra.mxu0 %v3323
    %4505 = vmatprep.subr.bf16.mxu0 %v3356
    %4506 = vmatpush1.bf16.msra.mxu0 %v3355
    %4507 = vmatprep.subr.bf16.mxu0 %v3388
    %4508 = vmatpush1.bf16.msra.mxu0 %v3387
    %4509 = vmatprep.mubr.bf16.mxu0 %v830
    %4510 = vmatmul.mubr.bf16.gmra.mrb[0].mxu0 %v829
    %v4511 = vpop.f32.mrb[0].mxu0
    %v4512 = vadd.f32 0.0, %v4511
    %v4513 = vpop.f32.mrb[0].mxu0
    %v4514 = vadd.f32 0.0, %v4513
    %v4515 = vpop.f32.mrb[0].mxu0
    %v4516 = vpop.f32.mrb[0].mxu0
    %4517 = vdwg.mxu0
    %4518 = vmatprep.subr.bf16.mxu0 %v2910
    %4519 = vmatpush1.bf16.msra.mxu0 %v2909
    %4520 = vmatprep.subr.bf16.mxu0 %v2942
    %4521 = vmatpush1.bf16.msra.mxu0 %v2941
    %4522 = vmatprep.subr.bf16.mxu0 %v2974
    %4523 = vmatpush1.bf16.msra.mxu0 %v2973
    %4524 = vmatprep.subr.bf16.mxu0 %v3006
    %4525 = vmatpush1.bf16.msra.mxu0 %v3005
    %4526 = vmatprep.subr.bf16.mxu0 %v3038
    %4527 = vmatpush1.bf16.msra.mxu0 %v3037
    %4528 = vmatprep.subr.bf16.mxu0 %v3070
    %4529 = vmatpush1.bf16.msra.mxu0 %v3069
    %4530 = vmatprep.subr.bf16.mxu0 %v3102
    %4531 = vmatpush1.bf16.msra.mxu0 %v3101
    %4532 = vmatprep.subr.bf16.mxu0 %v3134
    %4533 = vmatpush1.bf16.msra.mxu0 %v3133
    %4534 = vmatprep.subr.bf16.mxu0 %v3166
    %4535 = vmatpush1.bf16.msra.mxu0 %v3165
    %4536 = vmatprep.subr.bf16.mxu0 %v3198
    %4537 = vmatpush1.bf16.msra.mxu0 %v3197
    %4538 = vmatprep.subr.bf16.mxu0 %v3230
    %4539 = vmatpush1.bf16.msra.mxu0 %v3229
    %4540 = vmatprep.subr.bf16.mxu0 %v3262
    %4541 = vmatpush1.bf16.msra.mxu0 %v3261
    %4542 = vmatprep.subr.bf16.mxu0 %v3294
    %4543 = vmatpush1.bf16.msra.mxu0 %v3293
    %4544 = vmatprep.subr.bf16.mxu0 %v3326
    %4545 = vmatpush1.bf16.msra.mxu0 %v3325
    %4546 = vmatprep.subr.bf16.mxu0 %v3358
    %4547 = vmatpush1.bf16.msra.mxu0 %v3357
    %4548 = vmatprep.subr.bf16.mxu0 %v3390
    %4549 = vmatpush1.bf16.msra.mxu0 %v3389
    %4550 = vmatprep.mubr.bf16.mxu0 %v830
    %4551 = vmatmul.mubr.bf16.gmra.mrb[0].mxu0 %v829
    %v4552 = vpop.f32.mrb[0].mxu0
    %v4553 = vadd.f32 0.0, %v4552
    %v4554 = vpop.f32.mrb[0].mxu0
    %v4555 = vadd.f32 0.0, %v4554
    %v4556 = vpop.f32.mrb[0].mxu0
    %v4557 = vpop.f32.mrb[0].mxu0
    %4558 = vdwg.mxu0
    %v4561 = vcombine.low %v3938, %v3940
    %v4563 = vunpack.c.l.s4 1966171168
    %v4564 = vunpack.c.0.s8 %v4563
    %v4565 = vlaneseq
    %v4566 = vshrl.u32 %v4565, 7
    %v4567 = vsub.s32 %v4564, %v4566
    %v4568 = vrot.slane %v4561, %v4567
    %v4570 = vunpack.c.l.s4 1966171168
    %v4571 = vunpack.c.0.s8 %v4570
    %v4572 = vlaneseq
    %v4573 = vshrl.u32 %v4572, 7
    %v4574 = vsub.s32 %v4571, %v4573
    %v4575 = vrot.slane %v4568, %v4574
    %v4577 = vlaneseq
    %vm4578 = vcmp.ge.s32.totalorder %v4577, 0
    %vm4579 = vcmp.lt.s32.totalorder %v4577, 256
    %vm4580 = vmand %vm4578, %vm4579
    %4581 = vst.msk [vmem:[#allocation2] ss:$8 sm:$0x3] %vm4580, %v4575
    %4582 = vst.msk [vmem:[#allocation2] ss:$8 sm:$0x0] %vm4580, %v4575
    %v4585 = vcombine.low %v3979, %v3981
    %v4587 = vunpack.c.l.s4 1966171168
    %v4588 = vunpack.c.0.s8 %v4587
    %v4589 = vlaneseq
    %v4590 = vshrl.u32 %v4589, 7
    %v4591 = vsub.s32 %v4588, %v4590
    %v4592 = vrot.slane %v4585, %v4591
    %v4594 = vunpack.c.l.s4 1966171168
    %v4595 = vunpack.c.0.s8 %v4594
    %v4596 = vlaneseq
    %v4597 = vshrl.u32 %v4596, 7
    %v4598 = vsub.s32 %v4595, %v4597
    %v4599 = vrot.slane %v4592, %v4598
    %s4601 = scalar_lea.vmem [#allocation2], 1
    %4602 = vst.msk [vmem:[%s4601] ss:$8 sm:$0x3] %vm4580, %v4599
    %4603 = vst.msk [vmem:[%s4601] ss:$8 sm:$0x0] %vm4580, %v4599
    %v4606 = vcombine.low %v4020, %v4022
    %v4608 = vunpack.c.l.s4 1966171168
    %v4609 = vunpack.c.0.s8 %v4608
    %v4610 = vlaneseq
    %v4611 = vshrl.u32 %v4610, 7
    %v4612 = vsub.s32 %v4609, %v4611
    %v4613 = vrot.slane %v4606, %v4612
    %v4615 = vunpack.c.l.s4 1966171168
    %v4616 = vunpack.c.0.s8 %v4615
    %v4617 = vlaneseq
    %v4618 = vshrl.u32 %v4617, 7
    %v4619 = vsub.s32 %v4616, %v4618
    %v4620 = vrot.slane %v4613, %v4619
    %s4622 = scalar_lea.vmem [#allocation2], 2
    %4623 = vst.msk [vmem:[%s4622] ss:$8 sm:$0x3] %vm4580, %v4620
    %4624 = vst.msk [vmem:[%s4622] ss:$8 sm:$0x0] %vm4580, %v4620
    %v4627 = vcombine.low %v4061, %v4063
    %v4629 = vunpack.c.l.s4 1966171168
    %v4630 = vunpack.c.0.s8 %v4629
    %v4631 = vlaneseq
    %v4632 = vshrl.u32 %v4631, 7
    %v4633 = vsub.s32 %v4630, %v4632
    %v4634 = vrot.slane %v4627, %v4633
    %v4636 = vunpack.c.l.s4 1966171168
    %v4637 = vunpack.c.0.s8 %v4636
    %v4638 = vlaneseq
    %v4639 = vshrl.u32 %v4638, 7
    %v4640 = vsub.s32 %v4637, %v4639
    %v4641 = vrot.slane %v4634, %v4640
    %s4643 = scalar_lea.vmem [#allocation2], 3
    %4644 = vst.msk [vmem:[%s4643] ss:$8 sm:$0x3] %vm4580, %v4641
    %4645 = vst.msk [vmem:[%s4643] ss:$8 sm:$0x0] %vm4580, %v4641
    %v4648 = vcombine.low %v4102, %v4104
    %v4650 = vunpack.c.l.s4 1966171168
    %v4651 = vunpack.c.0.s8 %v4650
    %v4652 = vlaneseq
    %v4653 = vshrl.u32 %v4652, 7
    %v4654 = vsub.s32 %v4651, %v4653
    %v4655 = vrot.slane %v4648, %v4654
    %v4657 = vunpack.c.l.s4 1966171168
    %v4658 = vunpack.c.0.s8 %v4657
    %v4659 = vlaneseq
    %v4660 = vshrl.u32 %v4659, 7
    %v4661 = vsub.s32 %v4658, %v4660
    %v4662 = vrot.slane %v4655, %v4661
    %s4664 = scalar_lea.vmem [#allocation2], 4
    %4665 = vst.msk [vmem:[%s4664] ss:$8 sm:$0x3] %vm4580, %v4662
    %4666 = vst.msk [vmem:[%s4664] ss:$8 sm:$0x0] %vm4580, %v4662
    %v4669 = vcombine.low %v4143, %v4145
    %v4671 = vunpack.c.l.s4 1966171168
    %v4672 = vunpack.c.0.s8 %v4671
    %v4673 = vlaneseq
    %v4674 = vshrl.u32 %v4673, 7
    %v4675 = vsub.s32 %v4672, %v4674
    %v4676 = vrot.slane %v4669, %v4675
    %v4678 = vunpack.c.l.s4 1966171168
    %v4679 = vunpack.c.0.s8 %v4678
    %v4680 = vlaneseq
    %v4681 = vshrl.u32 %v4680, 7
    %v4682 = vsub.s32 %v4679, %v4681
    %v4683 = vrot.slane %v4676, %v4682
    %s4685 = scalar_lea.vmem [#allocation2], 5
    %4686 = vst.msk [vmem:[%s4685] ss:$8 sm:$0x3] %vm4580, %v4683
    %4687 = vst.msk [vmem:[%s4685] ss:$8 sm:$0x0] %vm4580, %v4683
    %v4690 = vcombine.low %v4184, %v4186
    %v4692 = vunpack.c.l.s4 1966171168
    %v4693 = vunpack.c.0.s8 %v4692
    %v4694 = vlaneseq
    %v4695 = vshrl.u32 %v4694, 7
    %v4696 = vsub.s32 %v4693, %v4695
    %v4697 = vrot.slane %v4690, %v4696
    %v4699 = vunpack.c.l.s4 1966171168
    %v4700 = vunpack.c.0.s8 %v4699
    %v4701 = vlaneseq
    %v4702 = vshrl.u32 %v4701, 7
    %v4703 = vsub.s32 %v4700, %v4702
    %v4704 = vrot.slane %v4697, %v4703
    %s4706 = scalar_lea.vmem [#allocation2], 6
    %4707 = vst.msk [vmem:[%s4706] ss:$8 sm:$0x3] %vm4580, %v4704
    %4708 = vst.msk [vmem:[%s4706] ss:$8 sm:$0x0] %vm4580, %v4704
    %v4711 = vcombine.low %v4225, %v4227
    %v4713 = vunpack.c.l.s4 1966171168
    %v4714 = vunpack.c.0.s8 %v4713
    %v4715 = vlaneseq
    %v4716 = vshrl.u32 %v4715, 7
    %v4717 = vsub.s32 %v4714, %v4716
    %v4718 = vrot.slane %v4711, %v4717
    %v4720 = vunpack.c.l.s4 1966171168
    %v4721 = vunpack.c.0.s8 %v4720
    %v4722 = vlaneseq
    %v4723 = vshrl.u32 %v4722, 7
    %v4724 = vsub.s32 %v4721, %v4723
    %v4725 = vrot.slane %v4718, %v4724
    %s4727 = scalar_lea.vmem [#allocation2], 7
    %4728 = vst.msk [vmem:[%s4727] ss:$8 sm:$0x3] %vm4580, %v4725
    %4729 = vst.msk [vmem:[%s4727] ss:$8 sm:$0x0] %vm4580, %v4725
    %v4732 = vcombine.low %v4266, %v4268
    %v4734 = vunpack.c.l.s4 1966171168
    %v4735 = vunpack.c.0.s8 %v4734
    %v4736 = vlaneseq
    %v4737 = vshrl.u32 %v4736, 7
    %v4738 = vsub.s32 %v4735, %v4737
    %v4739 = vrot.slane %v4732, %v4738
    %v4741 = vunpack.c.l.s4 1966171168
    %v4742 = vunpack.c.0.s8 %v4741
    %v4743 = vlaneseq
    %v4744 = vshrl.u32 %v4743, 7
    %v4745 = vsub.s32 %v4742, %v4744
    %v4746 = vrot.slane %v4739, %v4745
    %s4748 = scalar_lea.vmem [#allocation2], 16
    %4749 = vst.msk [vmem:[%s4748] ss:$8 sm:$0x3] %vm4580, %v4746
    %4750 = vst.msk [vmem:[%s4748] ss:$8 sm:$0x0] %vm4580, %v4746
    %v4753 = vcombine.low %v4307, %v4309
    %v4755 = vunpack.c.l.s4 1966171168
    %v4756 = vunpack.c.0.s8 %v4755
    %v4757 = vlaneseq
    %v4758 = vshrl.u32 %v4757, 7
    %v4759 = vsub.s32 %v4756, %v4758
    %v4760 = vrot.slane %v4753, %v4759
    %v4762 = vunpack.c.l.s4 1966171168
    %v4763 = vunpack.c.0.s8 %v4762
    %v4764 = vlaneseq
    %v4765 = vshrl.u32 %v4764, 7
    %v4766 = vsub.s32 %v4763, %v4765
    %v4767 = vrot.slane %v4760, %v4766
    %s4769 = scalar_lea.vmem [#allocation2], 17
    %4770 = vst.msk [vmem:[%s4769] ss:$8 sm:$0x3] %vm4580, %v4767
    %4771 = vst.msk [vmem:[%s4769] ss:$8 sm:$0x0] %vm4580, %v4767
    %v4774 = vcombine.low %v4348, %v4350
    %v4776 = vunpack.c.l.s4 1966171168
    %v4777 = vunpack.c.0.s8 %v4776
    %v4778 = vlaneseq
    %v4779 = vshrl.u32 %v4778, 7
    %v4780 = vsub.s32 %v4777, %v4779
    %v4781 = vrot.slane %v4774, %v4780
    %v4783 = vunpack.c.l.s4 1966171168
    %v4784 = vunpack.c.0.s8 %v4783
    %v4785 = vlaneseq
    %v4786 = vshrl.u32 %v4785, 7
    %v4787 = vsub.s32 %v4784, %v4786
    %v4788 = vrot.slane %v4781, %v4787
    %s4790 = scalar_lea.vmem [#allocation2], 18
    %4791 = vst.msk [vmem:[%s4790] ss:$8 sm:$0x3] %vm4580, %v4788
    %4792 = vst.msk [vmem:[%s4790] ss:$8 sm:$0x0] %vm4580, %v4788
    %v4795 = vcombine.low %v4389, %v4391
    %v4797 = vunpack.c.l.s4 1966171168
    %v4798 = vunpack.c.0.s8 %v4797
    %v4799 = vlaneseq
    %v4800 = vshrl.u32 %v4799, 7
    %v4801 = vsub.s32 %v4798, %v4800
    %v4802 = vrot.slane %v4795, %v4801
    %v4804 = vunpack.c.l.s4 1966171168
    %v4805 = vunpack.c.0.s8 %v4804
    %v4806 = vlaneseq
    %v4807 = vshrl.u32 %v4806, 7
    %v4808 = vsub.s32 %v4805, %v4807
    %v4809 = vrot.slane %v4802, %v4808
    %s4811 = scalar_lea.vmem [#allocation2], 19
    %4812 = vst.msk [vmem:[%s4811] ss:$8 sm:$0x3] %vm4580, %v4809
    %4813 = vst.msk [vmem:[%s4811] ss:$8 sm:$0x0] %vm4580, %v4809
    %v4816 = vcombine.low %v4430, %v4432
    %v4818 = vunpack.c.l.s4 1966171168
    %v4819 = vunpack.c.0.s8 %v4818
    %v4820 = vlaneseq
    %v4821 = vshrl.u32 %v4820, 7
    %v4822 = vsub.s32 %v4819, %v4821
    %v4823 = vrot.slane %v4816, %v4822
    %v4825 = vunpack.c.l.s4 1966171168
    %v4826 = vunpack.c.0.s8 %v4825
    %v4827 = vlaneseq
    %v4828 = vshrl.u32 %v4827, 7
    %v4829 = vsub.s32 %v4826, %v4828
    %v4830 = vrot.slane %v4823, %v4829
    %s4832 = scalar_lea.vmem [#allocation2], 20
    %4833 = vst.msk [vmem:[%s4832] ss:$8 sm:$0x3] %vm4580, %v4830
    %4834 = vst.msk [vmem:[%s4832] ss:$8 sm:$0x0] %vm4580, %v4830
    %v4837 = vcombine.low %v4471, %v4473
    %v4839 = vunpack.c.l.s4 1966171168
    %v4840 = vunpack.c.0.s8 %v4839
    %v4841 = vlaneseq
    %v4842 = vshrl.u32 %v4841, 7
    %v4843 = vsub.s32 %v4840, %v4842
    %v4844 = vrot.slane %v4837, %v4843
    %v4846 = vunpack.c.l.s4 1966171168
    %v4847 = vunpack.c.0.s8 %v4846
    %v4848 = vlaneseq
    %v4849 = vshrl.u32 %v4848, 7
    %v4850 = vsub.s32 %v4847, %v4849
    %v4851 = vrot.slane %v4844, %v4850
    %s4853 = scalar_lea.vmem [#allocation2], 21
    %4854 = vst.msk [vmem:[%s4853] ss:$8 sm:$0x3] %vm4580, %v4851
    %4855 = vst.msk [vmem:[%s4853] ss:$8 sm:$0x0] %vm4580, %v4851
    %v4858 = vcombine.low %v4512, %v4514
    %v4860 = vunpack.c.l.s4 1966171168
    %v4861 = vunpack.c.0.s8 %v4860
    %v4862 = vlaneseq
    %v4863 = vshrl.u32 %v4862, 7
    %v4864 = vsub.s32 %v4861, %v4863
    %v4865 = vrot.slane %v4858, %v4864
    %v4867 = vunpack.c.l.s4 1966171168
    %v4868 = vunpack.c.0.s8 %v4867
    %v4869 = vlaneseq
    %v4870 = vshrl.u32 %v4869, 7
    %v4871 = vsub.s32 %v4868, %v4870
    %v4872 = vrot.slane %v4865, %v4871
    %s4874 = scalar_lea.vmem [#allocation2], 22
    %4875 = vst.msk [vmem:[%s4874] ss:$8 sm:$0x3] %vm4580, %v4872
    %4876 = vst.msk [vmem:[%s4874] ss:$8 sm:$0x0] %vm4580, %v4872
    %v4879 = vcombine.low %v4553, %v4555
    %v4881 = vunpack.c.l.s4 1966171168
    %v4882 = vunpack.c.0.s8 %v4881
    %v4883 = vlaneseq
    %v4884 = vshrl.u32 %v4883, 7
    %v4885 = vsub.s32 %v4882, %v4884
    %v4886 = vrot.slane %v4879, %v4885
    %v4888 = vunpack.c.l.s4 1966171168
    %v4889 = vunpack.c.0.s8 %v4888
    %v4890 = vlaneseq
    %v4891 = vshrl.u32 %v4890, 7
    %v4892 = vsub.s32 %v4889, %v4891
    %v4893 = vrot.slane %v4886, %v4892
    %s4895 = scalar_lea.vmem [#allocation2], 23
    %4896 = vst.msk [vmem:[%s4895] ss:$8 sm:$0x3] %vm4580, %v4893
    %4897 = vst.msk [vmem:[%s4895] ss:$8 sm:$0x0] %vm4580, %v4893
    %v4898 = vcombine.high %v4568, %v4568
    %v4900 = vunpack.c.l.s4 1966171168
    %v4901 = vunpack.c.0.s8 %v4900
    %v4902 = vlaneseq
    %v4903 = vshrl.u32 %v4902, 7
    %v4904 = vsub.s32 %v4901, %v4903
    %v4905 = vrot.slane %v4898, %v4904
    %s4907 = scalar_lea.vmem [#allocation2], 32
    %4908 = vst.msk [vmem:[%s4907] ss:$8 sm:$0x3] %vm4580, %v4905
    %4909 = vst.msk [vmem:[%s4907] ss:$8 sm:$0x0] %vm4580, %v4905
    %v4910 = vcombine.high %v4592, %v4592
    %v4912 = vunpack.c.l.s4 1966171168
    %v4913 = vunpack.c.0.s8 %v4912
    %v4914 = vlaneseq
    %v4915 = vshrl.u32 %v4914, 7
    %v4916 = vsub.s32 %v4913, %v4915
    %v4917 = vrot.slane %v4910, %v4916
    %s4919 = scalar_lea.vmem [#allocation2], 33
    %4920 = vst.msk [vmem:[%s4919] ss:$8 sm:$0x3] %vm4580, %v4917
    %4921 = vst.msk [vmem:[%s4919] ss:$8 sm:$0x0] %vm4580, %v4917
    %v4922 = vcombine.high %v4613, %v4613
    %v4924 = vunpack.c.l.s4 1966171168
    %v4925 = vunpack.c.0.s8 %v4924
    %v4926 = vlaneseq
    %v4927 = vshrl.u32 %v4926, 7
    %v4928 = vsub.s32 %v4925, %v4927
    %v4929 = vrot.slane %v4922, %v4928
    %s4931 = scalar_lea.vmem [#allocation2], 34
    %4932 = vst.msk [vmem:[%s4931] ss:$8 sm:$0x3] %vm4580, %v4929
    %4933 = vst.msk [vmem:[%s4931] ss:$8 sm:$0x0] %vm4580, %v4929
    %v4934 = vcombine.high %v4634, %v4634
    %v4936 = vunpack.c.l.s4 1966171168
    %v4937 = vunpack.c.0.s8 %v4936
    %v4938 = vlaneseq
    %v4939 = vshrl.u32 %v4938, 7
    %v4940 = vsub.s32 %v4937, %v4939
    %v4941 = vrot.slane %v4934, %v4940
    %s4943 = scalar_lea.vmem [#allocation2], 35
    %4944 = vst.msk [vmem:[%s4943] ss:$8 sm:$0x3] %vm4580, %v4941
    %4945 = vst.msk [vmem:[%s4943] ss:$8 sm:$0x0] %vm4580, %v4941
    %v4946 = vcombine.high %v4655, %v4655
    %v4948 = vunpack.c.l.s4 1966171168
    %v4949 = vunpack.c.0.s8 %v4948
    %v4950 = vlaneseq
    %v4951 = vshrl.u32 %v4950, 7
    %v4952 = vsub.s32 %v4949, %v4951
    %v4953 = vrot.slane %v4946, %v4952
    %s4955 = scalar_lea.vmem [#allocation2], 36
    %4956 = vst.msk [vmem:[%s4955] ss:$8 sm:$0x3] %vm4580, %v4953
    %4957 = vst.msk [vmem:[%s4955] ss:$8 sm:$0x0] %vm4580, %v4953
    %v4958 = vcombine.high %v4676, %v4676
    %v4960 = vunpack.c.l.s4 1966171168
    %v4961 = vunpack.c.0.s8 %v4960
    %v4962 = vlaneseq
    %v4963 = vshrl.u32 %v4962, 7
    %v4964 = vsub.s32 %v4961, %v4963
    %v4965 = vrot.slane %v4958, %v4964
    %s4967 = scalar_lea.vmem [#allocation2], 37
    %4968 = vst.msk [vmem:[%s4967] ss:$8 sm:$0x3] %vm4580, %v4965
    %4969 = vst.msk [vmem:[%s4967] ss:$8 sm:$0x0] %vm4580, %v4965
    %v4970 = vcombine.high %v4697, %v4697
    %v4972 = vunpack.c.l.s4 1966171168
    %v4973 = vunpack.c.0.s8 %v4972
    %v4974 = vlaneseq
    %v4975 = vshrl.u32 %v4974, 7
    %v4976 = vsub.s32 %v4973, %v4975
    %v4977 = vrot.slane %v4970, %v4976
    %s4979 = scalar_lea.vmem [#allocation2], 38
    %4980 = vst.msk [vmem:[%s4979] ss:$8 sm:$0x3] %vm4580, %v4977
    %4981 = vst.msk [vmem:[%s4979] ss:$8 sm:$0x0] %vm4580, %v4977
    %v4982 = vcombine.high %v4718, %v4718
    %v4984 = vunpack.c.l.s4 1966171168
    %v4985 = vunpack.c.0.s8 %v4984
    %v4986 = vlaneseq
    %v4987 = vshrl.u32 %v4986, 7
    %v4988 = vsub.s32 %v4985, %v4987
    %v4989 = vrot.slane %v4982, %v4988
    %s4991 = scalar_lea.vmem [#allocation2], 39
    %4992 = vst.msk [vmem:[%s4991] ss:$8 sm:$0x3] %vm4580, %v4989
    %4993 = vst.msk [vmem:[%s4991] ss:$8 sm:$0x0] %vm4580, %v4989
    %v4994 = vcombine.high %v4739, %v4739
    %v4996 = vunpack.c.l.s4 1966171168
    %v4997 = vunpack.c.0.s8 %v4996
    %v4998 = vlaneseq
    %v4999 = vshrl.u32 %v4998, 7
    %v5000 = vsub.s32 %v4997, %v4999
    %v5001 = vrot.slane %v4994, %v5000
    %s5003 = scalar_lea.vmem [#allocation2], 48
    %5004 = vst.msk [vmem:[%s5003] ss:$8 sm:$0x3] %vm4580, %v5001
    %5005 = vst.msk [vmem:[%s5003] ss:$8 sm:$0x0] %vm4580, %v5001
    %v5006 = vcombine.high %v4760, %v4760
    %v5008 = vunpack.c.l.s4 1966171168
    %v5009 = vunpack.c.0.s8 %v5008
    %v5010 = vlaneseq
    %v5011 = vshrl.u32 %v5010, 7
    %v5012 = vsub.s32 %v5009, %v5011
    %v5013 = vrot.slane %v5006, %v5012
    %s5015 = scalar_lea.vmem [#allocation2], 49
    %5016 = vst.msk [vmem:[%s5015] ss:$8 sm:$0x3] %vm4580, %v5013
    %5017 = vst.msk [vmem:[%s5015] ss:$8 sm:$0x0] %vm4580, %v5013
    %v5018 = vcombine.high %v4781, %v4781
    %v5020 = vunpack.c.l.s4 1966171168
    %v5021 = vunpack.c.0.s8 %v5020
    %v5022 = vlaneseq
    %v5023 = vshrl.u32 %v5022, 7
    %v5024 = vsub.s32 %v5021, %v5023
    %v5025 = vrot.slane %v5018, %v5024
    %s5027 = scalar_lea.vmem [#allocation2], 50
    %5028 = vst.msk [vmem:[%s5027] ss:$8 sm:$0x3] %vm4580, %v5025
    %5029 = vst.msk [vmem:[%s5027] ss:$8 sm:$0x0] %vm4580, %v5025
    %v5030 = vcombine.high %v4802, %v4802
    %v5032 = vunpack.c.l.s4 1966171168
    %v5033 = vunpack.c.0.s8 %v5032
    %v5034 = vlaneseq
    %v5035 = vshrl.u32 %v5034, 7
    %v5036 = vsub.s32 %v5033, %v5035
    %v5037 = vrot.slane %v5030, %v5036
    %s5039 = scalar_lea.vmem [#allocation2], 51
    %5040 = vst.msk [vmem:[%s5039] ss:$8 sm:$0x3] %vm4580, %v5037
    %5041 = vst.msk [vmem:[%s5039] ss:$8 sm:$0x0] %vm4580, %v5037
    %v5042 = vcombine.high %v4823, %v4823
    %v5044 = vunpack.c.l.s4 1966171168
    %v5045 = vunpack.c.0.s8 %v5044
    %v5046 = vlaneseq
    %v5047 = vshrl.u32 %v5046, 7
    %v5048 = vsub.s32 %v5045, %v5047
    %v5049 = vrot.slane %v5042, %v5048
    %s5051 = scalar_lea.vmem [#allocation2], 52
    %5052 = vst.msk [vmem:[%s5051] ss:$8 sm:$0x3] %vm4580, %v5049
    %5053 = vst.msk [vmem:[%s5051] ss:$8 sm:$0x0] %vm4580, %v5049
    %v5054 = vcombine.high %v4844, %v4844
    %v5056 = vunpack.c.l.s4 1966171168
    %v5057 = vunpack.c.0.s8 %v5056
    %v5058 = vlaneseq
    %v5059 = vshrl.u32 %v5058, 7
    %v5060 = vsub.s32 %v5057, %v5059
    %v5061 = vrot.slane %v5054, %v5060
    %s5063 = scalar_lea.vmem [#allocation2], 53
    %5064 = vst.msk [vmem:[%s5063] ss:$8 sm:$0x3] %vm4580, %v5061
    %5065 = vst.msk [vmem:[%s5063] ss:$8 sm:$0x0] %vm4580, %v5061
    %v5066 = vcombine.high %v4865, %v4865
    %v5068 = vunpack.c.l.s4 1966171168
    %v5069 = vunpack.c.0.s8 %v5068
    %v5070 = vlaneseq
    %v5071 = vshrl.u32 %v5070, 7
    %v5072 = vsub.s32 %v5069, %v5071
    %v5073 = vrot.slane %v5066, %v5072
    %s5075 = scalar_lea.vmem [#allocation2], 54
    %5076 = vst.msk [vmem:[%s5075] ss:$8 sm:$0x3] %vm4580, %v5073
    %5077 = vst.msk [vmem:[%s5075] ss:$8 sm:$0x0] %vm4580, %v5073
    %v5078 = vcombine.high %v4886, %v4886
    %v5080 = vunpack.c.l.s4 1966171168
    %v5081 = vunpack.c.0.s8 %v5080
    %v5082 = vlaneseq
    %v5083 = vshrl.u32 %v5082, 7
    %v5084 = vsub.s32 %v5081, %v5083
    %v5085 = vrot.slane %v5078, %v5084
    %s5087 = scalar_lea.vmem [#allocation2], 55
    %5088 = vst.msk [vmem:[%s5087] ss:$8 sm:$0x3] %vm4580, %v5085
    %5089 = vst.msk [vmem:[%s5087] ss:$8 sm:$0x0] %vm4580, %v5085
    %v5090 = vcombine.high %v4575, %v4575
    %s5092 = scalar_lea.vmem [#allocation2], 64
    %5093 = vst.msk [vmem:[%s5092] ss:$8 sm:$0x3] %vm4580, %v5090
    %5094 = vst.msk [vmem:[%s5092] ss:$8 sm:$0x0] %vm4580, %v5090
    %v5095 = vcombine.high %v4599, %v4599
    %s5097 = scalar_lea.vmem [#allocation2], 65
    %5098 = vst.msk [vmem:[%s5097] ss:$8 sm:$0x3] %vm4580, %v5095
    %5099 = vst.msk [vmem:[%s5097] ss:$8 sm:$0x0] %vm4580, %v5095
    %v5100 = vcombine.high %v4620, %v4620
    %s5102 = scalar_lea.vmem [#allocation2], 66
    %5103 = vst.msk [vmem:[%s5102] ss:$8 sm:$0x3] %vm4580, %v5100
    %5104 = vst.msk [vmem:[%s5102] ss:$8 sm:$0x0] %vm4580, %v5100
    %v5105 = vcombine.high %v4641, %v4641
    %s5107 = scalar_lea.vmem [#allocation2], 67
    %5108 = vst.msk [vmem:[%s5107] ss:$8 sm:$0x3] %vm4580, %v5105
    %5109 = vst.msk [vmem:[%s5107] ss:$8 sm:$0x0] %vm4580, %v5105
    %v5110 = vcombine.high %v4662, %v4662
    %s5112 = scalar_lea.vmem [#allocation2], 68
    %5113 = vst.msk [vmem:[%s5112] ss:$8 sm:$0x3] %vm4580, %v5110
    %5114 = vst.msk [vmem:[%s5112] ss:$8 sm:$0x0] %vm4580, %v5110
    %v5115 = vcombine.high %v4683, %v4683
    %s5117 = scalar_lea.vmem [#allocation2], 69
    %5118 = vst.msk [vmem:[%s5117] ss:$8 sm:$0x3] %vm4580, %v5115
    %5119 = vst.msk [vmem:[%s5117] ss:$8 sm:$0x0] %vm4580, %v5115
    %v5120 = vcombine.high %v4704, %v4704
    %s5122 = scalar_lea.vmem [#allocation2], 70
    %5123 = vst.msk [vmem:[%s5122] ss:$8 sm:$0x3] %vm4580, %v5120
    %5124 = vst.msk [vmem:[%s5122] ss:$8 sm:$0x0] %vm4580, %v5120
    %v5125 = vcombine.high %v4725, %v4725
    %s5127 = scalar_lea.vmem [#allocation2], 71
    %5128 = vst.msk [vmem:[%s5127] ss:$8 sm:$0x3] %vm4580, %v5125
    %5129 = vst.msk [vmem:[%s5127] ss:$8 sm:$0x0] %vm4580, %v5125
    %v5130 = vcombine.high %v4746, %v4746
    %s5132 = scalar_lea.vmem [#allocation2], 80
    %5133 = vst.msk [vmem:[%s5132] ss:$8 sm:$0x3] %vm4580, %v5130
    %5134 = vst.msk [vmem:[%s5132] ss:$8 sm:$0x0] %vm4580, %v5130
    %v5135 = vcombine.high %v4767, %v4767
    %s5137 = scalar_lea.vmem [#allocation2], 81
    %5138 = vst.msk [vmem:[%s5137] ss:$8 sm:$0x3] %vm4580, %v5135
    %5139 = vst.msk [vmem:[%s5137] ss:$8 sm:$0x0] %vm4580, %v5135
    %v5140 = vcombine.high %v4788, %v4788
    %s5142 = scalar_lea.vmem [#allocation2], 82
    %5143 = vst.msk [vmem:[%s5142] ss:$8 sm:$0x3] %vm4580, %v5140
    %5144 = vst.msk [vmem:[%s5142] ss:$8 sm:$0x0] %vm4580, %v5140
    %v5145 = vcombine.high %v4809, %v4809
    %s5147 = scalar_lea.vmem [#allocation2], 83
    %5148 = vst.msk [vmem:[%s5147] ss:$8 sm:$0x3] %vm4580, %v5145
    %5149 = vst.msk [vmem:[%s5147] ss:$8 sm:$0x0] %vm4580, %v5145
    %v5150 = vcombine.high %v4830, %v4830
    %s5152 = scalar_lea.vmem [#allocation2], 84
    %5153 = vst.msk [vmem:[%s5152] ss:$8 sm:$0x3] %vm4580, %v5150
    %5154 = vst.msk [vmem:[%s5152] ss:$8 sm:$0x0] %vm4580, %v5150
    %v5155 = vcombine.high %v4851, %v4851
    %s5157 = scalar_lea.vmem [#allocation2], 85
    %5158 = vst.msk [vmem:[%s5157] ss:$8 sm:$0x3] %vm4580, %v5155
    %5159 = vst.msk [vmem:[%s5157] ss:$8 sm:$0x0] %vm4580, %v5155
    %v5160 = vcombine.high %v4872, %v4872
    %s5162 = scalar_lea.vmem [#allocation2], 86
    %5163 = vst.msk [vmem:[%s5162] ss:$8 sm:$0x3] %vm4580, %v5160
    %5164 = vst.msk [vmem:[%s5162] ss:$8 sm:$0x0] %vm4580, %v5160
    %v5165 = vcombine.high %v4893, %v4893
    %s5167 = scalar_lea.vmem [#allocation2], 87
    %5168 = vst.msk [vmem:[%s5167] ss:$8 sm:$0x3] %vm4580, %v5165
    %5169 = vst.msk [vmem:[%s5167] ss:$8 sm:$0x0] %vm4580, %v5165
    %v5170 = vcombine.high %v4905, %v4905
    %s5172 = scalar_lea.vmem [#allocation2], 96
    %5173 = vst.msk [vmem:[%s5172] ss:$8 sm:$0x3] %vm4580, %v5170
    %5174 = vst.msk [vmem:[%s5172] ss:$8 sm:$0x0] %vm4580, %v5170
    %v5175 = vcombine.high %v4917, %v4917
    %s5177 = scalar_lea.vmem [#allocation2], 97
    %5178 = vst.msk [vmem:[%s5177] ss:$8 sm:$0x3] %vm4580, %v5175
    %5179 = vst.msk [vmem:[%s5177] ss:$8 sm:$0x0] %vm4580, %v5175
    %v5180 = vcombine.high %v4929, %v4929
    %s5182 = scalar_lea.vmem [#allocation2], 98
    %5183 = vst.msk [vmem:[%s5182] ss:$8 sm:$0x3] %vm4580, %v5180
    %5184 = vst.msk [vmem:[%s5182] ss:$8 sm:$0x0] %vm4580, %v5180
    %v5185 = vcombine.high %v4941, %v4941
    %s5187 = scalar_lea.vmem [#allocation2], 99
    %5188 = vst.msk [vmem:[%s5187] ss:$8 sm:$0x3] %vm4580, %v5185
    %5189 = vst.msk [vmem:[%s5187] ss:$8 sm:$0x0] %vm4580, %v5185
    %v5190 = vcombine.high %v4953, %v4953
    %s5192 = scalar_lea.vmem [#allocation2], 100
    %5193 = vst.msk [vmem:[%s5192] ss:$8 sm:$0x3] %vm4580, %v5190
    %5194 = vst.msk [vmem:[%s5192] ss:$8 sm:$0x0] %vm4580, %v5190
    %v5195 = vcombine.high %v4965, %v4965
    %s5197 = scalar_lea.vmem [#allocation2], 101
    %5198 = vst.msk [vmem:[%s5197] ss:$8 sm:$0x3] %vm4580, %v5195
    %5199 = vst.msk [vmem:[%s5197] ss:$8 sm:$0x0] %vm4580, %v5195
    %v5200 = vcombine.high %v4977, %v4977
    %s5202 = scalar_lea.vmem [#allocation2], 102
    %5203 = vst.msk [vmem:[%s5202] ss:$8 sm:$0x3] %vm4580, %v5200
    %5204 = vst.msk [vmem:[%s5202] ss:$8 sm:$0x0] %vm4580, %v5200
    %v5205 = vcombine.high %v4989, %v4989
    %s5207 = scalar_lea.vmem [#allocation2], 103
    %5208 = vst.msk [vmem:[%s5207] ss:$8 sm:$0x3] %vm4580, %v5205
    %5209 = vst.msk [vmem:[%s5207] ss:$8 sm:$0x0] %vm4580, %v5205
    %v5210 = vcombine.high %v5001, %v5001
    %s5212 = scalar_lea.vmem [#allocation2], 112
    %5213 = vst.msk [vmem:[%s5212] ss:$8 sm:$0x3] %vm4580, %v5210
    %5214 = vst.msk [vmem:[%s5212] ss:$8 sm:$0x0] %vm4580, %v5210
    %v5215 = vcombine.high %v5013, %v5013
    %s5217 = scalar_lea.vmem [#allocation2], 113
    %5218 = vst.msk [vmem:[%s5217] ss:$8 sm:$0x3] %vm4580, %v5215
    %5219 = vst.msk [vmem:[%s5217] ss:$8 sm:$0x0] %vm4580, %v5215
    %v5220 = vcombine.high %v5025, %v5025
    %s5222 = scalar_lea.vmem [#allocation2], 114
    %5223 = vst.msk [vmem:[%s5222] ss:$8 sm:$0x3] %vm4580, %v5220
    %5224 = vst.msk [vmem:[%s5222] ss:$8 sm:$0x0] %vm4580, %v5220
    %v5225 = vcombine.high %v5037, %v5037
    %s5227 = scalar_lea.vmem [#allocation2], 115
    %5228 = vst.msk [vmem:[%s5227] ss:$8 sm:$0x3] %vm4580, %v5225
    %5229 = vst.msk [vmem:[%s5227] ss:$8 sm:$0x0] %vm4580, %v5225
    %v5230 = vcombine.high %v5049, %v5049
    %s5232 = scalar_lea.vmem [#allocation2], 116
    %5233 = vst.msk [vmem:[%s5232] ss:$8 sm:$0x3] %vm4580, %v5230
    %5234 = vst.msk [vmem:[%s5232] ss:$8 sm:$0x0] %vm4580, %v5230
    %v5235 = vcombine.high %v5061, %v5061
    %s5237 = scalar_lea.vmem [#allocation2], 117
    %5238 = vst.msk [vmem:[%s5237] ss:$8 sm:$0x3] %vm4580, %v5235
    %5239 = vst.msk [vmem:[%s5237] ss:$8 sm:$0x0] %vm4580, %v5235
    %v5240 = vcombine.high %v5073, %v5073
    %s5242 = scalar_lea.vmem [#allocation2], 118
    %5243 = vst.msk [vmem:[%s5242] ss:$8 sm:$0x3] %vm4580, %v5240
    %5244 = vst.msk [vmem:[%s5242] ss:$8 sm:$0x0] %vm4580, %v5240
    %v5245 = vcombine.high %v5085, %v5085
    %s5247 = scalar_lea.vmem [#allocation2], 119
    %5248 = vst.msk [vmem:[%s5247] ss:$8 sm:$0x3] %vm4580, %v5245
    %5249 = vst.msk [vmem:[%s5247] ss:$8 sm:$0x0] %vm4580, %v5245
    %v5250 = vld [vmem:[#allocation2] sm:$0xff]
    %v5251 = vld [vmem:[#allocation2 + $0x8] sm:$0xff]
    %v5252 = vld [vmem:[#allocation2 + $0x10] sm:$0xff]
    %v5253 = vld [vmem:[#allocation2 + $0x18] sm:$0xff]
    %5255 = vset.pattern.permute.xlu0 0
    %5256 = vperm.xlu0 %5255, %v707
    %v5257 = vpop.permute.xlu0 %5256
    %5260 = vset.pattern.permute.xlu0 0
    %5261 = vperm.xlu0 %5260, %v712
    %v5262 = vpop.permute.xlu0 %5261
    %v5264 = vadd.f32 %v5250, %v5257
    %v5265 = vadd.f32 %v5251, %v5257
    %v5266 = vadd.f32 %v5252, %v5262
    %v5267 = vadd.f32 %v5253, %v5262
    %v5268 = vld [vmem:[%s6] sm:$0xff]
    %v5269 = vld [vmem:[%s6 + $0x8] sm:$0xff]
    %5271 = vset.pattern.permute.xlu0 0
    %5272 = vperm.xlu0 %5271, %v5268
    %v5273 = vpop.permute.xlu0 %5272
    %5276 = vset.pattern.permute.xlu0 0
    %5277 = vperm.xlu0 %5276, %v5269
    %v5278 = vpop.permute.xlu0 %5277
    %v5280 = vadd.f32 %v5264, %v5273
    %v5281 = vadd.f32 %v5265, %v5273
    %v5282 = vadd.f32 %v5266, %v5278
    %v5283 = vadd.f32 %v5267, %v5278
    %v5284 = vld [vmem:[#allocation2 + $0x20] sm:$0xff]
    %v5285 = vld [vmem:[#allocation2 + $0x28] sm:$0xff]
    %v5286 = vld [vmem:[#allocation2 + $0x30] sm:$0xff]
    %v5287 = vld [vmem:[#allocation2 + $0x38] sm:$0xff]
    %5288 = vset.pattern.permute.xlu0 1
    %5289 = vperm.xlu0 %5288, %v707
    %v5290 = vpop.permute.xlu0 %5289
    %5292 = vset.pattern.permute.xlu0 1
    %5293 = vperm.xlu0 %5292, %v712
    %v5294 = vpop.permute.xlu0 %5293
    %v5296 = vadd.f32 %v5284, %v5290
    %v5297 = vadd.f32 %v5285, %v5290
    %v5298 = vadd.f32 %v5286, %v5294
    %v5299 = vadd.f32 %v5287, %v5294
    %v5300 = vadd.f32 %v5296, %v5273
    %v5301 = vadd.f32 %v5297, %v5273
    %v5302 = vadd.f32 %v5298, %v5278
    %v5303 = vadd.f32 %v5299, %v5278
    %v5304 = vmul.f32 %v415, %v5280
    %v5305 = vmul.f32 %v417, %v5281
    %v5306 = vmul.f32 %v421, %v5282
    %v5307 = vmul.f32 %v423, %v5283
    %v5308 = vadd.f32 %v5304, %v5306
    %v5309 = vrot.slane %v5308, 4
    %v5310 = vadd.f32 %v5308, %v5309
    %v5311 = vrot.slane %v5310, 2
    %v5312 = vadd.f32 %v5310, %v5311
    %v5313 = vrot.slane %v5312, 1
    %v5314 = vadd.f32 %v5312, %v5313
    %v5315 = vadd.f32 %v5305, %v5307
    %v5316 = vrot.slane %v5315, 4
    %v5317 = vadd.f32 %v5315, %v5316
    %v5318 = vrot.slane %v5317, 2
    %v5319 = vadd.f32 %v5317, %v5318
    %v5320 = vrot.slane %v5319, 1
    %v5321 = vadd.f32 %v5319, %v5320
    %v5322 = vmul.f32 %v415, %v5300
    %v5323 = vmul.f32 %v417, %v5301
    %v5324 = vmul.f32 %v421, %v5302
    %v5325 = vmul.f32 %v423, %v5303
    %v5326 = vadd.f32 %v5322, %v5324
    %v5327 = vrot.slane %v5326, 4
    %v5328 = vadd.f32 %v5326, %v5327
    %v5329 = vrot.slane %v5328, 2
    %v5330 = vadd.f32 %v5328, %v5329
    %v5331 = vrot.slane %v5330, 1
    %v5332 = vadd.f32 %v5330, %v5331
    %v5333 = vadd.f32 %v5323, %v5325
    %v5334 = vrot.slane %v5333, 4
    %v5335 = vadd.f32 %v5333, %v5334
    %v5336 = vrot.slane %v5335, 2
    %v5337 = vadd.f32 %v5335, %v5336
    %v5338 = vrot.slane %v5337, 1
    %v5339 = vadd.f32 %v5337, %v5338
    %v5340 = vmul.f32 %v427, %v5280
    %v5341 = vmul.f32 %v429, %v5281
    %v5342 = vmul.f32 %v433, %v5282
    %v5343 = vmul.f32 %v435, %v5283
    %v5344 = vadd.f32 %v5340, %v5342
    %v5345 = vrot.slane %v5344, 4
    %v5346 = vadd.f32 %v5344, %v5345
    %v5347 = vrot.slane %v5346, 2
    %v5348 = vadd.f32 %v5346, %v5347
    %v5349 = vrot.slane %v5348, 1
    %v5350 = vadd.f32 %v5348, %v5349
    %v5351 = vadd.f32 %v5341, %v5343
    %v5352 = vrot.slane %v5351, 4
    %v5353 = vadd.f32 %v5351, %v5352
    %v5354 = vrot.slane %v5353, 2
    %v5355 = vadd.f32 %v5353, %v5354
    %v5356 = vrot.slane %v5355, 1
    %v5357 = vadd.f32 %v5355, %v5356
    %v5358 = vmul.f32 %v427, %v5300
    %v5359 = vmul.f32 %v429, %v5301
    %v5360 = vmul.f32 %v433, %v5302
    %v5361 = vmul.f32 %v435, %v5303
    %v5362 = vadd.f32 %v5358, %v5360
    %v5363 = vrot.slane %v5362, 4
    %v5364 = vadd.f32 %v5362, %v5363
    %v5365 = vrot.slane %v5364, 2
    %v5366 = vadd.f32 %v5364, %v5365
    %v5367 = vrot.slane %v5366, 1
    %v5368 = vadd.f32 %v5366, %v5367
    %v5369 = vadd.f32 %v5359, %v5361
    %v5370 = vrot.slane %v5369, 4
    %v5371 = vadd.f32 %v5369, %v5370
    %v5372 = vrot.slane %v5371, 2
    %v5373 = vadd.f32 %v5371, %v5372
    %v5374 = vrot.slane %v5373, 1
    %v5375 = vadd.f32 %v5373, %v5374
    %v5376 = vmul.f32 %v439, %v5280
    %v5377 = vmul.f32 %v441, %v5281
    %v5378 = vmul.f32 %v445, %v5282
    %v5379 = vmul.f32 %v447, %v5283
    %v5380 = vadd.f32 %v5376, %v5378
    %v5381 = vrot.slane %v5380, 4
    %v5382 = vadd.f32 %v5380, %v5381
    %v5383 = vrot.slane %v5382, 2
    %v5384 = vadd.f32 %v5382, %v5383
    %v5385 = vrot.slane %v5384, 1
    %v5386 = vadd.f32 %v5384, %v5385
    %v5387 = vadd.f32 %v5377, %v5379
    %v5388 = vrot.slane %v5387, 4
    %v5389 = vadd.f32 %v5387, %v5388
    %v5390 = vrot.slane %v5389, 2
    %v5391 = vadd.f32 %v5389, %v5390
    %v5392 = vrot.slane %v5391, 1
    %v5393 = vadd.f32 %v5391, %v5392
    %v5394 = vmul.f32 %v439, %v5300
    %v5395 = vmul.f32 %v441, %v5301
    %v5396 = vmul.f32 %v445, %v5302
    %v5397 = vmul.f32 %v447, %v5303
    %v5398 = vadd.f32 %v5394, %v5396
    %v5399 = vrot.slane %v5398, 4
    %v5400 = vadd.f32 %v5398, %v5399
    %v5401 = vrot.slane %v5400, 2
    %v5402 = vadd.f32 %v5400, %v5401
    %v5403 = vrot.slane %v5402, 1
    %v5404 = vadd.f32 %v5402, %v5403
    %v5405 = vadd.f32 %v5395, %v5397
    %v5406 = vrot.slane %v5405, 4
    %v5407 = vadd.f32 %v5405, %v5406
    %v5408 = vrot.slane %v5407, 2
    %v5409 = vadd.f32 %v5407, %v5408
    %v5410 = vrot.slane %v5409, 1
    %v5411 = vadd.f32 %v5409, %v5410
    %v5412 = vmul.f32 %v451, %v5280
    %v5413 = vmul.f32 %v453, %v5281
    %v5414 = vmul.f32 %v457, %v5282
    %v5415 = vmul.f32 %v459, %v5283
    %v5416 = vadd.f32 %v5412, %v5414
    %v5417 = vrot.slane %v5416, 4
    %v5418 = vadd.f32 %v5416, %v5417
    %v5419 = vrot.slane %v5418, 2
    %v5420 = vadd.f32 %v5418, %v5419
    %v5421 = vrot.slane %v5420, 1
    %v5422 = vadd.f32 %v5420, %v5421
    %v5423 = vadd.f32 %v5413, %v5415
    %v5424 = vrot.slane %v5423, 4
    %v5425 = vadd.f32 %v5423, %v5424
    %v5426 = vrot.slane %v5425, 2
    %v5427 = vadd.f32 %v5425, %v5426
    %v5428 = vrot.slane %v5427, 1
    %v5429 = vadd.f32 %v5427, %v5428
    %v5430 = vmul.f32 %v451, %v5300
    %v5431 = vmul.f32 %v453, %v5301
    %v5432 = vmul.f32 %v457, %v5302
    %v5433 = vmul.f32 %v459, %v5303
    %v5434 = vadd.f32 %v5430, %v5432
    %v5435 = vrot.slane %v5434, 4
    %v5436 = vadd.f32 %v5434, %v5435
    %v5437 = vrot.slane %v5436, 2
    %v5438 = vadd.f32 %v5436, %v5437
    %v5439 = vrot.slane %v5438, 1
    %v5440 = vadd.f32 %v5438, %v5439
    %v5441 = vadd.f32 %v5431, %v5433
    %v5442 = vrot.slane %v5441, 4
    %v5443 = vadd.f32 %v5441, %v5442
    %v5444 = vrot.slane %v5443, 2
    %v5445 = vadd.f32 %v5443, %v5444
    %v5446 = vrot.slane %v5445, 1
    %v5447 = vadd.f32 %v5445, %v5446
    %vm5448 = vcmask 1040384
    %v5449 = vsel %vm5448, %v5314, %v5332
    %v5450 = vsel %vm5448, %v5321, %v5339
    %v5451 = vsel %vm826, %v5449, %v5350
    %v5452 = vsel %vm826, %v5450, %v5357
    %vm5453 = vcmask 1042432
    %v5454 = vsel %vm5453, %v5451, %v5368
    %v5455 = vsel %vm5453, %v5452, %v5375
    %vm5456 = vcmask 1043456
    %v5457 = vsel %vm5456, %v5454, %v5386
    %v5458 = vsel %vm5456, %v5455, %v5393
    %vm5459 = vcmask 1044480
    %v5460 = vsel %vm5459, %v5457, %v5404
    %v5461 = vsel %vm5459, %v5458, %v5411
    %vm5462 = vcmask 1045504
    %v5463 = vsel %vm5462, %v5460, %v5422
    %v5464 = vsel %vm5462, %v5461, %v5429
    %vm5465 = vcmask 1046528
    %v5466 = vsel %vm5465, %v5463, %v5440
    %v5467 = vsel %vm5465, %v5464, %v5447
    %v5468 = vld [vmem:[#allocation2 + $0x40] sm:$0xff]
    %v5469 = vld [vmem:[#allocation2 + $0x48] sm:$0xff]
    %v5470 = vld [vmem:[#allocation2 + $0x50] sm:$0xff]
    %v5471 = vld [vmem:[#allocation2 + $0x58] sm:$0xff]
    %5473 = vset.pattern.permute.xlu0 0
    %5474 = vperm.xlu0 %5473, %v812
    %v5475 = vpop.permute.xlu0 %5474
    %5478 = vset.pattern.permute.xlu0 0
    %5479 = vperm.xlu0 %5478, %v817
    %v5480 = vpop.permute.xlu0 %5479
    %v5482 = vadd.f32 %v5468, %v5475
    %v5483 = vadd.f32 %v5469, %v5475
    %v5484 = vadd.f32 %v5470, %v5480
    %v5485 = vadd.f32 %v5471, %v5480
    %v5486 = vadd.f32 %v5482, %v5273
    %v5487 = vadd.f32 %v5483, %v5273
    %v5488 = vadd.f32 %v5484, %v5278
    %v5489 = vadd.f32 %v5485, %v5278
    %v5490 = vld [vmem:[#allocation2 + $0x60] sm:$0xff]
    %v5491 = vld [vmem:[#allocation2 + $0x68] sm:$0xff]
    %v5492 = vld [vmem:[#allocation2 + $0x70] sm:$0xff]
    %v5493 = vld [vmem:[#allocation2 + $0x78] sm:$0xff]
    %5494 = vset.pattern.permute.xlu0 1
    %5495 = vperm.xlu0 %5494, %v812
    %v5496 = vpop.permute.xlu0 %5495
    %5498 = vset.pattern.permute.xlu0 1
    %5499 = vperm.xlu0 %5498, %v817
    %v5500 = vpop.permute.xlu0 %5499
    %v5502 = vadd.f32 %v5490, %v5496
    %v5503 = vadd.f32 %v5491, %v5496
    %v5504 = vadd.f32 %v5492, %v5500
    %v5505 = vadd.f32 %v5493, %v5500
    %v5506 = vadd.f32 %v5502, %v5273
    %v5507 = vadd.f32 %v5503, %v5273
    %v5508 = vadd.f32 %v5504, %v5278
    %v5509 = vadd.f32 %v5505, %v5278
    %v5510 = vmul.f32 %v546, %v5486
    %v5511 = vmul.f32 %v548, %v5487
    %v5512 = vmul.f32 %v552, %v5488
    %v5513 = vmul.f32 %v554, %v5489
    %v5514 = vadd.f32 %v5510, %v5512
    %v5515 = vrot.slane %v5514, 4
    %v5516 = vadd.f32 %v5514, %v5515
    %v5517 = vrot.slane %v5516, 2
    %v5518 = vadd.f32 %v5516, %v5517
    %v5519 = vrot.slane %v5518, 1
    %v5520 = vadd.f32 %v5518, %v5519
    %v5521 = vadd.f32 %v5511, %v5513
    %v5522 = vrot.slane %v5521, 4
    %v5523 = vadd.f32 %v5521, %v5522
    %v5524 = vrot.slane %v5523, 2
    %v5525 = vadd.f32 %v5523, %v5524
    %v5526 = vrot.slane %v5525, 1
    %v5527 = vadd.f32 %v5525, %v5526
    %v5528 = vmul.f32 %v546, %v5506
    %v5529 = vmul.f32 %v548, %v5507
    %v5530 = vmul.f32 %v552, %v5508
    %v5531 = vmul.f32 %v554, %v5509
    %v5532 = vadd.f32 %v5528, %v5530
    %v5533 = vrot.slane %v5532, 4
    %v5534 = vadd.f32 %v5532, %v5533
    %v5535 = vrot.slane %v5534, 2
    %v5536 = vadd.f32 %v5534, %v5535
    %v5537 = vrot.slane %v5536, 1
    %v5538 = vadd.f32 %v5536, %v5537
    %v5539 = vadd.f32 %v5529, %v5531
    %v5540 = vrot.slane %v5539, 4
    %v5541 = vadd.f32 %v5539, %v5540
    %v5542 = vrot.slane %v5541, 2
    %v5543 = vadd.f32 %v5541, %v5542
    %v5544 = vrot.slane %v5543, 1
    %v5545 = vadd.f32 %v5543, %v5544
    %v5546 = vmul.f32 %v558, %v5486
    %v5547 = vmul.f32 %v560, %v5487
    %v5548 = vmul.f32 %v564, %v5488
    %v5549 = vmul.f32 %v566, %v5489
    %v5550 = vadd.f32 %v5546, %v5548
    %v5551 = vrot.slane %v5550, 4
    %v5552 = vadd.f32 %v5550, %v5551
    %v5553 = vrot.slane %v5552, 2
    %v5554 = vadd.f32 %v5552, %v5553
    %v5555 = vrot.slane %v5554, 1
    %v5556 = vadd.f32 %v5554, %v5555
    %v5557 = vadd.f32 %v5547, %v5549
    %v5558 = vrot.slane %v5557, 4
    %v5559 = vadd.f32 %v5557, %v5558
    %v5560 = vrot.slane %v5559, 2
    %v5561 = vadd.f32 %v5559, %v5560
    %v5562 = vrot.slane %v5561, 1
    %v5563 = vadd.f32 %v5561, %v5562
    %v5564 = vmul.f32 %v558, %v5506
    %v5565 = vmul.f32 %v560, %v5507
    %v5566 = vmul.f32 %v564, %v5508
    %v5567 = vmul.f32 %v566, %v5509
    %v5568 = vadd.f32 %v5564, %v5566
    %v5569 = vrot.slane %v5568, 4
    %v5570 = vadd.f32 %v5568, %v5569
    %v5571 = vrot.slane %v5570, 2
    %v5572 = vadd.f32 %v5570, %v5571
    %v5573 = vrot.slane %v5572, 1
    %v5574 = vadd.f32 %v5572, %v5573
    %v5575 = vadd.f32 %v5565, %v5567
    %v5576 = vrot.slane %v5575, 4
    %v5577 = vadd.f32 %v5575, %v5576
    %v5578 = vrot.slane %v5577, 2
    %v5579 = vadd.f32 %v5577, %v5578
    %v5580 = vrot.slane %v5579, 1
    %v5581 = vadd.f32 %v5579, %v5580
    %v5582 = vmul.f32 %v570, %v5486
    %v5583 = vmul.f32 %v572, %v5487
    %v5584 = vmul.f32 %v576, %v5488
    %v5585 = vmul.f32 %v578, %v5489
    %v5586 = vadd.f32 %v5582, %v5584
    %v5587 = vrot.slane %v5586, 4
    %v5588 = vadd.f32 %v5586, %v5587
    %v5589 = vrot.slane %v5588, 2
    %v5590 = vadd.f32 %v5588, %v5589
    %v5591 = vrot.slane %v5590, 1
    %v5592 = vadd.f32 %v5590, %v5591
    %v5593 = vadd.f32 %v5583, %v5585
    %v5594 = vrot.slane %v5593, 4
    %v5595 = vadd.f32 %v5593, %v5594
    %v5596 = vrot.slane %v5595, 2
    %v5597 = vadd.f32 %v5595, %v5596
    %v5598 = vrot.slane %v5597, 1
    %v5599 = vadd.f32 %v5597, %v5598
    %v5600 = vmul.f32 %v570, %v5506
    %v5601 = vmul.f32 %v572, %v5507
    %v5602 = vmul.f32 %v576, %v5508
    %v5603 = vmul.f32 %v578, %v5509
    %v5604 = vadd.f32 %v5600, %v5602
    %v5605 = vrot.slane %v5604, 4
    %v5606 = vadd.f32 %v5604, %v5605
    %v5607 = vrot.slane %v5606, 2
    %v5608 = vadd.f32 %v5606, %v5607
    %v5609 = vrot.slane %v5608, 1
    %v5610 = vadd.f32 %v5608, %v5609
    %v5611 = vadd.f32 %v5601, %v5603
    %v5612 = vrot.slane %v5611, 4
    %v5613 = vadd.f32 %v5611, %v5612
    %v5614 = vrot.slane %v5613, 2
    %v5615 = vadd.f32 %v5613, %v5614
    %v5616 = vrot.slane %v5615, 1
    %v5617 = vadd.f32 %v5615, %v5616
    %v5618 = vmul.f32 %v582, %v5486
    %v5619 = vmul.f32 %v584, %v5487
    %v5620 = vmul.f32 %v588, %v5488
    %v5621 = vmul.f32 %v590, %v5489
    %v5622 = vadd.f32 %v5618, %v5620
    %v5623 = vrot.slane %v5622, 4
    %v5624 = vadd.f32 %v5622, %v5623
    %v5625 = vrot.slane %v5624, 2
    %v5626 = vadd.f32 %v5624, %v5625
    %v5627 = vrot.slane %v5626, 1
    %v5628 = vadd.f32 %v5626, %v5627
    %v5629 = vadd.f32 %v5619, %v5621
    %v5630 = vrot.slane %v5629, 4
    %v5631 = vadd.f32 %v5629, %v5630
    %v5632 = vrot.slane %v5631, 2
    %v5633 = vadd.f32 %v5631, %v5632
    %v5634 = vrot.slane %v5633, 1
    %v5635 = vadd.f32 %v5633, %v5634
    %v5636 = vmul.f32 %v582, %v5506
    %v5637 = vmul.f32 %v584, %v5507
    %v5638 = vmul.f32 %v588, %v5508
    %v5639 = vmul.f32 %v590, %v5509
    %v5640 = vadd.f32 %v5636, %v5638
    %v5641 = vrot.slane %v5640, 4
    %v5642 = vadd.f32 %v5640, %v5641
    %v5643 = vrot.slane %v5642, 2
    %v5644 = vadd.f32 %v5642, %v5643
    %v5645 = vrot.slane %v5644, 1
    %v5646 = vadd.f32 %v5644, %v5645
    %v5647 = vadd.f32 %v5637, %v5639
    %v5648 = vrot.slane %v5647, 4
    %v5649 = vadd.f32 %v5647, %v5648
    %v5650 = vrot.slane %v5649, 2
    %v5651 = vadd.f32 %v5649, %v5650
    %v5652 = vrot.slane %v5651, 1
    %v5653 = vadd.f32 %v5651, %v5652
    %v5654 = vsel %vm5448, %v5520, %v5538
    %v5655 = vsel %vm5448, %v5527, %v5545
    %v5656 = vsel %vm826, %v5654, %v5556
    %v5657 = vsel %vm826, %v5655, %v5563
    %v5658 = vsel %vm5453, %v5656, %v5574
    %v5659 = vsel %vm5453, %v5657, %v5581
    %v5660 = vsel %vm5456, %v5658, %v5592
    %v5661 = vsel %vm5456, %v5659, %v5599
    %v5662 = vsel %vm5459, %v5660, %v5610
    %v5663 = vsel %vm5459, %v5661, %v5617
    %v5664 = vsel %vm5462, %v5662, %v5628
    %v5665 = vsel %vm5462, %v5663, %v5635
    %v5666 = vsel %vm5465, %v5664, %v5646
    %v5667 = vsel %vm5465, %v5665, %v5653
    %v5668 = vld [vmem:[%s7] sm:$0xff]
    %5670 = vset.pattern.permute.xlu0 0
    %5671 = vperm.xlu0 %5670, %v5668
    %v5672 = vpop.permute.xlu0 %5671
    %v5674 = vmul.f32 %v5466, %v5672
    %v5675 = vmul.f32 %v5467, %v5672
    %v5676 = vmul.f32 %v5666, %v5672
    %v5677 = vmul.f32 %v5667, %v5672
    %v5678 = vld [vmem:[%s8] sm:$0xff]
    %5680 = vset.pattern.permute.xlu0 0
    %5681 = vperm.xlu0 %5680, %v5678
    %v5682 = vpop.permute.xlu0 %5681
    %v5684 = vadd.f32 %v5674, %v5682
    %v5685 = vadd.f32 %v5675, %v5682
    %v5686 = vadd.f32 %v5676, %v5682
    %v5687 = vadd.f32 %v5677, %v5682
    %v5688 = vmax.f32 %v5684, 0.0
    %v5689 = vmax.f32 %v5685, 0.0
    %v5690 = vmax.f32 %v5686, 0.0
    %v5691 = vmax.f32 %v5687, 0.0
    %v5692 = vld [vmem:[%s9] sm:$0xff]
    %v5693 = vld [vmem:[%s9 + $0x8] sm:$0xff]
    %v5694 = vld [vmem:[%s9 + $0x10] sm:$0xff]
    %v5695 = vld [vmem:[%s9 + $0x18] sm:$0xff]
    %v5696 = vld [vmem:[%s10] sm:$0xff]
    %v5697 = vld [vmem:[%s10 + $0x8] sm:$0xff]
    %v5698 = vld [vmem:[%s10 + $0x10] sm:$0xff]
    %v5699 = vld [vmem:[%s10 + $0x18] sm:$0xff]
    %5701 = vset.pattern.permute.xlu0 0
    %5702 = vperm.xlu0 %5701, %v5696
    %v5703 = vpop.permute.xlu0 %5702
    %5706 = vset.pattern.permute.xlu0 0
    %5707 = vperm.xlu0 %5706, %v5697
    %v5708 = vpop.permute.xlu0 %5707
    %5711 = vset.pattern.permute.xlu0 0
    %5712 = vperm.xlu0 %5711, %v5698
    %v5713 = vpop.permute.xlu0 %5712
    %5716 = vset.pattern.permute.xlu0 0
    %5717 = vperm.xlu0 %5716, %v5699
    %v5718 = vpop.permute.xlu0 %5717
    %v5721 = vsel %vm314, %v5692, 0
    %v5724 = vsel %vm314, %v5693, 0
    %v5727 = vsel %vm314, %v5694, 0
    %v5730 = vsel %vm314, %v5695, 0
    %5732 = vmatprep.subr.mxu0 %v5689
    %5733 = vmatpush1.msra.mxu0 %v5688
    %5734 = vmatprep.subr.mxu0 0.0
    %5735 = vmatpush1.msra.mxu0 0.0
    %5736 = vmatprep.subr.mxu0 0.0
    %5737 = vmatpush1.msra.mxu0 0.0
    %5738 = vmatprep.subr.mxu0 0.0
    %5739 = vmatpush1.msra.mxu0 0.0
    %5740 = vmatprep.subr.mxu0 0.0
    %5741 = vmatpush1.msra.mxu0 0.0
    %5742 = vmatprep.subr.mxu0 0.0
    %5743 = vmatpush1.msra.mxu0 0.0
    %5744 = vmatprep.subr.mxu0 0.0
    %5745 = vmatpush1.msra.mxu0 0.0
    %5746 = vmatprep.subr.mxu0 0.0
    %5747 = vmatpush1.msra.mxu0 0.0
    %5748 = vmatprep.subr.mxu0 0.0
    %5749 = vmatpush1.msra.mxu0 0.0
    %5750 = vmatprep.subr.mxu0 0.0
    %5751 = vmatpush1.msra.mxu0 0.0
    %5752 = vmatprep.subr.mxu0 0.0
    %5753 = vmatpush1.msra.mxu0 0.0
    %5754 = vmatprep.subr.mxu0 0.0
    %5755 = vmatpush1.msra.mxu0 0.0
    %5756 = vmatprep.subr.mxu0 0.0
    %5757 = vmatpush1.msra.mxu0 0.0
    %5758 = vmatprep.subr.mxu0 0.0
    %5759 = vmatpush1.msra.mxu0 0.0
    %5760 = vmatprep.subr.mxu0 0.0
    %5761 = vmatpush1.msra.mxu0 0.0
    %5762 = vmatprep.subr.mxu0 0.0
    %5763 = vmatpush1.msra.mxu0 0.0
    %5764 = vmatprep.subr.mxu0 0.0
    %5765 = vmatpush1.msra.mxu0 0.0
    %5766 = vmatprep.subr.mxu0 0.0
    %5767 = vmatpush1.msra.mxu0 0.0
    %5768 = vmatprep.subr.mxu0 0.0
    %5769 = vmatpush1.msra.mxu0 0.0
    %5770 = vmatprep.subr.mxu0 0.0
    %5771 = vmatpush1.msra.mxu0 0.0
    %5772 = vmatprep.subr.mxu0 0.0
    %5773 = vmatpush1.msra.mxu0 0.0
    %5774 = vmatprep.subr.mxu0 0.0
    %5775 = vmatpush1.msra.mxu0 0.0
    %5776 = vmatprep.subr.mxu0 0.0
    %5777 = vmatpush1.msra.mxu0 0.0
    %5778 = vmatprep.subr.mxu0 0.0
    %5779 = vmatpush1.msra.mxu0 0.0
    %5780 = vmatprep.subr.mxu0 0.0
    %5781 = vmatpush1.msra.mxu0 0.0
    %5782 = vmatprep.subr.mxu0 0.0
    %5783 = vmatpush1.msra.mxu0 0.0
    %5784 = vmatprep.subr.mxu0 0.0
    %5785 = vmatpush1.msra.mxu0 0.0
    %5786 = vmatprep.subr.mxu0 0.0
    %5787 = vmatpush1.msra.mxu0 0.0
    %5788 = vmatprep.subr.mxu0 0.0
    %5789 = vmatpush1.msra.mxu0 0.0
    %5790 = vmatprep.subr.mxu0 0.0
    %5791 = vmatpush1.msra.mxu0 0.0
    %5792 = vmatprep.subr.mxu0 0.0
    %5793 = vmatpush1.msra.mxu0 0.0
    %5794 = vmatprep.subr.mxu0 0.0
    %5795 = vmatpush1.msra.mxu0 0.0
    %5796 = vmatprep.mubr.f32.mxu0 0.0
    %5797 = vmatmul.mubr.f32.gmra.mrb[0].mxu0 %v5721
    %v5798 = vpop.f32.mrb[0].mxu0
    %v5799 = vadd.f32 %v5703, %v5798
    %v5800 = vpop.f32.mrb[0].mxu0
    %v5801 = vadd.f32 %v5703, %v5800
    %5802 = vmatprep.mubr.f32.mxu0 0.0
    %5803 = vmatmul.mubr.f32.gmra.mrb[0].mxu0 %v5724
    %v5804 = vpop.f32.mrb[0].mxu0
    %v5805 = vadd.f32 %v5708, %v5804
    %v5806 = vpop.f32.mrb[0].mxu0
    %v5807 = vadd.f32 %v5708, %v5806
    %5808 = vmatprep.mubr.f32.mxu0 0.0
    %5809 = vmatmul.mubr.f32.gmra.mrb[0].mxu0 %v5727
    %v5810 = vpop.f32.mrb[0].mxu0
    %v5811 = vadd.f32 %v5713, %v5810
    %v5812 = vpop.f32.mrb[0].mxu0
    %v5813 = vadd.f32 %v5713, %v5812
    %5814 = vmatprep.mubr.f32.mxu0 0.0
    %5815 = vmatmul.mubr.f32.gmra.mrb[0].mxu0 %v5730
    %v5816 = vpop.f32.mrb[0].mxu0
    %v5817 = vadd.f32 %v5718, %v5816
    %v5818 = vpop.f32.mrb[0].mxu0
    %v5819 = vadd.f32 %v5718, %v5818
    %5820 = vdwg.mxu0
    %5821 = vmatprep.subr.mxu0 %v5691
    %5822 = vmatpush1.msra.mxu0 %v5690
    %5823 = vmatprep.subr.mxu0 0.0
    %5824 = vmatpush1.msra.mxu0 0.0
    %5825 = vmatprep.subr.mxu0 0.0
    %5826 = vmatpush1.msra.mxu0 0.0
    %5827 = vmatprep.subr.mxu0 0.0
    %5828 = vmatpush1.msra.mxu0 0.0
    %5829 = vmatprep.subr.mxu0 0.0
    %5830 = vmatpush1.msra.mxu0 0.0
    %5831 = vmatprep.subr.mxu0 0.0
    %5832 = vmatpush1.msra.mxu0 0.0
    %5833 = vmatprep.subr.mxu0 0.0
    %5834 = vmatpush1.msra.mxu0 0.0
    %5835 = vmatprep.subr.mxu0 0.0
    %5836 = vmatpush1.msra.mxu0 0.0
    %5837 = vmatprep.subr.mxu0 0.0
    %5838 = vmatpush1.msra.mxu0 0.0
    %5839 = vmatprep.subr.mxu0 0.0
    %5840 = vmatpush1.msra.mxu0 0.0
    %5841 = vmatprep.subr.mxu0 0.0
    %5842 = vmatpush1.msra.mxu0 0.0
    %5843 = vmatprep.subr.mxu0 0.0
    %5844 = vmatpush1.msra.mxu0 0.0
    %5845 = vmatprep.subr.mxu0 0.0
    %5846 = vmatpush1.msra.mxu0 0.0
    %5847 = vmatprep.subr.mxu0 0.0
    %5848 = vmatpush1.msra.mxu0 0.0
    %5849 = vmatprep.subr.mxu0 0.0
    %5850 = vmatpush1.msra.mxu0 0.0
    %5851 = vmatprep.subr.mxu0 0.0
    %5852 = vmatpush1.msra.mxu0 0.0
    %5853 = vmatprep.subr.mxu0 0.0
    %5854 = vmatpush1.msra.mxu0 0.0
    %5855 = vmatprep.subr.mxu0 0.0
    %5856 = vmatpush1.msra.mxu0 0.0
    %5857 = vmatprep.subr.mxu0 0.0
    %5858 = vmatpush1.msra.mxu0 0.0
    %5859 = vmatprep.subr.mxu0 0.0
    %5860 = vmatpush1.msra.mxu0 0.0
    %5861 = vmatprep.subr.mxu0 0.0
    %5862 = vmatpush1.msra.mxu0 0.0
    %5863 = vmatprep.subr.mxu0 0.0
    %5864 = vmatpush1.msra.mxu0 0.0
    %5865 = vmatprep.subr.mxu0 0.0
    %5866 = vmatpush1.msra.mxu0 0.0
    %5867 = vmatprep.subr.mxu0 0.0
    %5868 = vmatpush1.msra.mxu0 0.0
    %5869 = vmatprep.subr.mxu0 0.0
    %5870 = vmatpush1.msra.mxu0 0.0
    %5871 = vmatprep.subr.mxu0 0.0
    %5872 = vmatpush1.msra.mxu0 0.0
    %5873 = vmatprep.subr.mxu0 0.0
    %5874 = vmatpush1.msra.mxu0 0.0
    %5875 = vmatprep.subr.mxu0 0.0
    %5876 = vmatpush1.msra.mxu0 0.0
    %5877 = vmatprep.subr.mxu0 0.0
    %5878 = vmatpush1.msra.mxu0 0.0
    %5879 = vmatprep.subr.mxu0 0.0
    %5880 = vmatpush1.msra.mxu0 0.0
    %5881 = vmatprep.subr.mxu0 0.0
    %5882 = vmatpush1.msra.mxu0 0.0
    %5883 = vmatprep.subr.mxu0 0.0
    %5884 = vmatpush1.msra.mxu0 0.0
    %5885 = vmatprep.mubr.f32.mxu0 0.0
    %5886 = vmatmul.mubr.f32.gmra.mrb[0].mxu0 %v5721
    %v5887 = vpop.f32.mrb[0].mxu0
    %v5888 = vadd.f32 %v5703, %v5887
    %v5889 = vpop.f32.mrb[0].mxu0
    %v5890 = vadd.f32 %v5703, %v5889
    %5891 = vmatprep.mubr.f32.mxu0 0.0
    %5892 = vmatmul.mubr.f32.gmra.mrb[0].mxu0 %v5724
    %v5893 = vpop.f32.mrb[0].mxu0
    %v5894 = vadd.f32 %v5708, %v5893
    %v5895 = vpop.f32.mrb[0].mxu0
    %v5896 = vadd.f32 %v5708, %v5895
    %5897 = vmatprep.mubr.f32.mxu0 0.0
    %5898 = vmatmul.mubr.f32.gmra.mrb[0].mxu0 %v5727
    %v5899 = vpop.f32.mrb[0].mxu0
    %v5900 = vadd.f32 %v5713, %v5899
    %v5901 = vpop.f32.mrb[0].mxu0
    %v5902 = vadd.f32 %v5713, %v5901
    %5903 = vmatprep.mubr.f32.mxu0 0.0
    %5904 = vmatmul.mubr.f32.gmra.mrb[0].mxu0 %v5730
    %v5905 = vpop.f32.mrb[0].mxu0
    %v5906 = vadd.f32 %v5718, %v5905
    %v5907 = vpop.f32.mrb[0].mxu0
    %v5908 = vadd.f32 %v5718, %v5907
    %5909 = vdwg.mxu0
    %v5910 = vadd.f32 %v5799, %v64
    %v5911 = vadd.f32 %v5801, %v65
    %v5912 = vadd.f32 %v5888, %v66
    %v5913 = vadd.f32 %v5890, %v67
    %v5914 = vadd.f32 %v5805, %v68
    %v5915 = vadd.f32 %v5807, %v69
    %v5916 = vadd.f32 %v5894, %v70
    %v5917 = vadd.f32 %v5896, %v71
    %v5918 = vadd.f32 %v5811, %v72
    %v5919 = vadd.f32 %v5813, %v73
    %v5920 = vadd.f32 %v5900, %v74
    %v5921 = vadd.f32 %v5902, %v75
    %v5922 = vadd.f32 %v5817, %v76
    %v5923 = vadd.f32 %v5819, %v77
    %v5924 = vadd.f32 %v5906, %v78
    %v5925 = vadd.f32 %v5908, %v79
    %v5926 = vmax.f32 %v5910, 0.0
    %v5927 = vmax.f32 %v5911, 0.0
    %v5928 = vmax.f32 %v5912, 0.0
    %v5929 = vmax.f32 %v5913, 0.0
    %v5930 = vmax.f32 %v5914, 0.0
    %v5931 = vmax.f32 %v5915, 0.0
    %v5932 = vmax.f32 %v5916, 0.0
    %v5933 = vmax.f32 %v5917, 0.0
    %v5934 = vmax.f32 %v5918, 0.0
    %v5935 = vmax.f32 %v5919, 0.0
    %v5936 = vmax.f32 %v5920, 0.0
    %v5937 = vmax.f32 %v5921, 0.0
    %v5938 = vmax.f32 %v5922, 0.0
    %v5939 = vmax.f32 %v5923, 0.0
    %v5940 = vmax.f32 %v5924, 0.0
    %v5941 = vmax.f32 %v5925, 0.0
    %5942 = vst [vmem:[%s11] sm:$0xff] %v5926
    %5943 = vst [vmem:[%s11 + $0x8] sm:$0xff] %v5927
    %5944 = vst [vmem:[%s11 + $0x10] sm:$0xff] %v5928
    %5945 = vst [vmem:[%s11 + $0x18] sm:$0xff] %v5929
    %5946 = vst [vmem:[%s11 + $0x20] sm:$0xff] %v5930
    %5947 = vst [vmem:[%s11 + $0x28] sm:$0xff] %v5931
    %5948 = vst [vmem:[%s11 + $0x30] sm:$0xff] %v5932
    %5949 = vst [vmem:[%s11 + $0x38] sm:$0xff] %v5933
    %5950 = vst [vmem:[%s11 + $0x40] sm:$0xff] %v5934
    %5951 = vst [vmem:[%s11 + $0x48] sm:$0xff] %v5935
    %5952 = vst [vmem:[%s11 + $0x50] sm:$0xff] %v5936
    %5953 = vst [vmem:[%s11 + $0x58] sm:$0xff] %v5937
    %5954 = vst [vmem:[%s11 + $0x60] sm:$0xff] %v5938
    %5955 = vst [vmem:[%s11 + $0x68] sm:$0xff] %v5939
    %5956 = vst [vmem:[%s11 + $0x70] sm:$0xff] %v5940
    %5957 = vst [vmem:[%s11 + $0x78] sm:$0xff] %v5941
    // Predicated region
    $region54: #{lambda_block_pallas.1} parent=1 // pred_check
      _
    $region55: #{lambda_block_pallas.1} parent=1 // pred_check_branch
      %5959 = sbr.rel (0) target = $region57
    $region56: #{lambda_block_pallas.1} parent=1 // pred_region
      _
    $region57: #{lambda_block_pallas.1} parent=1 // pred_fallthru
      _
    // Predicated region
    $region58: #{lambda_block_pallas.1} parent=1 // pred_check
      _
    $region59: #{lambda_block_pallas.1} parent=1 // pred_check_branch
      %5961 = sbr.rel (0) target = $region61
    $region60: #{lambda_block_pallas.1} parent=1 // pred_region
      _
    $region61: #{lambda_block_pallas.1} parent=1 // pred_fallthru
      _
    %5962 = vsyncpa [#allocation4], 1
    %5963 = vsyncpa [#allocation6], 1

</llo_original>
